<compile_context>
chip_gen: v6e
topology: v6e:2x2x1
jax: 0.10.0
libtpu: 0.0.40
codegen_flags: <defaults>
</compile_context>

<pallas_src>
import functools

import jax
import jax.numpy as jnp
from jax import lax
from jax.experimental import pallas as pl
from jax.experimental.pallas import tpu as pltpu

LEAK = 0.1                      # LeakyReLU negative slope
LANE = 128                      # channel padding target (TPU lane width)
SUBLANE = 8                     # sublane alignment for the padded row width
VMEM_LIMIT_BYTES = 48 * 1024 * 1024   # < v7x 64 MiB physical, > default limits


def _round_up(n, m):
    return (n + m - 1) // m * m


def _darkblock_kernel(x_top_ref, x_mid_ref, x_bot_ref, w0_ref, b0_ref,
                      w1_ref, b1_ref, o_ref, *, th, wp, h_img, w_img):
    """One (batch, row-tile) step.

    x_top_ref: (1,  wp, Cip) f32  row above the tile (clamped; masked at edge)
    x_mid_ref: (th, wp, Cip) f32  the tile's own rows (also the residual)
    x_bot_ref: (1,  wp, Cip) f32  row below the tile (clamped; masked at edge)
    w0_ref   : (Cip, Chp)    bf16 1x1 conv weight, BN scale folded in
    b0_ref   : (1, Chp)      f32  folded BN bias for conv0
    w1_ref   : (9, Chp, Cip) bf16 3x3 conv weights per tap, BN scale folded in
    b1_ref   : (1, Cip)      f32  folded BN bias for conv1
    o_ref    : (th, wp, Cip) f32  output rows (residual added)
    """
    t = pl.program_id(1)
    rows = th + 2
    flat = rows * wp

    # ---- conv0 (1x1): one (rows*wp, Cip) @ (Cip, Chp) MXU matmul ------------
    xb = jnp.concatenate(
        [x_top_ref[...].astype(jnp.bfloat16),
         x_mid_ref[...].astype(jnp.bfloat16),
         x_bot_ref[...].astype(jnp.bfloat16)], axis=0)      # (rows, wp, Cip)
    h = jnp.dot(xb.reshape(flat, xb.shape[-1]), w0_ref[...],
                preferred_element_type=jnp.float32)         # (flat, Chp)
    h = h + b0_ref[...]
    h = jnp.maximum(h, LEAK * h)                            # LeakyReLU

    # Zero-pad ring for conv1, computed in-kernel (no mask DMA): a position is
    # valid iff it is a real image pixel (global row in [0,H), col in [1,W]).
    row_iota = lax.broadcasted_iota(jnp.int32, (rows, wp, 1), 0)
    col_iota = lax.broadcasted_iota(jnp.int32, (rows, wp, 1), 1)
    g_row = t * th + row_iota - 1                           # global image row
    valid = ((g_row >= 0) & (g_row < h_img)
             & (col_iota >= 1) & (col_iota <= w_img))
    h = h.reshape(rows, wp, h.shape[-1]) * valid.astype(h.dtype)
    h_bf = h.astype(jnp.bfloat16).reshape(flat, h.shape[-1])

    # ---- conv1 (3x3): 9 accumulating MXU matmuls over rolled taps -----------
    # Output flat index q = r*wp + c (r in [0,th), c in [0,wp)); tap (dy,dx)
    # reads h at flat index q + dy*wp + dx - 1 of the (th+2)-row window, which
    # is rolled[q + wp] with rolled = roll(h, -((dy-1)*wp + (dx-1))).  The roll
    # wrap only touches columns that are discarded on the host.
    acc = None
    for k in range(9):
        dy, dx = divmod(k, 3)
        off = (dy - 1) * wp + (dx - 1)
        rolled = h_bf if off == 0 else jnp.roll(h_bf, -off, axis=0)
        slab = rolled[wp:(th + 1) * wp]                     # (th*wp, Chp)
        part = jnp.dot(slab, w1_ref[k], preferred_element_type=jnp.float32)
        acc = part if acc is None else acc + part           # (th*wp, Cip)

    y = acc + b1_ref[...]
    y = jnp.maximum(y, LEAK * y)                            # LeakyReLU

    # ---- residual (f32) -----------------------------------------------------
    y = y.reshape(th, wp, y.shape[-1]) + x_mid_ref[...]
    o_ref[...] = y.astype(o_ref.dtype)


@functools.partial(jax.jit, static_argnames=("tile_h",))
def darkblock(x_nchw, kernel_params, tile_h=None):
    """x_nchw: (N, Cin, H, W) float32 -> (N, Cin, H, W) float32."""
    w0e, b0p, w1e, b1p = kernel_params
    N, C, H, W = x_nchw.shape
    cip, chp = w0e.shape
    wp = _round_up(W + 2, SUBLANE)          # lateral halo + sublane padding

    if tile_h is None:
        # Keep the f32 activation body block around <=2 MiB per buffer; the
        # full per-step working set then stays far below the 48 MiB limit.
        tile_h = max(SUBLANE, (2 * 1024 * 1024) // (wp * cip * 4))
    th = int(min(int(tile_h), H))
    th = max(th, 1)
    ht = _round_up(H, th)                   # pad rows so row tiles are full
    n_row_tiles = ht // th

    # NCHW -> lane-dense padded NHWC (1 left halo col, zero pad cols/channels,
    # zero pad rows up to ht).  No top/bottom halo rows are stored: the kernel
    # fetches the neighboring tile's edge row and masks at the image edges.
    x_nhwc = jnp.transpose(x_nchw, (0, 2, 3, 1))
    x_pad = jnp.pad(x_nhwc,
                    ((0, 0), (0, ht - H), (1, wp - W - 1), (0, cip - C)))

    kernel = functools.partial(_darkblock_kernel, th=th, wp=wp,
                               h_img=H, w_img=W)

    def top_map(n, t):      # row above the tile (block size 1 -> row index)
        return (n, jnp.maximum(t * th - 1, 0), 0, 0)

    def mid_map(n, t):      # the tile body / output rows
        return (n, t, 0, 0)

    def bot_map(n, t):      # row below the tile
        return (n, jnp.minimum((t + 1) * th, ht - 1), 0, 0)

    out_pad = pl.pallas_call(
        kernel,
        out_shape=jax.ShapeDtypeStruct((N, ht, wp, cip), x_nchw.dtype),
        grid_spec=pltpu.PrefetchScalarGridSpec(
            num_scalar_prefetch=0,
            grid=(N, n_row_tiles),
            in_specs=[
                pl.BlockSpec((None, 1, wp, cip), top_map),    # top halo row
                pl.BlockSpec((None, th, wp, cip), mid_map),   # tile body
                pl.BlockSpec((None, 1, wp, cip), bot_map),    # bottom halo row
                pl.BlockSpec((cip, chp), lambda n, t: (0, 0)),       # w0 bf16
                pl.BlockSpec((1, chp), lambda n, t: (0, 0)),         # b0
                pl.BlockSpec((9, chp, cip), lambda n, t: (0, 0, 0)),  # w1 bf16
                pl.BlockSpec((1, cip), lambda n, t: (0, 0)),         # b1
            ],
            out_specs=pl.BlockSpec((None, th, wp, cip), mid_map),
        ),
        compiler_params=pltpu.CompilerParams(
            dimension_semantics=("parallel", "parallel"),
            vmem_limit_bytes=VMEM_LIMIT_BYTES),
    )(x_pad, x_pad, x_pad, w0e, b0p, w1e, b1p)

    out = out_pad[:, :H, 1:W + 1, :C]
    return jnp.transpose(out, (0, 3, 1, 2))


def make_params(key, in_channels, hidden_channels):
    """Deterministic synthetic parameters (PyTorch layout + kernel layout)."""
    k0, k1 = jax.random.split(key)
    # PyTorch conv weight layouts (O, I, kh, kw), bias=False.
    w0_oihw = 0.1 * jax.random.normal(
        k0, (hidden_channels, in_channels, 1, 1), jnp.float32)
    w1_oihw = 0.1 * jax.random.normal(
        k1, (in_channels, hidden_channels, 3, 3), jnp.float32)

    def bn_fold(c, salt):
        gamma = 1.0 + 0.05 * jnp.arange(c, dtype=jnp.float32)
        beta = 0.02 * jnp.arange(c, dtype=jnp.float32) - 0.01 * salt
        mean = 0.03 * jnp.arange(c, dtype=jnp.float32)
        var = 1.0 + 0.04 * jnp.arange(c, dtype=jnp.float32)
        scale = gamma / jnp.sqrt(var + 1e-5)
        bias = beta - mean * scale
        return scale, bias

    s0, b0 = bn_fold(hidden_channels, 1.0)
    s1, b1 = bn_fold(in_channels, 2.0)

    cin_p = _round_up(in_channels, LANE)
    ch_p = _round_up(hidden_channels, LANE)

    # conv0: fold BN scale into weight, (Cin, Ch) layout, pad to lanes, bf16.
    w0_folded = (w0_oihw[:, :, 0, 0] * s0[:, None]).T              # (Cin, Ch)
    w0e = (jnp.zeros((cin_p, ch_p), jnp.float32)
           .at[:in_channels, :hidden_channels].set(w0_folded)
           .astype(jnp.bfloat16))

    # conv1: fold BN scale, per-tap lane-dense weights (9, Chp, Cip), bf16.
    w1_folded = w1_oihw * s1[:, None, None, None]                  # (Cin,Ch,3,3)
    w1e = jnp.zeros((9, ch_p, cin_p), jnp.float32)
    for k in range(9):
        dy, dx = divmod(k, 3)
        w1e = w1e.at[k, :hidden_channels, :in_channels].set(
            w1_folded[:, :, dy, dx].T)
    w1e = w1e.astype(jnp.bfloat16)

    b0p = jnp.zeros((1, ch_p), jnp.float32).at[0, :hidden_channels].set(b0)
    b1p = jnp.zeros((1, cin_p), jnp.float32).at[0, :in_channels].set(b1)

    torch_layout = (w0_oihw, w1_oihw, s0, b0, s1, b1)
    kernel_layout = (w0e, b0p, w1e, b1p)
    return torch_layout, kernel_layout


def darkblock_ref(x, w0_oihw, w1_oihw, s0, b0, s1, b1,
                  dot_dtype=jnp.float32):
    """Pure-JAX reference matching the PyTorch forward (eval-mode BN).

    dot_dtype=f32 -> exact module semantics; dot_dtype=bf16 -> mirrors the
    kernel's bf16 MXU operands (f32 accumulation) for a tight consistency check.
    """
    def conv_bn_act(z, w, scale, bias, pad):
        w_eff = w * scale[:, None, None, None]     # BN scale folded (as kernel)
        y = lax.conv_general_dilated(
            z.astype(dot_dtype), w_eff.astype(dot_dtype),
            window_strides=(1, 1), padding=[(pad, pad), (pad, pad)],
            dimension_numbers=("NCHW", "OIHW", "NCHW"),
            preferred_element_type=jnp.float32)
        y = y + bias[None, :, None, None]
        return jnp.where(y >= 0, y, LEAK * y)

    h = conv_bn_act(x, w0_oihw, s0, b0, 0)
    y = conv_bn_act(h, w1_oihw, s1, b1, 1)
    return y + x


if __name__ == "__main__":
    N, Cin, Ch, H, W = 2, 4, 8, 16, 16
    key = jax.random.PRNGKey(0)
    kx, kp = jax.random.split(key)
    x = jax.random.normal(kx, (N, Cin, H, W), jnp.float32)

    torch_params, kernel_params = make_params(kp, Cin, Ch)

    ref_f32 = darkblock_ref(x, *torch_params, dot_dtype=jnp.float32)
    ref_bf16 = darkblock_ref(x, *torch_params, dot_dtype=jnp.bfloat16)

    ok = True
    # tile_h=8: 2 row tiles per image (exercises the cross-tile halo fetch).
    # tile_h=5: H not divisible by the tile (exercises row padding + masking).
    for tile_h in (8, 5):
        out = jax.block_until_ready(darkblock(x, kernel_params, tile_h=tile_h))
        err_f32 = float(jnp.max(jnp.abs(out - ref_f32)))
        err_bf16 = float(jnp.max(jnp.abs(out - ref_bf16)))
        # Kernel uses bf16 MXU operands with f32 accumulation: tight tolerance
        # vs the bf16-consistent reference, bf16-level tolerance vs exact f32.
        if not (out.shape == x.shape and err_bf16 < 3e-3 and err_f32 < 3e-2):
            ok = False
            print(f"MISMATCH tile_h={tile_h} "
                  f"err_bf16={err_bf16} err_f32={err_f32}")

    if ok:
        print("KERNEL_OK")
</pallas_src>

<mosaic_0001>
module attributes {stable_mosaic.version = 11 : i64} {
  func.func @_darkblock_kernel(%arg0: i32, %arg1: i32, %arg2: memref<1x1x24x128xf32, #tpu.memory_space<vmem>>, %arg3: memref<1x8x24x128xf32, #tpu.memory_space<vmem>>, %arg4: memref<1x1x24x128xf32, #tpu.memory_space<vmem>>, %arg5: memref<128x128xbf16, #tpu.memory_space<vmem>>, %arg6: memref<1x128xf32, #tpu.memory_space<vmem>>, %arg7: memref<9x128x128xbf16, #tpu.memory_space<vmem>>, %arg8: memref<1x128xf32, #tpu.memory_space<vmem>>, %arg9: memref<1x8x24x128xf32, #tpu.memory_space<vmem>>) attributes {dimension_semantics = [#tpu.dimension_semantics<parallel>, #tpu.dimension_semantics<parallel>], iteration_bounds = array<i64: 2, 2>, scalar_prefetch = 0 : i64, scratch_operands = 0 : i64, tpu.core_type = #tpu.core_type<tc>, window_params = [{transform_indices = @transform_0, window_bounds = array<i64: 1, 1, 24, 128>}, {transform_indices = @transform_1, window_bounds = array<i64: 1, 8, 24, 128>}, {transform_indices = @transform_2, window_bounds = array<i64: 1, 1, 24, 128>}, {pipeline_mode = #tpu.pipeline_mode<synchronous>, transform_indices = @transform_3, window_bounds = array<i64: 128, 128>}, {pipeline_mode = #tpu.pipeline_mode<synchronous>, transform_indices = @transform_4, window_bounds = array<i64: 1, 128>}, {pipeline_mode = #tpu.pipeline_mode<synchronous>, transform_indices = @transform_5, window_bounds = array<i64: 9, 128, 128>}, {pipeline_mode = #tpu.pipeline_mode<synchronous>, transform_indices = @transform_6, window_bounds = array<i64: 1, 128>}, {transform_indices = @transform_7, window_bounds = array<i64: 1, 8, 24, 128>}]} {
    %c0 = arith.constant 0 : index
    %c0_0 = arith.constant 0 : index
    %c0_1 = arith.constant 0 : index
    %c0_2 = arith.constant 0 : index
    %0 = vector.load %arg2[%c0, %c0_0, %c0_1, %c0_2] : memref<1x1x24x128xf32, #tpu.memory_space<vmem>>, vector<1x1x24x128xf32>
    %1 = vector.shape_cast %0 : vector<1x1x24x128xf32> to vector<1x24x128xf32>
    %2 = arith.truncf %1 : vector<1x24x128xf32> to vector<1x24x128xbf16>
    %c0_3 = arith.constant 0 : index
    %c0_4 = arith.constant 0 : index
    %c0_5 = arith.constant 0 : index
    %c0_6 = arith.constant 0 : index
    %3 = vector.load %arg3[%c0_3, %c0_4, %c0_5, %c0_6] : memref<1x8x24x128xf32, #tpu.memory_space<vmem>>, vector<1x8x24x128xf32>
    %4 = vector.shape_cast %3 : vector<1x8x24x128xf32> to vector<8x24x128xf32>
    %5 = arith.truncf %4 : vector<8x24x128xf32> to vector<8x24x128xbf16>
    %c0_7 = arith.constant 0 : index
    %c0_8 = arith.constant 0 : index
    %c0_9 = arith.constant 0 : index
    %c0_10 = arith.constant 0 : index
    %6 = vector.load %arg4[%c0_7, %c0_8, %c0_9, %c0_10] : memref<1x1x24x128xf32, #tpu.memory_space<vmem>>, vector<1x1x24x128xf32>
    %7 = vector.shape_cast %6 : vector<1x1x24x128xf32> to vector<1x24x128xf32>
    %8 = arith.truncf %7 : vector<1x24x128xf32> to vector<1x24x128xbf16>
    %9 = tpu.concatenate %2, %5, %8 in 0 : vector<1x24x128xbf16>, vector<8x24x128xbf16>, vector<1x24x128xbf16> -> vector<10x24x128xbf16>
    %10 = vector.shape_cast %9 : vector<10x24x128xbf16> to vector<240x128xbf16>
    %c0_11 = arith.constant 0 : index
    %c0_12 = arith.constant 0 : index
    %11 = vector.load %arg5[%c0_11, %c0_12] : memref<128x128xbf16, #tpu.memory_space<vmem>>, vector<128x128xbf16>
    %cst = arith.constant dense<0.000000e+00> : vector<240x128xf32>
    %12 = tpu.matmul %10, %11, %cst {dimension_numbers = #tpu.dot_dimension_numbers<[1], [0], [0], [1], [0, 0, 1, 1], [], []>} : vector<240x128xbf16>, vector<128x128xbf16>, vector<240x128xf32> -> vector<240x128xf32>
    %c0_13 = arith.constant 0 : index
    %c0_14 = arith.constant 0 : index
    %13 = vector.load %arg6[%c0_13, %c0_14] : memref<1x128xf32, #tpu.memory_space<vmem>>, vector<1x128xf32>
    %14 = vector.broadcast %13 : vector<1x128xf32> to vector<240x128xf32>
    %15 = arith.addf %12, %14 : vector<240x128xf32>
    %cst_15 = arith.constant 1.000000e-01 : f32
    %16 = vector.broadcast %cst_15 : f32 to vector<240x128xf32>
    %17 = arith.mulf %16, %15 : vector<240x128xf32>
    %18 = arith.maximumf %15, %17 : vector<240x128xf32>
    %19 = tpu.iota {dimensions = array<i32: 0>} : vector<10x24x1xi32>
    %20 = tpu.iota {dimensions = array<i32: 1>} : vector<10x24x1xi32>
    %c8_i32 = arith.constant 8 : i32
    %21 = arith.muli %arg1, %c8_i32 : i32
    %22 = vector.broadcast %21 : i32 to vector<10x24x1xi32>
    %23 = arith.addi %22, %19 : vector<10x24x1xi32>
    %c1_i32 = arith.constant 1 : i32
    %24 = vector.broadcast %c1_i32 : i32 to vector<10x24x1xi32>
    %25 = arith.subi %23, %24 : vector<10x24x1xi32>
    %c0_i32 = arith.constant 0 : i32
    %26 = vector.broadcast %c0_i32 : i32 to vector<10x24x1xi32>
    %27 = arith.cmpi sge, %25, %26 : vector<10x24x1xi32>
    %c16_i32 = arith.constant 16 : i32
    %28 = vector.broadcast %c16_i32 : i32 to vector<10x24x1xi32>
    %29 = arith.cmpi slt, %25, %28 : vector<10x24x1xi32>
    %30 = arith.andi %27, %29 : vector<10x24x1xi1>
    %c1_i32_16 = arith.constant 1 : i32
    %31 = vector.broadcast %c1_i32_16 : i32 to vector<10x24x1xi32>
    %32 = arith.cmpi sge, %20, %31 : vector<10x24x1xi32>
    %33 = arith.andi %30, %32 : vector<10x24x1xi1>
    %c16_i32_17 = arith.constant 16 : i32
    %34 = vector.broadcast %c16_i32_17 : i32 to vector<10x24x1xi32>
    %35 = arith.cmpi sle, %20, %34 : vector<10x24x1xi32>
    %36 = arith.andi %33, %35 : vector<10x24x1xi1>
    %37 = vector.shape_cast %18 : vector<240x128xf32> to vector<10x24x128xf32>
    %38 = arith.extui %36 : vector<10x24x1xi1> to vector<10x24x1xi32>
    %39 = arith.sitofp %38 : vector<10x24x1xi32> to vector<10x24x1xf32>
    %40 = vector.broadcast %39 : vector<10x24x1xf32> to vector<10x24x128xf32>
    %41 = arith.mulf %37, %40 : vector<10x24x128xf32>
    %42 = arith.truncf %41 : vector<10x24x128xf32> to vector<10x24x128xbf16>
    %43 = vector.shape_cast %42 : vector<10x24x128xbf16> to vector<240x128xbf16>
    %44 = vector.extract_strided_slice %43 {offsets = [215, 0], sizes = [25, 128], strides = [1, 1]} : vector<240x128xbf16> to vector<25x128xbf16>
    %45 = vector.extract_strided_slice %43 {offsets = [0, 0], sizes = [215, 128], strides = [1, 1]} : vector<240x128xbf16> to vector<215x128xbf16>
    %46 = tpu.concatenate %44, %45 in 0 : vector<25x128xbf16>, vector<215x128xbf16> -> vector<240x128xbf16>
    %47 = vector.extract_strided_slice %46 {offsets = [24, 0], sizes = [192, 128], strides = [1, 1]} : vector<240x128xbf16> to vector<192x128xbf16>
    %c0_18 = arith.constant 0 : index
    %c0_19 = arith.constant 0 : index
    %c0_20 = arith.constant 0 : index
    %48 = vector.load %arg7[%c0_18, %c0_19, %c0_20] : memref<9x128x128xbf16, #tpu.memory_space<vmem>>, vector<1x128x128xbf16>
    %49 = vector.shape_cast %48 : vector<1x128x128xbf16> to vector<128x128xbf16>
    %cst_21 = arith.constant dense<0.000000e+00> : vector<192x128xf32>
    %50 = tpu.matmul %47, %49, %cst_21 {dimension_numbers = #tpu.dot_dimension_numbers<[1], [0], [0], [1], [0, 0, 1, 1], [], []>} : vector<192x128xbf16>, vector<128x128xbf16>, vector<192x128xf32> -> vector<192x128xf32>
    %51 = vector.extract_strided_slice %43 {offsets = [216, 0], sizes = [24, 128], strides = [1, 1]} : vector<240x128xbf16> to vector<24x128xbf16>
    %52 = vector.extract_strided_slice %43 {offsets = [0, 0], sizes = [216, 128], strides = [1, 1]} : vector<240x128xbf16> to vector<216x128xbf16>
    %53 = tpu.concatenate %51, %52 in 0 : vector<24x128xbf16>, vector<216x128xbf16> -> vector<240x128xbf16>
    %54 = vector.extract_strided_slice %53 {offsets = [24, 0], sizes = [192, 128], strides = [1, 1]} : vector<240x128xbf16> to vector<192x128xbf16>
    %c1 = arith.constant 1 : index
    %c0_22 = arith.constant 0 : index
    %c0_23 = arith.constant 0 : index
    %55 = vector.load %arg7[%c1, %c0_22, %c0_23] : memref<9x128x128xbf16, #tpu.memory_space<vmem>>, vector<1x128x128xbf16>
    %56 = vector.shape_cast %55 : vector<1x128x128xbf16> to vector<128x128xbf16>
    %cst_24 = arith.constant dense<0.000000e+00> : vector<192x128xf32>
    %57 = tpu.matmul %54, %56, %cst_24 {dimension_numbers = #tpu.dot_dimension_numbers<[1], [0], [0], [1], [0, 0, 1, 1], [], []>} : vector<192x128xbf16>, vector<128x128xbf16>, vector<192x128xf32> -> vector<192x128xf32>
    %58 = arith.addf %50, %57 : vector<192x128xf32>
    %59 = vector.extract_strided_slice %43 {offsets = [217, 0], sizes = [23, 128], strides = [1, 1]} : vector<240x128xbf16> to vector<23x128xbf16>
    %60 = vector.extract_strided_slice %43 {offsets = [0, 0], sizes = [217, 128], strides = [1, 1]} : vector<240x128xbf16> to vector<217x128xbf16>
    %61 = tpu.concatenate %59, %60 in 0 : vector<23x128xbf16>, vector<217x128xbf16> -> vector<240x128xbf16>
    %62 = vector.extract_strided_slice %61 {offsets = [24, 0], sizes = [192, 128], strides = [1, 1]} : vector<240x128xbf16> to vector<192x128xbf16>
    %c2 = arith.constant 2 : index
    %c0_25 = arith.constant 0 : index
    %c0_26 = arith.constant 0 : index
    %63 = vector.load %arg7[%c2, %c0_25, %c0_26] : memref<9x128x128xbf16, #tpu.memory_space<vmem>>, vector<1x128x128xbf16>
    %64 = vector.shape_cast %63 : vector<1x128x128xbf16> to vector<128x128xbf16>
    %cst_27 = arith.constant dense<0.000000e+00> : vector<192x128xf32>
    %65 = tpu.matmul %62, %64, %cst_27 {dimension_numbers = #tpu.dot_dimension_numbers<[1], [0], [0], [1], [0, 0, 1, 1], [], []>} : vector<192x128xbf16>, vector<128x128xbf16>, vector<192x128xf32> -> vector<192x128xf32>
    %66 = arith.addf %58, %65 : vector<192x128xf32>
    %67 = vector.extract_strided_slice %43 {offsets = [239, 0], sizes = [1, 128], strides = [1, 1]} : vector<240x128xbf16> to vector<1x128xbf16>
    %68 = vector.extract_strided_slice %43 {offsets = [0, 0], sizes = [239, 128], strides = [1, 1]} : vector<240x128xbf16> to vector<239x128xbf16>
    %69 = tpu.concatenate %67, %68 in 0 : vector<1x128xbf16>, vector<239x128xbf16> -> vector<240x128xbf16>
    %70 = vector.extract_strided_slice %69 {offsets = [24, 0], sizes = [192, 128], strides = [1, 1]} : vector<240x128xbf16> to vector<192x128xbf16>
    %c3 = arith.constant 3 : index
    %c0_28 = arith.constant 0 : index
    %c0_29 = arith.constant 0 : index
    %71 = vector.load %arg7[%c3, %c0_28, %c0_29] : memref<9x128x128xbf16, #tpu.memory_space<vmem>>, vector<1x128x128xbf16>
    %72 = vector.shape_cast %71 : vector<1x128x128xbf16> to vector<128x128xbf16>
    %cst_30 = arith.constant dense<0.000000e+00> : vector<192x128xf32>
    %73 = tpu.matmul %70, %72, %cst_30 {dimension_numbers = #tpu.dot_dimension_numbers<[1], [0], [0], [1], [0, 0, 1, 1], [], []>} : vector<192x128xbf16>, vector<128x128xbf16>, vector<192x128xf32> -> vector<192x128xf32>
    %74 = arith.addf %66, %73 : vector<192x128xf32>
    %75 = vector.extract_strided_slice %43 {offsets = [24, 0], sizes = [192, 128], strides = [1, 1]} : vector<240x128xbf16> to vector<192x128xbf16>
    %c4 = arith.constant 4 : index
    %c0_31 = arith.constant 0 : index
    %c0_32 = arith.constant 0 : index
    %76 = vector.load %arg7[%c4, %c0_31, %c0_32] : memref<9x128x128xbf16, #tpu.memory_space<vmem>>, vector<1x128x128xbf16>
    %77 = vector.shape_cast %76 : vector<1x128x128xbf16> to vector<128x128xbf16>
    %cst_33 = arith.constant dense<0.000000e+00> : vector<192x128xf32>
    %78 = tpu.matmul %75, %77, %cst_33 {dimension_numbers = #tpu.dot_dimension_numbers<[1], [0], [0], [1], [0, 0, 1, 1], [], []>} : vector<192x128xbf16>, vector<128x128xbf16>, vector<192x128xf32> -> vector<192x128xf32>
    %79 = arith.addf %74, %78 : vector<192x128xf32>
    %80 = vector.extract_strided_slice %43 {offsets = [1, 0], sizes = [239, 128], strides = [1, 1]} : vector<240x128xbf16> to vector<239x128xbf16>
    %81 = vector.extract_strided_slice %43 {offsets = [0, 0], sizes = [1, 128], strides = [1, 1]} : vector<240x128xbf16> to vector<1x128xbf16>
    %82 = tpu.concatenate %80, %81 in 0 : vector<239x128xbf16>, vector<1x128xbf16> -> vector<240x128xbf16>
    %83 = vector.extract_strided_slice %82 {offsets = [24, 0], sizes = [192, 128], strides = [1, 1]} : vector<240x128xbf16> to vector<192x128xbf16>
    %c5 = arith.constant 5 : index
    %c0_34 = arith.constant 0 : index
    %c0_35 = arith.constant 0 : index
    %84 = vector.load %arg7[%c5, %c0_34, %c0_35] : memref<9x128x128xbf16, #tpu.memory_space<vmem>>, vector<1x128x128xbf16>
    %85 = vector.shape_cast %84 : vector<1x128x128xbf16> to vector<128x128xbf16>
    %cst_36 = arith.constant dense<0.000000e+00> : vector<192x128xf32>
    %86 = tpu.matmul %83, %85, %cst_36 {dimension_numbers = #tpu.dot_dimension_numbers<[1], [0], [0], [1], [0, 0, 1, 1], [], []>} : vector<192x128xbf16>, vector<128x128xbf16>, vector<192x128xf32> -> vector<192x128xf32>
    %87 = arith.addf %79, %86 : vector<192x128xf32>
    %88 = vector.extract_strided_slice %43 {offsets = [23, 0], sizes = [217, 128], strides = [1, 1]} : vector<240x128xbf16> to vector<217x128xbf16>
    %89 = vector.extract_strided_slice %43 {offsets = [0, 0], sizes = [23, 128], strides = [1, 1]} : vector<240x128xbf16> to vector<23x128xbf16>
    %90 = tpu.concatenate %88, %89 in 0 : vector<217x128xbf16>, vector<23x128xbf16> -> vector<240x128xbf16>
    %91 = vector.extract_strided_slice %90 {offsets = [24, 0], sizes = [192, 128], strides = [1, 1]} : vector<240x128xbf16> to vector<192x128xbf16>
    %c6 = arith.constant 6 : index
    %c0_37 = arith.constant 0 : index
    %c0_38 = arith.constant 0 : index
    %92 = vector.load %arg7[%c6, %c0_37, %c0_38] : memref<9x128x128xbf16, #tpu.memory_space<vmem>>, vector<1x128x128xbf16>
    %93 = vector.shape_cast %92 : vector<1x128x128xbf16> to vector<128x128xbf16>
    %cst_39 = arith.constant dense<0.000000e+00> : vector<192x128xf32>
    %94 = tpu.matmul %91, %93, %cst_39 {dimension_numbers = #tpu.dot_dimension_numbers<[1], [0], [0], [1], [0, 0, 1, 1], [], []>} : vector<192x128xbf16>, vector<128x128xbf16>, vector<192x128xf32> -> vector<192x128xf32>
    %95 = arith.addf %87, %94 : vector<192x128xf32>
    %96 = vector.extract_strided_slice %43 {offsets = [24, 0], sizes = [216, 128], strides = [1, 1]} : vector<240x128xbf16> to vector<216x128xbf16>
    %97 = vector.extract_strided_slice %43 {offsets = [0, 0], sizes = [24, 128], strides = [1, 1]} : vector<240x128xbf16> to vector<24x128xbf16>
    %98 = tpu.concatenate %96, %97 in 0 : vector<216x128xbf16>, vector<24x128xbf16> -> vector<240x128xbf16>
    %99 = vector.extract_strided_slice %98 {offsets = [24, 0], sizes = [192, 128], strides = [1, 1]} : vector<240x128xbf16> to vector<192x128xbf16>
    %c7 = arith.constant 7 : index
    %c0_40 = arith.constant 0 : index
    %c0_41 = arith.constant 0 : index
    %100 = vector.load %arg7[%c7, %c0_40, %c0_41] : memref<9x128x128xbf16, #tpu.memory_space<vmem>>, vector<1x128x128xbf16>
    %101 = vector.shape_cast %100 : vector<1x128x128xbf16> to vector<128x128xbf16>
    %cst_42 = arith.constant dense<0.000000e+00> : vector<192x128xf32>
    %102 = tpu.matmul %99, %101, %cst_42 {dimension_numbers = #tpu.dot_dimension_numbers<[1], [0], [0], [1], [0, 0, 1, 1], [], []>} : vector<192x128xbf16>, vector<128x128xbf16>, vector<192x128xf32> -> vector<192x128xf32>
    %103 = arith.addf %95, %102 : vector<192x128xf32>
    %104 = vector.extract_strided_slice %43 {offsets = [25, 0], sizes = [215, 128], strides = [1, 1]} : vector<240x128xbf16> to vector<215x128xbf16>
    %105 = vector.extract_strided_slice %43 {offsets = [0, 0], sizes = [25, 128], strides = [1, 1]} : vector<240x128xbf16> to vector<25x128xbf16>
    %106 = tpu.concatenate %104, %105 in 0 : vector<215x128xbf16>, vector<25x128xbf16> -> vector<240x128xbf16>
    %107 = vector.extract_strided_slice %106 {offsets = [24, 0], sizes = [192, 128], strides = [1, 1]} : vector<240x128xbf16> to vector<192x128xbf16>
    %c8 = arith.constant 8 : index
    %c0_43 = arith.constant 0 : index
    %c0_44 = arith.constant 0 : index
    %108 = vector.load %arg7[%c8, %c0_43, %c0_44] : memref<9x128x128xbf16, #tpu.memory_space<vmem>>, vector<1x128x128xbf16>
    %109 = vector.shape_cast %108 : vector<1x128x128xbf16> to vector<128x128xbf16>
    %cst_45 = arith.constant dense<0.000000e+00> : vector<192x128xf32>
    %110 = tpu.matmul %107, %109, %cst_45 {dimension_numbers = #tpu.dot_dimension_numbers<[1], [0], [0], [1], [0, 0, 1, 1], [], []>} : vector<192x128xbf16>, vector<128x128xbf16>, vector<192x128xf32> -> vector<192x128xf32>
    %111 = arith.addf %103, %110 : vector<192x128xf32>
    %c0_46 = arith.constant 0 : index
    %c0_47 = arith.constant 0 : index
    %112 = vector.load %arg8[%c0_46, %c0_47] : memref<1x128xf32, #tpu.memory_space<vmem>>, vector<1x128xf32>
    %113 = vector.broadcast %112 : vector<1x128xf32> to vector<192x128xf32>
    %114 = arith.addf %111, %113 : vector<192x128xf32>
    %cst_48 = arith.constant 1.000000e-01 : f32
    %115 = vector.broadcast %cst_48 : f32 to vector<192x128xf32>
    %116 = arith.mulf %115, %114 : vector<192x128xf32>
    %117 = arith.maximumf %114, %116 : vector<192x128xf32>
    %118 = vector.shape_cast %117 : vector<192x128xf32> to vector<8x24x128xf32>
    %c0_49 = arith.constant 0 : index
    %c0_50 = arith.constant 0 : index
    %c0_51 = arith.constant 0 : index
    %c0_52 = arith.constant 0 : index
    %119 = vector.load %arg3[%c0_49, %c0_50, %c0_51, %c0_52] : memref<1x8x24x128xf32, #tpu.memory_space<vmem>>, vector<1x8x24x128xf32>
    %120 = vector.shape_cast %119 : vector<1x8x24x128xf32> to vector<8x24x128xf32>
    %121 = arith.addf %118, %120 : vector<8x24x128xf32>
    %c0_53 = arith.constant 0 : index
    %c0_54 = arith.constant 0 : index
    %c0_55 = arith.constant 0 : index
    %c0_56 = arith.constant 0 : index
    %122 = vector.load %arg9[%c0_53, %c0_54, %c0_55, %c0_56] : memref<1x8x24x128xf32, #tpu.memory_space<vmem>>, vector<1x8x24x128xf32>
    %123 = vector.shape_cast %122 : vector<1x8x24x128xf32> to vector<8x24x128xf32>
    %124 = vector.shape_cast %121 : vector<8x24x128xf32> to vector<1x8x24x128xf32>
    tpu.vector_store %arg9[%c0_53, %c0_54, %c0_55, %c0_56], %124 {strides = array<i32>} : memref<1x8x24x128xf32, #tpu.memory_space<vmem>>, vector<1x8x24x128xf32>,
    return
  }
  func.func @transform_0(%arg0: i32, %arg1: i32) -> (i32, i32, i32, i32) {
    %c8_i32 = arith.constant 8 : i32
    %0 = arith.muli %arg1, %c8_i32 : i32
    %c1_i32 = arith.constant 1 : i32
    %1 = arith.subi %0, %c1_i32 : i32
    %c0_i32 = arith.constant 0 : i32
    %2 = arith.maxsi %1, %c0_i32 : i32
    %c0_i32_0 = arith.constant 0 : i32
    %c0_i32_1 = arith.constant 0 : i32
    %c0_i32_2 = arith.constant 0 : i32
    return %arg0, %2, %c0_i32_0, %c0_i32_1 : i32, i32, i32, i32
  }
  func.func @transform_1(%arg0: i32, %arg1: i32) -> (i32, i32, i32, i32) {
    %c0_i32 = arith.constant 0 : i32
    %c0_i32_0 = arith.constant 0 : i32
    %c0_i32_1 = arith.constant 0 : i32
    return %arg0, %arg1, %c0_i32, %c0_i32_0 : i32, i32, i32, i32
  }
  func.func @transform_2(%arg0: i32, %arg1: i32) -> (i32, i32, i32, i32) {
    %c1_i32 = arith.constant 1 : i32
    %0 = arith.addi %arg1, %c1_i32 : i32
    %c8_i32 = arith.constant 8 : i32
    %1 = arith.muli %0, %c8_i32 : i32
    %c15_i32 = arith.constant 15 : i32
    %2 = arith.minsi %1, %c15_i32 : i32
    %c0_i32 = arith.constant 0 : i32
    %c0_i32_0 = arith.constant 0 : i32
    %c0_i32_1 = arith.constant 0 : i32
    return %arg0, %2, %c0_i32, %c0_i32_0 : i32, i32, i32, i32
  }
  func.func @transform_3(%arg0: i32, %arg1: i32) -> (i32, i32) {
    %c0_i32 = arith.constant 0 : i32
    %c0_i32_0 = arith.constant 0 : i32
    %c0_i32_1 = arith.constant 0 : i32
    return %c0_i32, %c0_i32_0 : i32, i32
  }
  func.func @transform_4(%arg0: i32, %arg1: i32) -> (i32, i32) {
    %c0_i32 = arith.constant 0 : i32
    %c0_i32_0 = arith.constant 0 : i32
    %c0_i32_1 = arith.constant 0 : i32
    return %c0_i32, %c0_i32_0 : i32, i32
  }
  func.func @transform_5(%arg0: i32, %arg1: i32) -> (i32, i32, i32) {
    %c0_i32 = arith.constant 0 : i32
    %c0_i32_0 = arith.constant 0 : i32
    %c0_i32_1 = arith.constant 0 : i32
    %c0_i32_2 = arith.constant 0 : i32
    return %c0_i32, %c0_i32_0, %c0_i32_1 : i32, i32, i32
  }
  func.func @transform_6(%arg0: i32, %arg1: i32) -> (i32, i32) {
    %c0_i32 = arith.constant 0 : i32
    %c0_i32_0 = arith.constant 0 : i32
    %c0_i32_1 = arith.constant 0 : i32
    return %c0_i32, %c0_i32_0 : i32, i32
  }
  func.func @transform_7(%arg0: i32, %arg1: i32) -> (i32, i32, i32, i32) {
    %c0_i32 = arith.constant 0 : i32
    %c0_i32_0 = arith.constant 0 : i32
    %c0_i32_1 = arith.constant 0 : i32
    return %arg0, %arg1, %c0_i32, %c0_i32_0 : i32, i32, i32, i32
  }
}

</mosaic_0001>

<llo_original>
// kernel: darkblock.1
$region0: #{darkblock.1}
  #allocation0 [shape = 'u32[]', space=smem, size = 0x4, offset = 0x4, fixed_abs, tag = 'smem constant byte address 0x4 - core index']
  #allocation1 [shape = 'u32[144,128]{1,0:T(1,128)}', space=vmem, size = 0x12000, scoped, tag = 'internal scratch']
  %s0 = inlined_call_operand.vmem [shape: f32[2,16,24,128], index: 0, kind: input, shape index: {}, may-alias: {0,1,2}]
  %s1 = inlined_call_operand.vmem [shape: f32[2,16,24,128], index: 1, kind: input, shape index: {}, may-alias: {0,1,2}]
  %s2 = inlined_call_operand.vmem [shape: f32[2,16,24,128], index: 2, kind: input, shape index: {}, may-alias: {0,1,2}]
  %s3 = inlined_call_operand.vmem [shape: bf16[128,128], index: 3, kind: input, shape index: {}]
  %s4 = inlined_call_operand.vmem [shape: f32[1,128], index: 4, kind: input, shape index: {}]
  %s5 = inlined_call_operand.vmem [shape: bf16[9,128,128], index: 5, kind: input, shape index: {}]
  %s6 = inlined_call_operand.vmem [shape: f32[1,128], index: 6, kind: input, shape index: {}]
  %s7 = inlined_call_operand.vmem [shape: f32[2,16,24,128], index: 7, kind: output, shape index: {}]
  %s8 = sld [smem:[#allocation0]]
  $region61: #{darkblock.1} parent=0
    _
  %s10 = ssub.s32 1, %s8
  %s11 = scalar_select 0, %s10, %s8
  loop: start=0, step=1, limit=6
  $region2: #{darkblock.1} parent=0 // loop_pre_header
    _
  $region3: #{darkblock.1} parent=0 // loop_header
    %s13 = sphi 0, %s17
    %p14 = scmp.ge.s32.totalorder %s13, 6
    %s20 = sphi 0, %s32
    %s21 = sphi 0, %s28
    %s22 = sphi 0, %s20
    %s23 = sphi 0, %s21
    %s24 = sphi 0, %s22
    %s25 = sphi 0, %s23
    %s45 = sphi 0, %s47
    %s48 = sphi 0, %s45
    %s49 = sphi 0, %s48
    %s65 = sphi 0, %s49
    %s73 = sphi 0, %s75
    %s76 = sphi 0, %s73
    %s77 = sphi 0, %s76
    %s93 = sphi 0, %s77
    %s109 = sphi 0, %s111
    %s112 = sphi 0, %s109
    %s113 = sphi 0, %s112
    %s129 = sphi 0, %s113
    %s133 = sphi 0, %s133
    %s135 = sphi 0, %s133
    %s136 = sphi 0, %s135
    %s150 = sphi 0, %s136
    %s154 = sphi 0, %s154
    %s156 = sphi 0, %s154
    %s157 = sphi 0, %s156
    %s171 = sphi 0, %s157
    %s175 = sphi 0, %s175
    %s177 = sphi 0, %s175
    %s178 = sphi 0, %s177
    %s192 = sphi 0, %s178
    %s196 = sphi 0, %s196
    %s198 = sphi 0, %s196
    %s199 = sphi 0, %s198
    %s213 = sphi 0, %s199
    %s221 = sphi 0, %s223
    %s224 = sphi 0, %s221
    %s225 = sphi 0, %s224
    %s241 = sphi 0, %s225
  $region4: #{darkblock.1} parent=0 // loop_header_branch
    %16 = sbr.rel (%p14) target = $region8
  $region5: #{darkblock.1} parent=0 // loop_body
    %s18 = ssub.s32 %s13, 1
    %s19 = ssub.s32 %s13, 2
    %s26 = sadd.s32 1, %s21
    %p27 = scmp.ge.s32.totalorder %s26, 2
    %s28 = scalar_select %p27, 0, %s26
    %s29 = sadd.s32 1, %s20
    %s30 = scalar_select %p27, %s29, %s20
    %p31 = scmp.ge.s32.totalorder %s30, 2
    %s32 = scalar_select %p31, 0, %s30
    %s33 = smul.u32 %s21, 8
    %s34 = ssub.s32 %s33, 1
    %p35 = scmp.gt.s32.totalorder %s34, 0
    %s36 = scalar_select %p35, %s34, 0
    %s37 = smul.u32 %s28, 8
    %s38 = ssub.s32 %s37, 1
    %p39 = scmp.gt.s32.totalorder %s38, 0
    %s40 = scalar_select %p39, %s38, 0
    %s41 = ssub.s32 %s20, %s32
    %s42 = ssub.s32 %s36, %s40
    %s43 = sor.u32 %s41, %s42
    %p44 = scmp.eq.s32.totalorder %s43, 0
    %s46 = sadd.s32 %s45, 1
    %s47 = scalar_select %p44, %s45, %s46
    %p50 = pneg %p44
    %p51 = scmp.eq.s32.totalorder %s13, 3
    %p52 = por %p50, %p51
    %p53 = scmp.ne.s32.totalorder %s45, %s48
    %p54 = scmp.eq.s32.totalorder %s13, 0
    %p55 = por %p53, %p54
    %p56 = scmp.ne.s32.totalorder %s45, %s48
    %p57 = scmp.eq.s32.totalorder %s18, 3
    %p58 = por %p56, %p57
    %p59 = scmp.ne.s32.totalorder %s48, %s49
    %p60 = scmp.eq.s32.totalorder %s18, 0
    %p61 = por %p59, %p60
    %p62 = scmp.ne.s32.totalorder %s48, %s49
    %p63 = scmp.eq.s32.totalorder %s19, 3
    %p64 = por %p62, %p63
    %p66 = scmp.ne.s32.totalorder %s49, %s65
    %p67 = scmp.eq.s32.totalorder %s19, 0
    %p68 = por %p66, %p67
    %s69 = ssub.s32 %s20, %s32
    %s70 = ssub.s32 %s21, %s28
    %s71 = sor.u32 %s69, %s70
    %p72 = scmp.eq.s32.totalorder %s71, 0
    %s74 = sadd.s32 %s73, 1
    %s75 = scalar_select %p72, %s73, %s74
    %p78 = pneg %p72
    %p79 = scmp.eq.s32.totalorder %s13, 3
    %p80 = por %p78, %p79
    %p81 = scmp.ne.s32.totalorder %s73, %s76
    %p82 = scmp.eq.s32.totalorder %s13, 0
    %p83 = por %p81, %p82
    %p84 = scmp.ne.s32.totalorder %s73, %s76
    %p85 = scmp.eq.s32.totalorder %s18, 3
    %p86 = por %p84, %p85
    %p87 = scmp.ne.s32.totalorder %s76, %s77
    %p88 = scmp.eq.s32.totalorder %s18, 0
    %p89 = por %p87, %p88
    %p90 = scmp.ne.s32.totalorder %s76, %s77
    %p91 = scmp.eq.s32.totalorder %s19, 3
    %p92 = por %p90, %p91
    %p94 = scmp.ne.s32.totalorder %s77, %s93
    %p95 = scmp.eq.s32.totalorder %s19, 0
    %p96 = por %p94, %p95
    %s97 = sadd.s32 %s21, 1
    %s98 = smul.u32 %s97, 8
    %p99 = scmp.lt.s32.totalorder %s98, 15
    %s100 = scalar_select %p99, %s98, 15
    %s101 = sadd.s32 %s28, 1
    %s102 = smul.u32 %s101, 8
    %p103 = scmp.lt.s32.totalorder %s102, 15
    %s104 = scalar_select %p103, %s102, 15
    %s105 = ssub.s32 %s20, %s32
    %s106 = ssub.s32 %s100, %s104
    %s107 = sor.u32 %s105, %s106
    %p108 = scmp.eq.s32.totalorder %s107, 0
    %s110 = sadd.s32 %s109, 1
    %s111 = scalar_select %p108, %s109, %s110
    %p114 = pneg %p108
    %p115 = scmp.eq.s32.totalorder %s13, 3
    %p116 = por %p114, %p115
    %p117 = scmp.ne.s32.totalorder %s109, %s112
    %p118 = scmp.eq.s32.totalorder %s13, 0
    %p119 = por %p117, %p118
    %p120 = scmp.ne.s32.totalorder %s109, %s112
    %p121 = scmp.eq.s32.totalorder %s18, 3
    %p122 = por %p120, %p121
    %p123 = scmp.ne.s32.totalorder %s112, %s113
    %p124 = scmp.eq.s32.totalorder %s18, 0
    %p125 = por %p123, %p124
    %p126 = scmp.ne.s32.totalorder %s112, %s113
    %p127 = scmp.eq.s32.totalorder %s19, 3
    %p128 = por %p126, %p127
    %p130 = scmp.ne.s32.totalorder %s113, %s129
    %p131 = scmp.eq.s32.totalorder %s19, 0
    %p132 = por %p130, %p131
    %s134 = sadd.s32 %s133, 1
    %p137 = scmp.eq.s32.totalorder %s13, 3
    %p138 = scmp.ne.s32.totalorder %s133, %s135
    %p139 = scmp.eq.s32.totalorder %s13, 0
    %p140 = por %p138, %p139
    %p141 = scmp.ne.s32.totalorder %s133, %s135
    %p142 = scmp.eq.s32.totalorder %s18, 3
    %p143 = por %p141, %p142
    %p144 = scmp.ne.s32.totalorder %s135, %s136
    %p145 = scmp.eq.s32.totalorder %s18, 0
    %p146 = por %p144, %p145
    %p147 = scmp.ne.s32.totalorder %s135, %s136
    %p148 = scmp.eq.s32.totalorder %s19, 3
    %p149 = por %p147, %p148
    %p151 = scmp.ne.s32.totalorder %s136, %s150
    %p152 = scmp.eq.s32.totalorder %s19, 0
    %p153 = por %p151, %p152
    %s155 = sadd.s32 %s154, 1
    %p158 = scmp.eq.s32.totalorder %s13, 3
    %p159 = scmp.ne.s32.totalorder %s154, %s156
    %p160 = scmp.eq.s32.totalorder %s13, 0
    %p161 = por %p159, %p160
    %p162 = scmp.ne.s32.totalorder %s154, %s156
    %p163 = scmp.eq.s32.totalorder %s18, 3
    %p164 = por %p162, %p163
    %p165 = scmp.ne.s32.totalorder %s156, %s157
    %p166 = scmp.eq.s32.totalorder %s18, 0
    %p167 = por %p165, %p166
    %p168 = scmp.ne.s32.totalorder %s156, %s157
    %p169 = scmp.eq.s32.totalorder %s19, 3
    %p170 = por %p168, %p169
    %p172 = scmp.ne.s32.totalorder %s157, %s171
    %p173 = scmp.eq.s32.totalorder %s19, 0
    %p174 = por %p172, %p173
    %s176 = sadd.s32 %s175, 1
    %p179 = scmp.eq.s32.totalorder %s13, 3
    %p180 = scmp.ne.s32.totalorder %s175, %s177
    %p181 = scmp.eq.s32.totalorder %s13, 0
    %p182 = por %p180, %p181
    %p183 = scmp.ne.s32.totalorder %s175, %s177
    %p184 = scmp.eq.s32.totalorder %s18, 3
    %p185 = por %p183, %p184
    %p186 = scmp.ne.s32.totalorder %s177, %s178
    %p187 = scmp.eq.s32.totalorder %s18, 0
    %p188 = por %p186, %p187
    %p189 = scmp.ne.s32.totalorder %s177, %s178
    %p190 = scmp.eq.s32.totalorder %s19, 3
    %p191 = por %p189, %p190
    %p193 = scmp.ne.s32.totalorder %s178, %s192
    %p194 = scmp.eq.s32.totalorder %s19, 0
    %p195 = por %p193, %p194
    %s197 = sadd.s32 %s196, 1
    %p200 = scmp.eq.s32.totalorder %s13, 3
    %p201 = scmp.ne.s32.totalorder %s196, %s198
    %p202 = scmp.eq.s32.totalorder %s13, 0
    %p203 = por %p201, %p202
    %p204 = scmp.ne.s32.totalorder %s196, %s198
    %p205 = scmp.eq.s32.totalorder %s18, 3
    %p206 = por %p204, %p205
    %p207 = scmp.ne.s32.totalorder %s198, %s199
    %p208 = scmp.eq.s32.totalorder %s18, 0
    %p209 = por %p207, %p208
    %p210 = scmp.ne.s32.totalorder %s198, %s199
    %p211 = scmp.eq.s32.totalorder %s19, 3
    %p212 = por %p210, %p211
    %p214 = scmp.ne.s32.totalorder %s199, %s213
    %p215 = scmp.eq.s32.totalorder %s19, 0
    %p216 = por %p214, %p215
    %s217 = ssub.s32 %s20, %s32
    %s218 = ssub.s32 %s21, %s28
    %s219 = sor.u32 %s217, %s218
    %p220 = scmp.eq.s32.totalorder %s219, 0
    %s222 = sadd.s32 %s221, 1
    %s223 = scalar_select %p220, %s221, %s222
    %p226 = pneg %p220
    %p227 = scmp.eq.s32.totalorder %s13, 3
    %p228 = por %p226, %p227
    %p229 = scmp.ne.s32.totalorder %s221, %s224
    %p230 = scmp.eq.s32.totalorder %s13, 0
    %p231 = por %p229, %p230
    %p232 = scmp.ne.s32.totalorder %s221, %s224
    %p233 = scmp.eq.s32.totalorder %s18, 3
    %p234 = por %p232, %p233
    %p235 = scmp.ne.s32.totalorder %s224, %s225
    %p236 = scmp.eq.s32.totalorder %s18, 0
    %p237 = por %p235, %p236
    %p238 = scmp.ne.s32.totalorder %s224, %s225
    %p239 = scmp.eq.s32.totalorder %s19, 3
    %p240 = por %p238, %p239
    %p242 = scmp.ne.s32.totalorder %s225, %s241
    %p243 = scmp.eq.s32.totalorder %s19, 0
    %p244 = por %p242, %p243
    %p245 = scmp.le.s32.totalorder 1, %s13
    %p246 = scmp.lt.s32.totalorder %s13, 5
    %p247 = pnand %p245, %p246
    %p248 = pneg %p247
    // Predicated region
    $region9: #{darkblock.1} parent=5 // pred_check
      _
    $region10: #{darkblock.1} parent=5 // pred_check_branch
      %250 = sbr.rel (%p247) target = $region12
    $region11: #{darkblock.1} parent=5 // pred_region
      %s251 = ssub.s32 %s13, 1
      // Predicated region
      $region13: #{darkblock.1} parent=11 // pred_check
        %p252 = pneg %p146
      $region14: #{darkblock.1} parent=11 // pred_check_branch
        %254 = sbr.rel (%p252) target = $region16
      $region15: #{darkblock.1} parent=11 // pred_region
        _
      $region16: #{darkblock.1} parent=11 // pred_fallthru
        _
      // Predicated region
      $region17: #{darkblock.1} parent=11 // pred_check
        %p255 = pneg %p167
      $region18: #{darkblock.1} parent=11 // pred_check_branch
        %257 = sbr.rel (%p255) target = $region20
      $region19: #{darkblock.1} parent=11 // pred_region
        _
      $region20: #{darkblock.1} parent=11 // pred_fallthru
        _
      // Predicated region
      $region21: #{darkblock.1} parent=11 // pred_check
        %p258 = pneg %p188
      $region22: #{darkblock.1} parent=11 // pred_check_branch
        %260 = sbr.rel (%p258) target = $region24
      $region23: #{darkblock.1} parent=11 // pred_region
        _
      $region24: #{darkblock.1} parent=11 // pred_fallthru
        _
      // Predicated region
      $region25: #{darkblock.1} parent=11 // pred_check
        %p261 = pneg %p209
      $region26: #{darkblock.1} parent=11 // pred_check_branch
        %263 = sbr.rel (%p261) target = $region28
      $region27: #{darkblock.1} parent=11 // pred_region
        _
      $region28: #{darkblock.1} parent=11 // pred_fallthru
        _
    $region12: #{darkblock.1} parent=5 // pred_fallthru
      _
    %p264 = scmp.lt.s32.totalorder %s13, 4
    // Predicated region
    $region29: #{darkblock.1} parent=5 // pred_check
      %p265 = pneg %p264
    $region30: #{darkblock.1} parent=5 // pred_check_branch
      %267 = sbr.rel (%p265) target = $region32
    $region31: #{darkblock.1} parent=5 // pred_region
      // Predicated region
      $region33: #{darkblock.1} parent=31 // pred_check
        %p268 = pneg %p55
      $region34: #{darkblock.1} parent=31 // pred_check_branch
        %270 = sbr.rel (%p268) target = $region36
      $region35: #{darkblock.1} parent=31 // pred_region
        %s271 = smul.u32 %s21, 8
        %s272 = ssub.s32 %s271, 1
        %p273 = scmp.gt.s32.totalorder %s272, 0
        %s274 = scalar_select %p273, %s272, 0
        %p275 = scmp.lt.s32.totalorder %s20, 1
        %s276 = scalar_select %p275, %s20, 1
        %p277 = scmp.lt.s32.totalorder %s274, 15
        %s278 = scalar_select %p277, %s274, 15
        %s279 = smul.addr %s278, 3
        %s280 = smul.addr %s276, 48
        %s281 = sadd.s32 %s279, %s280
        %s282 = smul.addr %s281, 8
        %s283 = scalar_lea.vmem %s0, %s282
        %s284 = smul.u32 %s21, 8
        %s285 = ssub.s32 %s284, 1
        %p286 = scmp.gt.s32.totalorder %s285, 0
        %s287 = scalar_select %p286, %s285, 0
      $region36: #{darkblock.1} parent=31 // pred_fallthru
        _
      // Predicated region
      $region37: #{darkblock.1} parent=31 // pred_check
        %p288 = pneg %p83
      $region38: #{darkblock.1} parent=31 // pred_check_branch
        %290 = sbr.rel (%p288) target = $region40
      $region39: #{darkblock.1} parent=31 // pred_region
        %s291 = smul.u32 8, %s21
        %p292 = scmp.lt.s32.totalorder %s20, 1
        %s293 = scalar_select %p292, %s20, 1
        %p294 = scmp.lt.s32.totalorder %s291, 15
        %s295 = scalar_select %p294, %s291, 15
        %s296 = smul.addr %s295, 3
        %s297 = smul.addr %s293, 48
        %s298 = sadd.s32 %s296, %s297
        %s299 = smul.addr %s298, 8
        %s300 = scalar_lea.vmem %s1, %s299
        %s301 = smul.u32 8, %s21
      $region40: #{darkblock.1} parent=31 // pred_fallthru
        _
      // Predicated region
      $region41: #{darkblock.1} parent=31 // pred_check
        %p302 = pneg %p119
      $region42: #{darkblock.1} parent=31 // pred_check_branch
        %304 = sbr.rel (%p302) target = $region44
      $region43: #{darkblock.1} parent=31 // pred_region
        %s305 = sadd.s32 %s21, 1
        %s306 = smul.u32 %s305, 8
        %p307 = scmp.lt.s32.totalorder %s306, 15
        %s308 = scalar_select %p307, %s306, 15
        %p309 = scmp.lt.s32.totalorder %s20, 1
        %s310 = scalar_select %p309, %s20, 1
        %p311 = scmp.lt.s32.totalorder %s308, 15
        %s312 = scalar_select %p311, %s308, 15
        %s313 = smul.addr %s312, 3
        %s314 = smul.addr %s310, 48
        %s315 = sadd.s32 %s313, %s314
        %s316 = smul.addr %s315, 8
        %s317 = scalar_lea.vmem %s2, %s316
        %s318 = sadd.s32 %s21, 1
        %s319 = smul.u32 %s318, 8
        %p320 = scmp.lt.s32.totalorder %s319, 15
        %s321 = scalar_select %p320, %s319, 15
      $region44: #{darkblock.1} parent=31 // pred_fallthru
        _
    $region32: #{darkblock.1} parent=5 // pred_fallthru
      _
    %p322 = scmp.le.s32.totalorder 1, %s13
    %p323 = scmp.lt.s32.totalorder %s13, 5
    %p324 = pnand %p322, %p323
    %p325 = pneg %p324
    // Predicated region
    $region45: #{darkblock.1} parent=5 // pred_check
      _
    $region46: #{darkblock.1} parent=5 // pred_check_branch
      %327 = sbr.rel (%p324) target = $region48
    $region47: #{darkblock.1} parent=5 // pred_region
      %s328 = ssub.s32 %s13, 1
      %s329 = smul.u32 %s23, 8
      %s330 = ssub.s32 %s329, 1
      %p331 = scmp.gt.s32.totalorder %s330, 0
      %s332 = scalar_select %p331, %s330, 0
      %p333 = scmp.lt.s32.totalorder %s22, 1
      %s334 = scalar_select %p333, %s22, 1
      %p335 = scmp.lt.s32.totalorder %s332, 15
      %s336 = scalar_select %p335, %s332, 15
      %s337 = smul.addr %s336, 3
      %s338 = smul.addr %s334, 48
      %s339 = sadd.s32 %s337, %s338
      %s340 = smul.addr %s339, 8
      %s341 = scalar_lea.vmem %s0, %s340
      %p342 = pneg %p61
      %p343 = pneg %p58
      %s344 = smul.u32 8, %s23
      %p345 = scmp.lt.s32.totalorder %s22, 1
      %s346 = scalar_select %p345, %s22, 1
      %p347 = scmp.lt.s32.totalorder %s344, 15
      %s348 = scalar_select %p347, %s344, 15
      %s349 = smul.addr %s348, 3
      %s350 = smul.addr %s346, 48
      %s351 = sadd.s32 %s349, %s350
      %s352 = smul.addr %s351, 8
      %s353 = scalar_lea.vmem %s1, %s352
      %p354 = pneg %p89
      %p355 = pneg %p86
      %s356 = sadd.s32 %s23, 1
      %s357 = smul.u32 %s356, 8
      %p358 = scmp.lt.s32.totalorder %s357, 15
      %s359 = scalar_select %p358, %s357, 15
      %p360 = scmp.lt.s32.totalorder %s22, 1
      %s361 = scalar_select %p360, %s22, 1
      %p362 = scmp.lt.s32.totalorder %s359, 15
      %s363 = scalar_select %p362, %s359, 15
      %s364 = smul.addr %s363, 3
      %s365 = smul.addr %s361, 48
      %s366 = sadd.s32 %s364, %s365
      %s367 = smul.addr %s366, 8
      %s368 = scalar_lea.vmem %s2, %s367
      %p369 = pneg %p125
      %p370 = pneg %p122
      %p371 = pneg %p146
      %p372 = pneg %p143
      %p373 = pneg %p167
      %p374 = pneg %p164
      %p375 = pneg %p188
      %p376 = pneg %p185
      %p377 = pneg %p209
      %p378 = pneg %p206
      %p379 = pneg %p237
      %p380 = pneg %p234
      %s381 = smul.u32 8, %s23
      %p382 = scmp.lt.s32.totalorder %s22, 1
      %s383 = scalar_select %p382, %s22, 1
      %p384 = scmp.lt.s32.totalorder %s381, 15
      %s385 = scalar_select %p384, %s381, 15
      %s386 = smul.addr %s385, 3
      %s387 = smul.addr %s383, 48
      %s388 = sadd.s32 %s386, %s387
      %s389 = smul.addr %s388, 8
      %s390 = scalar_lea.vmem %s7, %s389
      %s391 = smul.u32 %s23, 8
      %s392 = ssub.s32 %s391, 1
      %p393 = scmp.gt.s32.totalorder %s392, 0
      %s394 = scalar_select %p393, %s392, 0
      %p395 = scmp.lt.s32.totalorder %s22, 1
      %s396 = scalar_select %p395, %s22, 1
      %p397 = scmp.lt.s32.totalorder %s394, 15
      %s398 = scalar_select %p397, %s394, 15
      %s399 = smul.addr %s398, 3
      %s400 = smul.addr %s396, 48
      %s401 = sadd.s32 %s399, %s400
      %s402 = smul.addr %s401, 8
      %s403 = scalar_lea.vmem %s0, %s402
      %s404 = smul.u32 %s23, 8
      %s405 = ssub.s32 %s404, 1
      %p406 = scmp.gt.s32.totalorder %s405, 0
      %s407 = scalar_select %p406, %s405, 0
      %s408 = smul.u32 8, %s23
      %p409 = scmp.lt.s32.totalorder %s22, 1
      %s410 = scalar_select %p409, %s22, 1
      %p411 = scmp.lt.s32.totalorder %s408, 15
      %s412 = scalar_select %p411, %s408, 15
      %s413 = smul.addr %s412, 3
      %s414 = smul.addr %s410, 48
      %s415 = sadd.s32 %s413, %s414
      %s416 = smul.addr %s415, 8
      %s417 = scalar_lea.vmem %s1, %s416
      %s418 = smul.u32 8, %s23
      %s419 = sadd.s32 %s23, 1
      %s420 = smul.u32 %s419, 8
      %p421 = scmp.lt.s32.totalorder %s420, 15
      %s422 = scalar_select %p421, %s420, 15
      %p423 = scmp.lt.s32.totalorder %s22, 1
      %s424 = scalar_select %p423, %s22, 1
      %p425 = scmp.lt.s32.totalorder %s422, 15
      %s426 = scalar_select %p425, %s422, 15
      %s427 = smul.addr %s426, 3
      %s428 = smul.addr %s424, 48
      %s429 = sadd.s32 %s427, %s428
      %s430 = smul.addr %s429, 8
      %s431 = scalar_lea.vmem %s2, %s430
      %s432 = sadd.s32 %s23, 1
      %s433 = smul.u32 %s432, 8
      %p434 = scmp.lt.s32.totalorder %s433, 15
      %s435 = scalar_select %p434, %s433, 15
      %s436 = smul.u32 8, %s23
      %p437 = scmp.lt.s32.totalorder %s22, 1
      %s438 = scalar_select %p437, %s22, 1
      %p439 = scmp.lt.s32.totalorder %s436, 15
      %s440 = scalar_select %p439, %s436, 15
      %s441 = smul.addr %s440, 3
      %s442 = smul.addr %s438, 48
      %s443 = sadd.s32 %s441, %s442
      %s444 = smul.addr %s443, 8
      %s445 = scalar_lea.vmem %s7, %s444
      %s446 = smul.u32 8, %s23
      %v448 = vld [vmem:[%s403] sm:$0xff]
      %v449 = vld [vmem:[%s403 + $0x8] sm:$0xff]
      %v450 = vld [vmem:[%s403 + $0x10] sm:$0xff]
      %v451 = vpack.c.bf16 %v449, %v448
      %v452 = vpack.c.bf16 %v450, %v450
      %v453 = vld [vmem:[%s417] sm:$0xff]
      %v454 = vld [vmem:[%s417 + $0x8] sm:$0xff]
      %v455 = vld [vmem:[%s417 + $0x10] sm:$0xff]
      %v456 = vld [vmem:[%s417 + $0x18] sm:$0xff]
      %v457 = vld [vmem:[%s417 + $0x20] sm:$0xff]
      %v458 = vld [vmem:[%s417 + $0x28] sm:$0xff]
      %v459 = vld [vmem:[%s417 + $0x30] sm:$0xff]
      %v460 = vld [vmem:[%s417 + $0x38] sm:$0xff]
      %v461 = vld [vmem:[%s417 + $0x40] sm:$0xff]
      %v462 = vld [vmem:[%s417 + $0x48] sm:$0xff]
      %v463 = vld [vmem:[%s417 + $0x50] sm:$0xff]
      %v464 = vld [vmem:[%s417 + $0x58] sm:$0xff]
      %v465 = vld [vmem:[%s417 + $0x60] sm:$0xff]
      %v466 = vld [vmem:[%s417 + $0x68] sm:$0xff]
      %v467 = vld [vmem:[%s417 + $0x70] sm:$0xff]
      %v468 = vld [vmem:[%s417 + $0x78] sm:$0xff]
      %v469 = vld [vmem:[%s417 + $0x80] sm:$0xff]
      %v470 = vld [vmem:[%s417 + $0x88] sm:$0xff]
      %v471 = vld [vmem:[%s417 + $0x90] sm:$0xff]
      %v472 = vld [vmem:[%s417 + $0x98] sm:$0xff]
      %v473 = vld [vmem:[%s417 + $0xa0] sm:$0xff]
      %v474 = vld [vmem:[%s417 + $0xa8] sm:$0xff]
      %v475 = vld [vmem:[%s417 + $0xb0] sm:$0xff]
      %v476 = vld [vmem:[%s417 + $0xb8] sm:$0xff]
      %v477 = vpack.c.bf16 %v454, %v453
      %v478 = vpack.c.bf16 %v455, %v455
      %v479 = vpack.c.bf16 %v457, %v456
      %v480 = vpack.c.bf16 %v458, %v458
      %v481 = vpack.c.bf16 %v460, %v459
      %v482 = vpack.c.bf16 %v461, %v461
      %v483 = vpack.c.bf16 %v463, %v462
      %v484 = vpack.c.bf16 %v464, %v464
      %v485 = vpack.c.bf16 %v466, %v465
      %v486 = vpack.c.bf16 %v467, %v467
      %v487 = vpack.c.bf16 %v469, %v468
      %v488 = vpack.c.bf16 %v470, %v470
      %v489 = vpack.c.bf16 %v472, %v471
      %v490 = vpack.c.bf16 %v473, %v473
      %v491 = vpack.c.bf16 %v475, %v474
      %v492 = vpack.c.bf16 %v476, %v476
      %v493 = vld [vmem:[%s431] sm:$0xff]
      %v494 = vld [vmem:[%s431 + $0x8] sm:$0xff]
      %v495 = vld [vmem:[%s431 + $0x10] sm:$0xff]
      %v496 = vpack.c.bf16 %v494, %v493
      %v497 = vpack.c.bf16 %v495, %v495
      %v518 = vunpack.c.l.b16 %v451
      %v519 = vunpack.c.h.b16 %v451
      %v520 = vunpack.c.l.b16 %v452
      %v521 = vunpack.c.l.b16 %v477
      %v522 = vunpack.c.h.b16 %v477
      %v523 = vunpack.c.l.b16 %v478
      %v524 = vunpack.c.l.b16 %v479
      %v525 = vunpack.c.h.b16 %v479
      %v526 = vunpack.c.l.b16 %v480
      %v527 = vunpack.c.l.b16 %v481
      %v528 = vunpack.c.h.b16 %v481
      %v529 = vunpack.c.l.b16 %v482
      %v530 = vunpack.c.l.b16 %v483
      %v531 = vunpack.c.h.b16 %v483
      %v532 = vunpack.c.l.b16 %v484
      %v533 = vunpack.c.l.b16 %v485
      %v534 = vunpack.c.h.b16 %v485
      %v535 = vunpack.c.l.b16 %v486
      %v536 = vunpack.c.l.b16 %v487
      %v537 = vunpack.c.h.b16 %v487
      %v538 = vunpack.c.l.b16 %v488
      %v539 = vunpack.c.l.b16 %v489
      %v540 = vunpack.c.h.b16 %v489
      %v541 = vunpack.c.l.b16 %v490
      %v542 = vunpack.c.l.b16 %v491
      %v543 = vunpack.c.h.b16 %v491
      %v544 = vunpack.c.l.b16 %v492
      %v545 = vunpack.c.l.b16 %v496
      %v546 = vunpack.c.h.b16 %v496
      %v547 = vunpack.c.l.b16 %v497
      %v548 = vld [vmem:[%s3] sm:$0xf]
      %v549 = vld [vmem:[%s3 + $0x4] sm:$0xf]
      %v550 = vld [vmem:[%s3 + $0x8] sm:$0xf]
      %v551 = vld [vmem:[%s3 + $0xc] sm:$0xf]
      %v552 = vld [vmem:[%s3 + $0x10] sm:$0xf]
      %v553 = vld [vmem:[%s3 + $0x14] sm:$0xf]
      %v554 = vld [vmem:[%s3 + $0x18] sm:$0xf]
      %v555 = vld [vmem:[%s3 + $0x1c] sm:$0xf]
      %v556 = vld [vmem:[%s3 + $0x20] sm:$0xf]
      %v557 = vld [vmem:[%s3 + $0x24] sm:$0xf]
      %v558 = vld [vmem:[%s3 + $0x28] sm:$0xf]
      %v559 = vld [vmem:[%s3 + $0x2c] sm:$0xf]
      %v560 = vld [vmem:[%s3 + $0x30] sm:$0xf]
      %v561 = vld [vmem:[%s3 + $0x34] sm:$0xf]
      %v562 = vld [vmem:[%s3 + $0x38] sm:$0xf]
      %v563 = vld [vmem:[%s3 + $0x3c] sm:$0xf]
      %v564 = vld [vmem:[%s4] sm:$0x1]
      %v566 = vlaneseq
      %v567 = vshrl.u32 %v566, 7
      %v568 = vsub.s32 0, %v567
      %v569 = vrot.slane %v564, %v568
      %v571 = vpack.c.b16 %v519, %v518
      %v572 = vpack.c.b16 %v521, %v520
      %v573 = vpack.c.b16 %v523, %v522
      %v574 = vpack.c.b16 %v525, %v524
      %v575 = vpack.c.b16 %v527, %v526
      %v576 = vpack.c.b16 %v529, %v528
      %v577 = vpack.c.b16 %v531, %v530
      %v578 = vpack.c.b16 %v533, %v532
      %v579 = vpack.c.b16 %v535, %v534
      %v580 = vpack.c.b16 %v537, %v536
      %v581 = vpack.c.b16 %v539, %v538
      %v582 = vpack.c.b16 %v541, %v540
      %v583 = vpack.c.b16 %v543, %v542
      %v584 = vpack.c.b16 %v545, %v544
      %v585 = vpack.c.b16 %v547, %v546
      %v617 = vunpack.c.l.b16 %v548
      %v618 = vunpack.c.l.b16 %v549
      %v619 = vunpack.c.l.b16 %v550
      %v620 = vunpack.c.l.b16 %v551
      %v621 = vunpack.c.l.b16 %v552
      %v622 = vunpack.c.l.b16 %v553
      %v623 = vunpack.c.l.b16 %v554
      %v624 = vunpack.c.l.b16 %v555
      %v625 = vunpack.c.l.b16 %v556
      %v626 = vunpack.c.l.b16 %v557
      %v627 = vunpack.c.l.b16 %v558
      %v628 = vunpack.c.l.b16 %v559
      %v629 = vunpack.c.l.b16 %v560
      %v630 = vunpack.c.l.b16 %v561
      %v631 = vunpack.c.l.b16 %v562
      %v632 = vunpack.c.l.b16 %v563
      %v633 = vpack.c.b16 %v618, %v617
      %v634 = vpack.c.b16 %v620, %v619
      %v635 = vpack.c.b16 %v622, %v621
      %v636 = vpack.c.b16 %v624, %v623
      %v637 = vpack.c.b16 %v626, %v625
      %v638 = vpack.c.b16 %v628, %v627
      %v639 = vpack.c.b16 %v630, %v629
      %v640 = vpack.c.b16 %v632, %v631
      %649 = vmatprep.subr.bf16.mxu0 0
      %650 = vmatpush1.bf16.msra.mxu0 %v640
      %651 = vmatprep.subr.bf16.mxu0 0
      %652 = vmatpush1.bf16.msra.mxu0 %v639
      %653 = vmatprep.subr.bf16.mxu0 0
      %654 = vmatpush1.bf16.msra.mxu0 %v638
      %655 = vmatprep.subr.bf16.mxu0 0
      %656 = vmatpush1.bf16.msra.mxu0 %v637
      %657 = vmatprep.subr.bf16.mxu0 0
      %658 = vmatpush1.bf16.msra.mxu0 %v636
      %659 = vmatprep.subr.bf16.mxu0 0
      %660 = vmatpush1.bf16.msra.mxu0 %v635
      %661 = vmatprep.subr.bf16.mxu0 0
      %662 = vmatpush1.bf16.msra.mxu0 %v634
      %663 = vmatprep.subr.bf16.mxu0 0
      %664 = vmatpush1.bf16.msra.mxu0 %v633
      %665 = vmatprep.subr.bf16.mxu0 0
      %666 = vmatpush2.bf16.msra.mxu0 0
      %667 = vmatprep.subr.bf16.mxu0 0
      %668 = vmatpush2.bf16.msra.mxu0 0
      %669 = vmatprep.subr.bf16.mxu0 0
      %670 = vmatpush2.bf16.msra.mxu0 0
      %671 = vmatprep.subr.bf16.mxu0 0
      %672 = vmatpush2.bf16.msra.mxu0 0
      %673 = vmatprep.subr.bf16.mxu0 0
      %674 = vmatpush2.bf16.msra.mxu0 0
      %675 = vmatprep.subr.bf16.mxu0 0
      %676 = vmatpush2.bf16.msra.mxu0 0
      %677 = vmatprep.subr.bf16.mxu0 0
      %678 = vmatpush2.bf16.msra.mxu0 0
      %679 = vmatprep.subr.bf16.mxu0 0
      %680 = vmatpush2.bf16.msra.mxu0 0
      %681 = vmatprep.mubr.bf16.mxu0 0
      %682 = vmatmul.mubr.bf16.gmra.mxu0 %v571
      %v683 = vpop.f32.mrf.mxu0
      %v684 = vadd.f32 %v569, %v683
      %v685 = vpop.f32.mrf.mxu0
      %v686 = vpop.f32.mrf.mxu0
      %v687 = vadd.f32 %v569, %v686
      %v688 = vpop.f32.mrf.mxu0
      %689 = vmatprep.mubr.bf16.mxu0 0
      %690 = vmatmul.mubr.bf16.gmra.mxu0 %v572
      %v691 = vpop.f32.mrf.mxu0
      %v692 = vadd.f32 %v569, %v691
      %v693 = vpop.f32.mrf.mxu0
      %v694 = vpop.f32.mrf.mxu0
      %v695 = vadd.f32 %v569, %v694
      %v696 = vpop.f32.mrf.mxu0
      %697 = vmatprep.mubr.bf16.mxu0 0
      %698 = vmatmul.mubr.bf16.gmra.mxu0 %v573
      %v699 = vpop.f32.mrf.mxu0
      %v700 = vadd.f32 %v569, %v699
      %v701 = vpop.f32.mrf.mxu0
      %v702 = vpop.f32.mrf.mxu0
      %v703 = vadd.f32 %v569, %v702
      %v704 = vpop.f32.mrf.mxu0
      %705 = vmatprep.mubr.bf16.mxu0 0
      %706 = vmatmul.mubr.bf16.gmra.mxu0 %v574
      %v707 = vpop.f32.mrf.mxu0
      %v708 = vadd.f32 %v569, %v707
      %v709 = vpop.f32.mrf.mxu0
      %v710 = vpop.f32.mrf.mxu0
      %v711 = vadd.f32 %v569, %v710
      %v712 = vpop.f32.mrf.mxu0
      %713 = vmatprep.mubr.bf16.mxu0 0
      %714 = vmatmul.mubr.bf16.gmra.mxu0 %v575
      %v715 = vpop.f32.mrf.mxu0
      %v716 = vadd.f32 %v569, %v715
      %v717 = vpop.f32.mrf.mxu0
      %v718 = vpop.f32.mrf.mxu0
      %v719 = vadd.f32 %v569, %v718
      %v720 = vpop.f32.mrf.mxu0
      %721 = vmatprep.mubr.bf16.mxu0 0
      %722 = vmatmul.mubr.bf16.gmra.mxu0 %v576
      %v723 = vpop.f32.mrf.mxu0
      %v724 = vadd.f32 %v569, %v723
      %v725 = vpop.f32.mrf.mxu0
      %v726 = vpop.f32.mrf.mxu0
      %v727 = vadd.f32 %v569, %v726
      %v728 = vpop.f32.mrf.mxu0
      %729 = vmatprep.mubr.bf16.mxu0 0
      %730 = vmatmul.mubr.bf16.gmra.mxu0 %v577
      %v731 = vpop.f32.mrf.mxu0
      %v732 = vadd.f32 %v569, %v731
      %v733 = vpop.f32.mrf.mxu0
      %v734 = vpop.f32.mrf.mxu0
      %v735 = vadd.f32 %v569, %v734
      %v736 = vpop.f32.mrf.mxu0
      %737 = vmatprep.mubr.bf16.mxu0 0
      %738 = vmatmul.mubr.bf16.gmra.mxu0 %v578
      %v739 = vpop.f32.mrf.mxu0
      %v740 = vadd.f32 %v569, %v739
      %v741 = vpop.f32.mrf.mxu0
      %v742 = vpop.f32.mrf.mxu0
      %v743 = vadd.f32 %v569, %v742
      %v744 = vpop.f32.mrf.mxu0
      %745 = vmatprep.mubr.bf16.mxu0 0
      %746 = vmatmul.mubr.bf16.gmra.mxu0 %v579
      %v747 = vpop.f32.mrf.mxu0
      %v748 = vadd.f32 %v569, %v747
      %v749 = vpop.f32.mrf.mxu0
      %v750 = vpop.f32.mrf.mxu0
      %v751 = vadd.f32 %v569, %v750
      %v752 = vpop.f32.mrf.mxu0
      %753 = vmatprep.mubr.bf16.mxu0 0
      %754 = vmatmul.mubr.bf16.gmra.mxu0 %v580
      %v755 = vpop.f32.mrf.mxu0
      %v756 = vadd.f32 %v569, %v755
      %v757 = vpop.f32.mrf.mxu0
      %v758 = vpop.f32.mrf.mxu0
      %v759 = vadd.f32 %v569, %v758
      %v760 = vpop.f32.mrf.mxu0
      %761 = vmatprep.mubr.bf16.mxu0 0
      %762 = vmatmul.mubr.bf16.gmra.mxu0 %v581
      %v763 = vpop.f32.mrf.mxu0
      %v764 = vadd.f32 %v569, %v763
      %v765 = vpop.f32.mrf.mxu0
      %v766 = vpop.f32.mrf.mxu0
      %v767 = vadd.f32 %v569, %v766
      %v768 = vpop.f32.mrf.mxu0
      %769 = vmatprep.mubr.bf16.mxu0 0
      %770 = vmatmul.mubr.bf16.gmra.mxu0 %v582
      %v771 = vpop.f32.mrf.mxu0
      %v772 = vadd.f32 %v569, %v771
      %v773 = vpop.f32.mrf.mxu0
      %v774 = vpop.f32.mrf.mxu0
      %v775 = vadd.f32 %v569, %v774
      %v776 = vpop.f32.mrf.mxu0
      %777 = vmatprep.mubr.bf16.mxu0 0
      %778 = vmatmul.mubr.bf16.gmra.mxu0 %v583
      %v779 = vpop.f32.mrf.mxu0
      %v780 = vadd.f32 %v569, %v779
      %v781 = vpop.f32.mrf.mxu0
      %v782 = vpop.f32.mrf.mxu0
      %v783 = vadd.f32 %v569, %v782
      %v784 = vpop.f32.mrf.mxu0
      %785 = vmatprep.mubr.bf16.mxu0 0
      %786 = vmatmul.mubr.bf16.gmra.mxu0 %v584
      %v787 = vpop.f32.mrf.mxu0
      %v788 = vadd.f32 %v569, %v787
      %v789 = vpop.f32.mrf.mxu0
      %v790 = vpop.f32.mrf.mxu0
      %v791 = vadd.f32 %v569, %v790
      %v792 = vpop.f32.mrf.mxu0
      %793 = vmatprep.mubr.bf16.mxu0 0
      %794 = vmatmul.mubr.bf16.gmra.mxu0 %v585
      %v795 = vpop.f32.mrf.mxu0
      %v796 = vadd.f32 %v569, %v795
      %v797 = vpop.f32.mrf.mxu0
      %v798 = vpop.f32.mrf.mxu0
      %v799 = vadd.f32 %v569, %v798
      %v800 = vpop.f32.mrf.mxu0
      %801 = vdwg.mxu0
      %v802 = vmul.f32 %v684, 0.1
      %v803 = vmul.f32 %v687, 0.1
      %v804 = vmul.f32 %v692, 0.1
      %v805 = vmul.f32 %v695, 0.1
      %v806 = vmul.f32 %v700, 0.1
      %v807 = vmul.f32 %v703, 0.1
      %v808 = vmul.f32 %v708, 0.1
      %v809 = vmul.f32 %v711, 0.1
      %v810 = vmul.f32 %v716, 0.1
      %v811 = vmul.f32 %v719, 0.1
      %v812 = vmul.f32 %v724, 0.1
      %v813 = vmul.f32 %v727, 0.1
      %v814 = vmul.f32 %v732, 0.1
      %v815 = vmul.f32 %v735, 0.1
      %v816 = vmul.f32 %v740, 0.1
      %v817 = vmul.f32 %v743, 0.1
      %v818 = vmul.f32 %v748, 0.1
      %v819 = vmul.f32 %v751, 0.1
      %v820 = vmul.f32 %v756, 0.1
      %v821 = vmul.f32 %v759, 0.1
      %v822 = vmul.f32 %v764, 0.1
      %v823 = vmul.f32 %v767, 0.1
      %v824 = vmul.f32 %v772, 0.1
      %v825 = vmul.f32 %v775, 0.1
      %v826 = vmul.f32 %v780, 0.1
      %v827 = vmul.f32 %v783, 0.1
      %v828 = vmul.f32 %v788, 0.1
      %v829 = vmul.f32 %v791, 0.1
      %v830 = vmul.f32 %v796, 0.1
      %v831 = vmul.f32 %v799, 0.1
      %v832 = vmax.f32 %v684, %v802
      %v833 = vmax.f32 %v687, %v803
      %v834 = vmax.f32 %v692, %v804
      %v835 = vmax.f32 %v695, %v805
      %v836 = vmax.f32 %v700, %v806
      %v837 = vmax.f32 %v703, %v807
      %v838 = vmax.f32 %v708, %v808
      %v839 = vmax.f32 %v711, %v809
      %v840 = vmax.f32 %v716, %v810
      %v841 = vmax.f32 %v719, %v811
      %v842 = vmax.f32 %v724, %v812
      %v843 = vmax.f32 %v727, %v813
      %v844 = vmax.f32 %v732, %v814
      %v845 = vmax.f32 %v735, %v815
      %v846 = vmax.f32 %v740, %v816
      %v847 = vmax.f32 %v743, %v817
      %v848 = vmax.f32 %v748, %v818
      %v849 = vmax.f32 %v751, %v819
      %v850 = vmax.f32 %v756, %v820
      %v851 = vmax.f32 %v759, %v821
      %v852 = vmax.f32 %v764, %v822
      %v853 = vmax.f32 %v767, %v823
      %v854 = vmax.f32 %v772, %v824
      %v855 = vmax.f32 %v775, %v825
      %v856 = vmax.f32 %v780, %v826
      %v857 = vmax.f32 %v783, %v827
      %v858 = vmax.f32 %v788, %v828
      %v859 = vmax.f32 %v791, %v829
      %v860 = vmax.f32 %v796, %v830
      %v861 = vmax.f32 %v799, %v831
      %v862 = vlaneseq
      %v863 = vshrl.u32 %v862, 7
      %v864 = vadd.s32 %v863, 8
      %v865 = vadd.s32 %v863, 16
      %s866 = smul.u32 %s23, 8
      %v867 = vstv %s866
      %v868 = vadd.s32 %v867, 2
      %v869 = vadd.s32 %v867, 3
      %v870 = vadd.s32 %v867, 4
      %v871 = vadd.s32 %v867, 5
      %v872 = vadd.s32 %v867, 6
      %v873 = vadd.s32 %v867, 7
      %v874 = vadd.s32 %v867, 8
      %v875 = vadd.s32 %v867, 9
      %v876 = vsub.s32 %v867, 1
      %v877 = vsub.s32 %v868, 1
      %v878 = vsub.s32 %v869, 1
      %v879 = vsub.s32 %v870, 1
      %v880 = vsub.s32 %v871, 1
      %v881 = vsub.s32 %v872, 1
      %v882 = vsub.s32 %v873, 1
      %v883 = vsub.s32 %v874, 1
      %v884 = vsub.s32 %v875, 1
      %vm885 = vcmp.ge.s32.totalorder %v876, 0
      %vm886 = vcmp.ge.s32.totalorder %v867, 0
      %vm887 = vcmp.ge.s32.totalorder %v877, 0
      %vm888 = vcmp.ge.s32.totalorder %v878, 0
      %vm889 = vcmp.ge.s32.totalorder %v879, 0
      %vm890 = vcmp.ge.s32.totalorder %v880, 0
      %vm891 = vcmp.ge.s32.totalorder %v881, 0
      %vm892 = vcmp.ge.s32.totalorder %v882, 0
      %vm893 = vcmp.ge.s32.totalorder %v883, 0
      %vm894 = vcmp.ge.s32.totalorder %v884, 0
      %vm895 = vcmp.lt.s32.totalorder %v876, 16
      %vm896 = vcmp.lt.s32.totalorder %v867, 16
      %vm897 = vcmp.lt.s32.totalorder %v877, 16
      %vm898 = vcmp.lt.s32.totalorder %v878, 16
      %vm899 = vcmp.lt.s32.totalorder %v879, 16
      %vm900 = vcmp.lt.s32.totalorder %v880, 16
      %vm901 = vcmp.lt.s32.totalorder %v881, 16
      %vm902 = vcmp.lt.s32.totalorder %v882, 16
      %vm903 = vcmp.lt.s32.totalorder %v883, 16
      %vm904 = vcmp.lt.s32.totalorder %v884, 16
      %vm905 = vmand %vm885, %vm895
      %vm906 = vmand %vm886, %vm896
      %vm907 = vmand %vm887, %vm897
      %vm908 = vmand %vm888, %vm898
      %vm909 = vmand %vm889, %vm899
      %vm910 = vmand %vm890, %vm900
      %vm911 = vmand %vm891, %vm901
      %vm912 = vmand %vm892, %vm902
      %vm913 = vmand %vm893, %vm903
      %vm914 = vmand %vm894, %vm904
      %vm915 = vcmp.ge.s32.totalorder %v863, 1
      %vm916 = vcmp.ge.s32.totalorder %v864, 1
      %vm917 = vcmp.ge.s32.totalorder %v865, 1
      %vm918 = vmand %vm905, %vm915
      %vm919 = vmand %vm905, %vm916
      %vm920 = vmand %vm905, %vm917
      %vm921 = vmand %vm906, %vm915
      %vm922 = vmand %vm906, %vm916
      %vm923 = vmand %vm906, %vm917
      %vm924 = vmand %vm907, %vm915
      %vm925 = vmand %vm907, %vm916
      %vm926 = vmand %vm907, %vm917
      %vm927 = vmand %vm908, %vm915
      %vm928 = vmand %vm908, %vm916
      %vm929 = vmand %vm908, %vm917
      %vm930 = vmand %vm909, %vm915
      %vm931 = vmand %vm909, %vm916
      %vm932 = vmand %vm909, %vm917
      %vm933 = vmand %vm910, %vm915
      %vm934 = vmand %vm910, %vm916
      %vm935 = vmand %vm910, %vm917
      %vm936 = vmand %vm911, %vm915
      %vm937 = vmand %vm911, %vm916
      %vm938 = vmand %vm911, %vm917
      %vm939 = vmand %vm912, %vm915
      %vm940 = vmand %vm912, %vm916
      %vm941 = vmand %vm912, %vm917
      %vm942 = vmand %vm913, %vm915
      %vm943 = vmand %vm913, %vm916
      %vm944 = vmand %vm913, %vm917
      %vm945 = vmand %vm914, %vm915
      %vm946 = vmand %vm914, %vm916
      %vm947 = vmand %vm914, %vm917
      %vm948 = vcmp.le.s32.totalorder %v863, 16
      %vm949 = vcmp.le.s32.totalorder %v864, 16
      %vm950 = vcmp.le.s32.totalorder %v865, 16
      %vm951 = vmand %vm918, %vm948
      %vm952 = vmand %vm919, %vm949
      %vm953 = vmand %vm920, %vm950
      %vm954 = vmand %vm921, %vm948
      %vm955 = vmand %vm922, %vm949
      %vm956 = vmand %vm923, %vm950
      %vm957 = vmand %vm924, %vm948
      %vm958 = vmand %vm925, %vm949
      %vm959 = vmand %vm926, %vm950
      %vm960 = vmand %vm927, %vm948
      %vm961 = vmand %vm928, %vm949
      %vm962 = vmand %vm929, %vm950
      %vm963 = vmand %vm930, %vm948
      %vm964 = vmand %vm931, %vm949
      %vm965 = vmand %vm932, %vm950
      %vm966 = vmand %vm933, %vm948
      %vm967 = vmand %vm934, %vm949
      %vm968 = vmand %vm935, %vm950
      %vm969 = vmand %vm936, %vm948
      %vm970 = vmand %vm937, %vm949
      %vm971 = vmand %vm938, %vm950
      %vm972 = vmand %vm939, %vm948
      %vm973 = vmand %vm940, %vm949
      %vm974 = vmand %vm941, %vm950
      %vm975 = vmand %vm942, %vm948
      %vm976 = vmand %vm943, %vm949
      %vm977 = vmand %vm944, %vm950
      %vm978 = vmand %vm945, %vm948
      %vm979 = vmand %vm946, %vm949
      %vm980 = vmand %vm947, %vm950
      %v981 = vsel %vm951, 1, 0
      %v982 = vsel %vm952, 1, 0
      %v983 = vsel %vm953, 1, 0
      %v984 = vsel %vm954, 1, 0
      %v985 = vsel %vm955, 1, 0
      %v986 = vsel %vm956, 1, 0
      %v987 = vsel %vm957, 1, 0
      %v988 = vsel %vm958, 1, 0
      %v989 = vsel %vm959, 1, 0
      %v990 = vsel %vm960, 1, 0
      %v991 = vsel %vm961, 1, 0
      %v992 = vsel %vm962, 1, 0
      %v993 = vsel %vm963, 1, 0
      %v994 = vsel %vm964, 1, 0
      %v995 = vsel %vm965, 1, 0
      %v996 = vsel %vm966, 1, 0
      %v997 = vsel %vm967, 1, 0
      %v998 = vsel %vm968, 1, 0
      %v999 = vsel %vm969, 1, 0
      %v1000 = vsel %vm970, 1, 0
      %v1001 = vsel %vm971, 1, 0
      %v1002 = vsel %vm972, 1, 0
      %v1003 = vsel %vm973, 1, 0
      %v1004 = vsel %vm974, 1, 0
      %v1005 = vsel %vm975, 1, 0
      %v1006 = vsel %vm976, 1, 0
      %v1007 = vsel %vm977, 1, 0
      %v1008 = vsel %vm978, 1, 0
      %v1009 = vsel %vm979, 1, 0
      %v1010 = vsel %vm980, 1, 0
      %v1011 = vcvt.s32.f32 %v981
      %v1012 = vcvt.s32.f32 %v982
      %v1013 = vcvt.s32.f32 %v983
      %v1014 = vcvt.s32.f32 %v984
      %v1015 = vcvt.s32.f32 %v985
      %v1016 = vcvt.s32.f32 %v986
      %v1017 = vcvt.s32.f32 %v987
      %v1018 = vcvt.s32.f32 %v988
      %v1019 = vcvt.s32.f32 %v989
      %v1020 = vcvt.s32.f32 %v990
      %v1021 = vcvt.s32.f32 %v991
      %v1022 = vcvt.s32.f32 %v992
      %v1023 = vcvt.s32.f32 %v993
      %v1024 = vcvt.s32.f32 %v994
      %v1025 = vcvt.s32.f32 %v995
      %v1026 = vcvt.s32.f32 %v996
      %v1027 = vcvt.s32.f32 %v997
      %v1028 = vcvt.s32.f32 %v998
      %v1029 = vcvt.s32.f32 %v999
      %v1030 = vcvt.s32.f32 %v1000
      %v1031 = vcvt.s32.f32 %v1001
      %v1032 = vcvt.s32.f32 %v1002
      %v1033 = vcvt.s32.f32 %v1003
      %v1034 = vcvt.s32.f32 %v1004
      %v1035 = vcvt.s32.f32 %v1005
      %v1036 = vcvt.s32.f32 %v1006
      %v1037 = vcvt.s32.f32 %v1007
      %v1038 = vcvt.s32.f32 %v1008
      %v1039 = vcvt.s32.f32 %v1009
      %v1040 = vcvt.s32.f32 %v1010
      %v1041 = vmul.f32 %v832, %v1011
      %v1042 = vmul.f32 %v833, %v1012
      %v1043 = vmul.f32 %v834, %v1013
      %v1044 = vmul.f32 %v835, %v1014
      %v1045 = vmul.f32 %v836, %v1015
      %v1046 = vmul.f32 %v837, %v1016
      %v1047 = vmul.f32 %v838, %v1017
      %v1048 = vmul.f32 %v839, %v1018
      %v1049 = vmul.f32 %v840, %v1019
      %v1050 = vmul.f32 %v841, %v1020
      %v1051 = vmul.f32 %v842, %v1021
      %v1052 = vmul.f32 %v843, %v1022
      %v1053 = vmul.f32 %v844, %v1023
      %v1054 = vmul.f32 %v845, %v1024
      %v1055 = vmul.f32 %v846, %v1025
      %v1056 = vmul.f32 %v847, %v1026
      %v1057 = vmul.f32 %v848, %v1027
      %v1058 = vmul.f32 %v849, %v1028
      %v1059 = vmul.f32 %v850, %v1029
      %v1060 = vmul.f32 %v851, %v1030
      %v1061 = vmul.f32 %v852, %v1031
      %v1062 = vmul.f32 %v853, %v1032
      %v1063 = vmul.f32 %v854, %v1033
      %v1064 = vmul.f32 %v855, %v1034
      %v1065 = vmul.f32 %v856, %v1035
      %v1066 = vmul.f32 %v857, %v1036
      %v1067 = vmul.f32 %v858, %v1037
      %v1068 = vmul.f32 %v859, %v1038
      %v1069 = vmul.f32 %v860, %v1039
      %v1070 = vmul.f32 %v861, %v1040
      %v1071 = vpack.c.bf16 %v1042, %v1041
      %v1072 = vpack.c.bf16 %v1043, %v1043
      %v1073 = vpack.c.bf16 %v1045, %v1044
      %v1074 = vpack.c.bf16 %v1046, %v1046
      %v1075 = vpack.c.bf16 %v1048, %v1047
      %v1076 = vpack.c.bf16 %v1049, %v1049
      %v1077 = vpack.c.bf16 %v1051, %v1050
      %v1078 = vpack.c.bf16 %v1052, %v1052
      %v1079 = vpack.c.bf16 %v1054, %v1053
      %v1080 = vpack.c.bf16 %v1055, %v1055
      %v1081 = vpack.c.bf16 %v1057, %v1056
      %v1082 = vpack.c.bf16 %v1058, %v1058
      %v1083 = vpack.c.bf16 %v1060, %v1059
      %v1084 = vpack.c.bf16 %v1061, %v1061
      %v1085 = vpack.c.bf16 %v1063, %v1062
      %v1086 = vpack.c.bf16 %v1064, %v1064
      %v1087 = vpack.c.bf16 %v1066, %v1065
      %v1088 = vpack.c.bf16 %v1067, %v1067
      %v1089 = vpack.c.bf16 %v1069, %v1068
      %v1090 = vpack.c.bf16 %v1070, %v1070
      %v1111 = vunpack.c.l.b16 %v1071
      %v1112 = vunpack.c.h.b16 %v1071
      %v1113 = vunpack.c.l.b16 %v1072
      %v1114 = vunpack.c.l.b16 %v1073
      %v1115 = vunpack.c.h.b16 %v1073
      %v1116 = vunpack.c.l.b16 %v1074
      %v1117 = vunpack.c.l.b16 %v1075
      %v1118 = vunpack.c.h.b16 %v1075
      %v1119 = vunpack.c.l.b16 %v1076
      %v1120 = vunpack.c.l.b16 %v1077
      %v1121 = vunpack.c.h.b16 %v1077
      %v1122 = vunpack.c.l.b16 %v1078
      %v1123 = vunpack.c.l.b16 %v1079
      %v1124 = vunpack.c.h.b16 %v1079
      %v1125 = vunpack.c.l.b16 %v1080
      %v1126 = vunpack.c.l.b16 %v1081
      %v1127 = vunpack.c.h.b16 %v1081
      %v1128 = vunpack.c.l.b16 %v1082
      %v1129 = vunpack.c.l.b16 %v1083
      %v1130 = vunpack.c.h.b16 %v1083
      %v1131 = vunpack.c.l.b16 %v1084
      %v1132 = vunpack.c.l.b16 %v1085
      %v1133 = vunpack.c.h.b16 %v1085
      %v1134 = vunpack.c.l.b16 %v1086
      %v1135 = vunpack.c.l.b16 %v1087
      %v1136 = vunpack.c.h.b16 %v1087
      %v1137 = vunpack.c.l.b16 %v1088
      %v1138 = vunpack.c.l.b16 %v1089
      %v1139 = vunpack.c.h.b16 %v1089
      %v1140 = vunpack.c.l.b16 %v1090
      %v1141 = vpack.c.b16 %v1140, %v1139
      %v1143 = vshrl.u32 %v1141, 16
      %v1145 = vrot.slane %v1143, 3
      %v1146 = vshll.u32 %v1141, 16
      %v1148 = vrot.slane %v1146, 4
      %v1149 = vor.u32 %v1145, %v1148
      %v1151 = vpack.c.b16 %v1112, %v1111
      %v1152 = vpack.c.b16 %v1114, %v1113
      %v1153 = vpack.c.b16 %v1116, %v1115
      %v1154 = vpack.c.b16 %v1118, %v1117
      %v1155 = vpack.c.b16 %v1120, %v1119
      %v1156 = vpack.c.b16 %v1122, %v1121
      %v1157 = vpack.c.b16 %v1124, %v1123
      %v1158 = vpack.c.b16 %v1126, %v1125
      %v1159 = vpack.c.b16 %v1128, %v1127
      %v1160 = vpack.c.b16 %v1130, %v1129
      %v1161 = vpack.c.b16 %v1132, %v1131
      %v1162 = vpack.c.b16 %v1134, %v1133
      %v1163 = vpack.c.b16 %v1136, %v1135
      %vm1164 = vsmask.f32 4352
      %v1166 = vshrl.u32 %v1151, 16
      %v1168 = vrot.slane %v1166, 3
      %v1169 = vshll.u32 %v1151, 16
      %v1171 = vrot.slane %v1169, 4
      %v1172 = vor.u32 %v1168, %v1171
      %v1174 = vshrl.u32 %v1152, 16
      %v1176 = vrot.slane %v1174, 3
      %v1177 = vshll.u32 %v1152, 16
      %v1179 = vrot.slane %v1177, 4
      %v1180 = vor.u32 %v1176, %v1179
      %v1181 = vsel %vm1164, %v1172, %v1180
      %v1183 = vshrl.u32 %v1153, 16
      %v1185 = vrot.slane %v1183, 3
      %v1186 = vshll.u32 %v1153, 16
      %v1188 = vrot.slane %v1186, 4
      %v1189 = vor.u32 %v1185, %v1188
      %v1190 = vsel %vm1164, %v1180, %v1189
      %v1192 = vshrl.u32 %v1154, 16
      %v1194 = vrot.slane %v1192, 3
      %v1195 = vshll.u32 %v1154, 16
      %v1197 = vrot.slane %v1195, 4
      %v1198 = vor.u32 %v1194, %v1197
      %v1199 = vsel %vm1164, %v1189, %v1198
      %v1201 = vshrl.u32 %v1155, 16
      %v1203 = vrot.slane %v1201, 3
      %v1204 = vshll.u32 %v1155, 16
      %v1206 = vrot.slane %v1204, 4
      %v1207 = vor.u32 %v1203, %v1206
      %v1208 = vsel %vm1164, %v1198, %v1207
      %v1210 = vshrl.u32 %v1156, 16
      %v1212 = vrot.slane %v1210, 3
      %v1213 = vshll.u32 %v1156, 16
      %v1215 = vrot.slane %v1213, 4
      %v1216 = vor.u32 %v1212, %v1215
      %v1217 = vsel %vm1164, %v1207, %v1216
      %v1219 = vshrl.u32 %v1157, 16
      %v1221 = vrot.slane %v1219, 3
      %v1222 = vshll.u32 %v1157, 16
      %v1224 = vrot.slane %v1222, 4
      %v1225 = vor.u32 %v1221, %v1224
      %v1226 = vsel %vm1164, %v1216, %v1225
      %v1228 = vshrl.u32 %v1158, 16
      %v1230 = vrot.slane %v1228, 3
      %v1231 = vshll.u32 %v1158, 16
      %v1233 = vrot.slane %v1231, 4
      %v1234 = vor.u32 %v1230, %v1233
      %v1235 = vsel %vm1164, %v1225, %v1234
      %v1237 = vshrl.u32 %v1159, 16
      %v1239 = vrot.slane %v1237, 3
      %v1240 = vshll.u32 %v1159, 16
      %v1242 = vrot.slane %v1240, 4
      %v1243 = vor.u32 %v1239, %v1242
      %v1244 = vsel %vm1164, %v1234, %v1243
      %v1246 = vshrl.u32 %v1160, 16
      %v1248 = vrot.slane %v1246, 3
      %v1249 = vshll.u32 %v1160, 16
      %v1251 = vrot.slane %v1249, 4
      %v1252 = vor.u32 %v1248, %v1251
      %v1253 = vsel %vm1164, %v1243, %v1252
      %v1255 = vshrl.u32 %v1161, 16
      %v1257 = vrot.slane %v1255, 3
      %v1258 = vshll.u32 %v1161, 16
      %v1260 = vrot.slane %v1258, 4
      %v1261 = vor.u32 %v1257, %v1260
      %v1262 = vsel %vm1164, %v1252, %v1261
      %v1264 = vshrl.u32 %v1162, 16
      %v1266 = vrot.slane %v1264, 3
      %v1267 = vshll.u32 %v1162, 16
      %v1269 = vrot.slane %v1267, 4
      %v1270 = vor.u32 %v1266, %v1269
      %v1271 = vsel %vm1164, %v1261, %v1270
      %v1273 = vshrl.u32 %v1163, 16
      %v1275 = vrot.slane %v1273, 3
      %v1276 = vshll.u32 %v1163, 16
      %v1278 = vrot.slane %v1276, 4
      %v1279 = vor.u32 %v1275, %v1278
      %v1280 = vsel %vm1164, %v1270, %v1279
      %vm1282 = vcmask 1044480
      %vm1283 = vmand %vm1282, %vm1164
      %v1284 = vsel %vm1283, %v1149, %v1172
      %v1285 = vld [vmem:[%s5] sm:$0xf]
      %v1286 = vld [vmem:[%s5 + $0x4] sm:$0xf]
      %v1287 = vld [vmem:[%s5 + $0x8] sm:$0xf]
      %v1288 = vld [vmem:[%s5 + $0xc] sm:$0xf]
      %v1289 = vld [vmem:[%s5 + $0x10] sm:$0xf]
      %v1290 = vld [vmem:[%s5 + $0x14] sm:$0xf]
      %v1291 = vld [vmem:[%s5 + $0x18] sm:$0xf]
      %v1292 = vld [vmem:[%s5 + $0x1c] sm:$0xf]
      %v1293 = vld [vmem:[%s5 + $0x20] sm:$0xf]
      %v1294 = vld [vmem:[%s5 + $0x24] sm:$0xf]
      %v1295 = vld [vmem:[%s5 + $0x28] sm:$0xf]
      %v1296 = vld [vmem:[%s5 + $0x2c] sm:$0xf]
      %v1297 = vld [vmem:[%s5 + $0x30] sm:$0xf]
      %v1298 = vld [vmem:[%s5 + $0x34] sm:$0xf]
      %v1299 = vld [vmem:[%s5 + $0x38] sm:$0xf]
      %v1300 = vld [vmem:[%s5 + $0x3c] sm:$0xf]
      %v1301 = vpack.c.b16 %v1140, %v1140
      %v1302 = vpack.c.b16 %v1111, %v1111
      %v1303 = vpack.c.b16 %v1113, %v1112
      %v1304 = vpack.c.b16 %v1115, %v1114
      %v1305 = vpack.c.b16 %v1117, %v1116
      %v1306 = vpack.c.b16 %v1119, %v1118
      %v1307 = vpack.c.b16 %v1121, %v1120
      %v1308 = vpack.c.b16 %v1123, %v1122
      %v1309 = vpack.c.b16 %v1125, %v1124
      %v1310 = vpack.c.b16 %v1127, %v1126
      %v1311 = vpack.c.b16 %v1129, %v1128
      %v1312 = vpack.c.b16 %v1131, %v1130
      %v1313 = vpack.c.b16 %v1133, %v1132
      %v1314 = vpack.c.b16 %v1135, %v1134
      %vm1315 = vcmask 1043456
      %v1318 = vsel %vm1315, %v1301, %v1302
      %s1319 = scalar_lea.vmem %s5, 64
      %v1320 = vld [vmem:[%s1319] sm:$0xf]
      %v1321 = vld [vmem:[%s1319 + $0x4] sm:$0xf]
      %v1322 = vld [vmem:[%s1319 + $0x8] sm:$0xf]
      %v1323 = vld [vmem:[%s1319 + $0xc] sm:$0xf]
      %v1324 = vld [vmem:[%s1319 + $0x10] sm:$0xf]
      %v1325 = vld [vmem:[%s1319 + $0x14] sm:$0xf]
      %v1326 = vld [vmem:[%s1319 + $0x18] sm:$0xf]
      %v1327 = vld [vmem:[%s1319 + $0x1c] sm:$0xf]
      %v1328 = vld [vmem:[%s1319 + $0x20] sm:$0xf]
      %v1329 = vld [vmem:[%s1319 + $0x24] sm:$0xf]
      %v1330 = vld [vmem:[%s1319 + $0x28] sm:$0xf]
      %v1331 = vld [vmem:[%s1319 + $0x2c] sm:$0xf]
      %v1332 = vld [vmem:[%s1319 + $0x30] sm:$0xf]
      %v1333 = vld [vmem:[%s1319 + $0x34] sm:$0xf]
      %v1334 = vld [vmem:[%s1319 + $0x38] sm:$0xf]
      %v1335 = vld [vmem:[%s1319 + $0x3c] sm:$0xf]
      %vm1337 = vcmask 1043456
      %v1338 = vrot.slane %v1318, 4
      %v1339 = vrot.slane %v1303, 4
      %v1340 = vsel %vm1337, %v1338, %v1339
      %v1341 = vrot.slane %v1304, 4
      %v1342 = vsel %vm1337, %v1339, %v1341
      %v1343 = vrot.slane %v1305, 4
      %v1344 = vsel %vm1337, %v1341, %v1343
      %v1345 = vrot.slane %v1306, 4
      %v1346 = vsel %vm1337, %v1343, %v1345
      %v1347 = vrot.slane %v1307, 4
      %v1348 = vsel %vm1337, %v1345, %v1347
      %v1349 = vrot.slane %v1308, 4
      %v1350 = vsel %vm1337, %v1347, %v1349
      %v1351 = vrot.slane %v1309, 4
      %v1352 = vsel %vm1337, %v1349, %v1351
      %v1353 = vrot.slane %v1310, 4
      %v1354 = vsel %vm1337, %v1351, %v1353
      %v1355 = vrot.slane %v1311, 4
      %v1356 = vsel %vm1337, %v1353, %v1355
      %v1357 = vrot.slane %v1312, 4
      %v1358 = vsel %vm1337, %v1355, %v1357
      %v1359 = vrot.slane %v1313, 4
      %v1360 = vsel %vm1337, %v1357, %v1359
      %v1361 = vrot.slane %v1314, 4
      %v1362 = vsel %vm1337, %v1359, %v1361
      %v1391 = vunpack.c.l.b16 %v1320
      %v1392 = vunpack.c.l.b16 %v1321
      %v1393 = vunpack.c.l.b16 %v1322
      %v1394 = vunpack.c.l.b16 %v1323
      %v1395 = vunpack.c.l.b16 %v1324
      %v1396 = vunpack.c.l.b16 %v1325
      %v1397 = vunpack.c.l.b16 %v1326
      %v1398 = vunpack.c.l.b16 %v1327
      %v1399 = vunpack.c.l.b16 %v1328
      %v1400 = vunpack.c.l.b16 %v1329
      %v1401 = vunpack.c.l.b16 %v1330
      %v1402 = vunpack.c.l.b16 %v1331
      %v1403 = vunpack.c.l.b16 %v1332
      %v1404 = vunpack.c.l.b16 %v1333
      %v1405 = vunpack.c.l.b16 %v1334
      %v1406 = vunpack.c.l.b16 %v1335
      %v1407 = vpack.c.b16 %v1392, %v1391
      %v1408 = vpack.c.b16 %v1394, %v1393
      %v1409 = vpack.c.b16 %v1396, %v1395
      %v1410 = vpack.c.b16 %v1398, %v1397
      %v1411 = vpack.c.b16 %v1400, %v1399
      %v1412 = vpack.c.b16 %v1402, %v1401
      %v1413 = vpack.c.b16 %v1404, %v1403
      %v1414 = vpack.c.b16 %v1406, %v1405
      %1423 = vmatprep.subr.bf16.mxu0 0
      %1424 = vmatpush1.bf16.msra.mxu0 %v1414
      %1425 = vmatprep.subr.bf16.mxu0 0
      %1426 = vmatpush1.bf16.msra.mxu0 %v1413
      %1427 = vmatprep.subr.bf16.mxu0 0
      %1428 = vmatpush1.bf16.msra.mxu0 %v1412
      %1429 = vmatprep.subr.bf16.mxu0 0
      %1430 = vmatpush1.bf16.msra.mxu0 %v1411
      %1431 = vmatprep.subr.bf16.mxu0 0
      %1432 = vmatpush1.bf16.msra.mxu0 %v1410
      %1433 = vmatprep.subr.bf16.mxu0 0
      %1434 = vmatpush1.bf16.msra.mxu0 %v1409
      %1435 = vmatprep.subr.bf16.mxu0 0
      %1436 = vmatpush1.bf16.msra.mxu0 %v1408
      %1437 = vmatprep.subr.bf16.mxu0 0
      %1438 = vmatpush1.bf16.msra.mxu0 %v1407
      %1439 = vmatprep.subr.bf16.mxu0 0
      %1440 = vmatpush2.bf16.msra.mxu0 0
      %1441 = vmatprep.subr.bf16.mxu0 0
      %1442 = vmatpush2.bf16.msra.mxu0 0
      %1443 = vmatprep.subr.bf16.mxu0 0
      %1444 = vmatpush2.bf16.msra.mxu0 0
      %1445 = vmatprep.subr.bf16.mxu0 0
      %1446 = vmatpush2.bf16.msra.mxu0 0
      %1447 = vmatprep.subr.bf16.mxu0 0
      %1448 = vmatpush2.bf16.msra.mxu0 0
      %1449 = vmatprep.subr.bf16.mxu0 0
      %1450 = vmatpush2.bf16.msra.mxu0 0
      %1451 = vmatprep.subr.bf16.mxu0 0
      %1452 = vmatpush2.bf16.msra.mxu0 0
      %1453 = vmatprep.subr.bf16.mxu0 0
      %1454 = vmatpush2.bf16.msra.mxu0 0
      %1455 = vmatprep.mubr.bf16.mxu0 0
      %1456 = vmatmul.mubr.bf16.gmra.mxu0 %v1340
      %v1457 = vpop.f32.mrf.mxu0
      %v1458 = vadd.f32 0.0, %v1457
      %v1459 = vpop.f32.mrf.mxu0
      %v1460 = vpop.f32.mrf.mxu0
      %v1461 = vadd.f32 0.0, %v1460
      %v1462 = vpop.f32.mrf.mxu0
      %1463 = vmatprep.mubr.bf16.mxu0 0
      %1464 = vmatmul.mubr.bf16.gmra.mxu0 %v1342
      %v1465 = vpop.f32.mrf.mxu0
      %v1466 = vadd.f32 0.0, %v1465
      %v1467 = vpop.f32.mrf.mxu0
      %v1468 = vpop.f32.mrf.mxu0
      %v1469 = vadd.f32 0.0, %v1468
      %v1470 = vpop.f32.mrf.mxu0
      %1471 = vmatprep.mubr.bf16.mxu0 0
      %1472 = vmatmul.mubr.bf16.gmra.mxu0 %v1344
      %v1473 = vpop.f32.mrf.mxu0
      %v1474 = vadd.f32 0.0, %v1473
      %v1475 = vpop.f32.mrf.mxu0
      %v1476 = vpop.f32.mrf.mxu0
      %v1477 = vadd.f32 0.0, %v1476
      %v1478 = vpop.f32.mrf.mxu0
      %1479 = vmatprep.mubr.bf16.mxu0 0
      %1480 = vmatmul.mubr.bf16.gmra.mxu0 %v1346
      %v1481 = vpop.f32.mrf.mxu0
      %v1482 = vadd.f32 0.0, %v1481
      %v1483 = vpop.f32.mrf.mxu0
      %v1484 = vpop.f32.mrf.mxu0
      %v1485 = vadd.f32 0.0, %v1484
      %v1486 = vpop.f32.mrf.mxu0
      %1487 = vmatprep.mubr.bf16.mxu0 0
      %1488 = vmatmul.mubr.bf16.gmra.mxu0 %v1348
      %v1489 = vpop.f32.mrf.mxu0
      %v1490 = vadd.f32 0.0, %v1489
      %v1491 = vpop.f32.mrf.mxu0
      %v1492 = vpop.f32.mrf.mxu0
      %v1493 = vadd.f32 0.0, %v1492
      %v1494 = vpop.f32.mrf.mxu0
      %1495 = vmatprep.mubr.bf16.mxu0 0
      %1496 = vmatmul.mubr.bf16.gmra.mxu0 %v1350
      %v1497 = vpop.f32.mrf.mxu0
      %v1498 = vadd.f32 0.0, %v1497
      %v1499 = vpop.f32.mrf.mxu0
      %v1500 = vpop.f32.mrf.mxu0
      %v1501 = vadd.f32 0.0, %v1500
      %v1502 = vpop.f32.mrf.mxu0
      %1503 = vmatprep.mubr.bf16.mxu0 0
      %1504 = vmatmul.mubr.bf16.gmra.mxu0 %v1352
      %v1505 = vpop.f32.mrf.mxu0
      %v1506 = vadd.f32 0.0, %v1505
      %v1507 = vpop.f32.mrf.mxu0
      %v1508 = vpop.f32.mrf.mxu0
      %v1509 = vadd.f32 0.0, %v1508
      %v1510 = vpop.f32.mrf.mxu0
      %1511 = vmatprep.mubr.bf16.mxu0 0
      %1512 = vmatmul.mubr.bf16.gmra.mxu0 %v1354
      %v1513 = vpop.f32.mrf.mxu0
      %v1514 = vadd.f32 0.0, %v1513
      %v1515 = vpop.f32.mrf.mxu0
      %v1516 = vpop.f32.mrf.mxu0
      %v1517 = vadd.f32 0.0, %v1516
      %v1518 = vpop.f32.mrf.mxu0
      %1519 = vmatprep.mubr.bf16.mxu0 0
      %1520 = vmatmul.mubr.bf16.gmra.mxu0 %v1356
      %v1521 = vpop.f32.mrf.mxu0
      %v1522 = vadd.f32 0.0, %v1521
      %v1523 = vpop.f32.mrf.mxu0
      %v1524 = vpop.f32.mrf.mxu0
      %v1525 = vadd.f32 0.0, %v1524
      %v1526 = vpop.f32.mrf.mxu0
      %1527 = vmatprep.mubr.bf16.mxu0 0
      %1528 = vmatmul.mubr.bf16.gmra.mxu0 %v1358
      %v1529 = vpop.f32.mrf.mxu0
      %v1530 = vadd.f32 0.0, %v1529
      %v1531 = vpop.f32.mrf.mxu0
      %v1532 = vpop.f32.mrf.mxu0
      %v1533 = vadd.f32 0.0, %v1532
      %v1534 = vpop.f32.mrf.mxu0
      %1535 = vmatprep.mubr.bf16.mxu0 0
      %1536 = vmatmul.mubr.bf16.gmra.mxu0 %v1360
      %v1537 = vpop.f32.mrf.mxu0
      %v1538 = vadd.f32 0.0, %v1537
      %v1539 = vpop.f32.mrf.mxu0
      %v1540 = vpop.f32.mrf.mxu0
      %v1541 = vadd.f32 0.0, %v1540
      %v1542 = vpop.f32.mrf.mxu0
      %1543 = vmatprep.mubr.bf16.mxu0 0
      %1544 = vmatmul.mubr.bf16.gmra.mxu0 %v1362
      %v1545 = vpop.f32.mrf.mxu0
      %v1546 = vadd.f32 0.0, %v1545
      %v1547 = vpop.f32.mrf.mxu0
      %v1548 = vpop.f32.mrf.mxu0
      %v1549 = vadd.f32 0.0, %v1548
      %v1550 = vpop.f32.mrf.mxu0
      %1551 = vdwg.mxu0
      %v1553 = vrot.slane %v1284, 4
      %v1554 = vrot.slane %v1181, 4
      %v1555 = vsel %vm1337, %v1553, %v1554
      %v1556 = vrot.slane %v1190, 4
      %v1557 = vsel %vm1337, %v1554, %v1556
      %v1558 = vrot.slane %v1199, 4
      %v1559 = vsel %vm1337, %v1556, %v1558
      %v1560 = vrot.slane %v1208, 4
      %v1561 = vsel %vm1337, %v1558, %v1560
      %v1562 = vrot.slane %v1217, 4
      %v1563 = vsel %vm1337, %v1560, %v1562
      %v1564 = vrot.slane %v1226, 4
      %v1565 = vsel %vm1337, %v1562, %v1564
      %v1566 = vrot.slane %v1235, 4
      %v1567 = vsel %vm1337, %v1564, %v1566
      %v1568 = vrot.slane %v1244, 4
      %v1569 = vsel %vm1337, %v1566, %v1568
      %v1570 = vrot.slane %v1253, 4
      %v1571 = vsel %vm1337, %v1568, %v1570
      %v1572 = vrot.slane %v1262, 4
      %v1573 = vsel %vm1337, %v1570, %v1572
      %v1574 = vrot.slane %v1271, 4
      %v1575 = vsel %vm1337, %v1572, %v1574
      %v1576 = vrot.slane %v1280, 4
      %v1577 = vsel %vm1337, %v1574, %v1576
      %v1606 = vunpack.c.l.b16 %v1285
      %v1607 = vunpack.c.l.b16 %v1286
      %v1608 = vunpack.c.l.b16 %v1287
      %v1609 = vunpack.c.l.b16 %v1288
      %v1610 = vunpack.c.l.b16 %v1289
      %v1611 = vunpack.c.l.b16 %v1290
      %v1612 = vunpack.c.l.b16 %v1291
      %v1613 = vunpack.c.l.b16 %v1292
      %v1614 = vunpack.c.l.b16 %v1293
      %v1615 = vunpack.c.l.b16 %v1294
      %v1616 = vunpack.c.l.b16 %v1295
      %v1617 = vunpack.c.l.b16 %v1296
      %v1618 = vunpack.c.l.b16 %v1297
      %v1619 = vunpack.c.l.b16 %v1298
      %v1620 = vunpack.c.l.b16 %v1299
      %v1621 = vunpack.c.l.b16 %v1300
      %v1622 = vpack.c.b16 %v1607, %v1606
      %v1623 = vpack.c.b16 %v1609, %v1608
      %v1624 = vpack.c.b16 %v1611, %v1610
      %v1625 = vpack.c.b16 %v1613, %v1612
      %v1626 = vpack.c.b16 %v1615, %v1614
      %v1627 = vpack.c.b16 %v1617, %v1616
      %v1628 = vpack.c.b16 %v1619, %v1618
      %v1629 = vpack.c.b16 %v1621, %v1620
      %1638 = vmatprep.subr.bf16.mxu0 0
      %1639 = vmatpush1.bf16.msra.mxu0 %v1629
      %1640 = vmatprep.subr.bf16.mxu0 0
      %1641 = vmatpush1.bf16.msra.mxu0 %v1628
      %1642 = vmatprep.subr.bf16.mxu0 0
      %1643 = vmatpush1.bf16.msra.mxu0 %v1627
      %1644 = vmatprep.subr.bf16.mxu0 0
      %1645 = vmatpush1.bf16.msra.mxu0 %v1626
      %1646 = vmatprep.subr.bf16.mxu0 0
      %1647 = vmatpush1.bf16.msra.mxu0 %v1625
      %1648 = vmatprep.subr.bf16.mxu0 0
      %1649 = vmatpush1.bf16.msra.mxu0 %v1624
      %1650 = vmatprep.subr.bf16.mxu0 0
      %1651 = vmatpush1.bf16.msra.mxu0 %v1623
      %1652 = vmatprep.subr.bf16.mxu0 0
      %1653 = vmatpush1.bf16.msra.mxu0 %v1622
      %1654 = vmatprep.subr.bf16.mxu0 0
      %1655 = vmatpush2.bf16.msra.mxu0 0
      %1656 = vmatprep.subr.bf16.mxu0 0
      %1657 = vmatpush2.bf16.msra.mxu0 0
      %1658 = vmatprep.subr.bf16.mxu0 0
      %1659 = vmatpush2.bf16.msra.mxu0 0
      %1660 = vmatprep.subr.bf16.mxu0 0
      %1661 = vmatpush2.bf16.msra.mxu0 0
      %1662 = vmatprep.subr.bf16.mxu0 0
      %1663 = vmatpush2.bf16.msra.mxu0 0
      %1664 = vmatprep.subr.bf16.mxu0 0
      %1665 = vmatpush2.bf16.msra.mxu0 0
      %1666 = vmatprep.subr.bf16.mxu0 0
      %1667 = vmatpush2.bf16.msra.mxu0 0
      %1668 = vmatprep.subr.bf16.mxu0 0
      %1669 = vmatpush2.bf16.msra.mxu0 0
      %1670 = vmatprep.mubr.bf16.mxu0 0
      %1671 = vmatmul.mubr.bf16.gmra.mxu0 %v1555
      %v1672 = vpop.f32.mrf.mxu0
      %v1673 = vadd.f32 %v1458, %v1672
      %v1674 = vpop.f32.mrf.mxu0
      %v1675 = vpop.f32.mrf.mxu0
      %v1676 = vadd.f32 %v1461, %v1675
      %v1677 = vpop.f32.mrf.mxu0
      %1678 = vmatprep.mubr.bf16.mxu0 0
      %1679 = vmatmul.mubr.bf16.gmra.mxu0 %v1557
      %v1680 = vpop.f32.mrf.mxu0
      %v1681 = vadd.f32 %v1466, %v1680
      %v1682 = vpop.f32.mrf.mxu0
      %v1683 = vpop.f32.mrf.mxu0
      %v1684 = vadd.f32 %v1469, %v1683
      %v1685 = vpop.f32.mrf.mxu0
      %1686 = vmatprep.mubr.bf16.mxu0 0
      %1687 = vmatmul.mubr.bf16.gmra.mxu0 %v1559
      %v1688 = vpop.f32.mrf.mxu0
      %v1689 = vadd.f32 %v1474, %v1688
      %v1690 = vpop.f32.mrf.mxu0
      %v1691 = vpop.f32.mrf.mxu0
      %v1692 = vadd.f32 %v1477, %v1691
      %v1693 = vpop.f32.mrf.mxu0
      %1694 = vmatprep.mubr.bf16.mxu0 0
      %1695 = vmatmul.mubr.bf16.gmra.mxu0 %v1561
      %v1696 = vpop.f32.mrf.mxu0
      %v1697 = vadd.f32 %v1482, %v1696
      %v1698 = vpop.f32.mrf.mxu0
      %v1699 = vpop.f32.mrf.mxu0
      %v1700 = vadd.f32 %v1485, %v1699
      %v1701 = vpop.f32.mrf.mxu0
      %1702 = vmatprep.mubr.bf16.mxu0 0
      %1703 = vmatmul.mubr.bf16.gmra.mxu0 %v1563
      %v1704 = vpop.f32.mrf.mxu0
      %v1705 = vadd.f32 %v1490, %v1704
      %v1706 = vpop.f32.mrf.mxu0
      %v1707 = vpop.f32.mrf.mxu0
      %v1708 = vadd.f32 %v1493, %v1707
      %v1709 = vpop.f32.mrf.mxu0
      %1710 = vmatprep.mubr.bf16.mxu0 0
      %1711 = vmatmul.mubr.bf16.gmra.mxu0 %v1565
      %v1712 = vpop.f32.mrf.mxu0
      %v1713 = vadd.f32 %v1498, %v1712
      %v1714 = vpop.f32.mrf.mxu0
      %v1715 = vpop.f32.mrf.mxu0
      %v1716 = vadd.f32 %v1501, %v1715
      %v1717 = vpop.f32.mrf.mxu0
      %1718 = vmatprep.mubr.bf16.mxu0 0
      %1719 = vmatmul.mubr.bf16.gmra.mxu0 %v1567
      %v1720 = vpop.f32.mrf.mxu0
      %v1721 = vadd.f32 %v1506, %v1720
      %v1722 = vpop.f32.mrf.mxu0
      %v1723 = vpop.f32.mrf.mxu0
      %v1724 = vadd.f32 %v1509, %v1723
      %v1725 = vpop.f32.mrf.mxu0
      %1726 = vmatprep.mubr.bf16.mxu0 0
      %1727 = vmatmul.mubr.bf16.gmra.mxu0 %v1569
      %v1728 = vpop.f32.mrf.mxu0
      %v1729 = vadd.f32 %v1514, %v1728
      %v1730 = vpop.f32.mrf.mxu0
      %v1731 = vpop.f32.mrf.mxu0
      %v1732 = vadd.f32 %v1517, %v1731
      %v1733 = vpop.f32.mrf.mxu0
      %1734 = vmatprep.mubr.bf16.mxu0 0
      %1735 = vmatmul.mubr.bf16.gmra.mxu0 %v1571
      %v1736 = vpop.f32.mrf.mxu0
      %v1737 = vadd.f32 %v1522, %v1736
      %v1738 = vpop.f32.mrf.mxu0
      %v1739 = vpop.f32.mrf.mxu0
      %v1740 = vadd.f32 %v1525, %v1739
      %v1741 = vpop.f32.mrf.mxu0
      %1742 = vmatprep.mubr.bf16.mxu0 0
      %1743 = vmatmul.mubr.bf16.gmra.mxu0 %v1573
      %v1744 = vpop.f32.mrf.mxu0
      %v1745 = vadd.f32 %v1530, %v1744
      %v1746 = vpop.f32.mrf.mxu0
      %v1747 = vpop.f32.mrf.mxu0
      %v1748 = vadd.f32 %v1533, %v1747
      %v1749 = vpop.f32.mrf.mxu0
      %1750 = vmatprep.mubr.bf16.mxu0 0
      %1751 = vmatmul.mubr.bf16.gmra.mxu0 %v1575
      %v1752 = vpop.f32.mrf.mxu0
      %v1753 = vadd.f32 %v1538, %v1752
      %v1754 = vpop.f32.mrf.mxu0
      %v1755 = vpop.f32.mrf.mxu0
      %v1756 = vadd.f32 %v1541, %v1755
      %v1757 = vpop.f32.mrf.mxu0
      %1758 = vmatprep.mubr.bf16.mxu0 0
      %1759 = vmatmul.mubr.bf16.gmra.mxu0 %v1577
      %v1760 = vpop.f32.mrf.mxu0
      %v1761 = vadd.f32 %v1546, %v1760
      %v1762 = vpop.f32.mrf.mxu0
      %v1763 = vpop.f32.mrf.mxu0
      %v1764 = vadd.f32 %v1549, %v1763
      %v1765 = vpop.f32.mrf.mxu0
      %1766 = vdwg.mxu0
      %v1767 = vshrl.u32 %v1301, 16
      %v1769 = vshll.u32 %v1301, 16
      %v1771 = vrot.slane %v1769, 1
      %v1772 = vor.u32 %v1767, %v1771
      %vm1774 = vsmask.f32 3328
      %v1775 = vrot.slane %v1166, 4
      %v1776 = vrot.slane %v1169, 5
      %v1777 = vor.u32 %v1775, %v1776
      %v1778 = vrot.slane %v1174, 4
      %v1779 = vrot.slane %v1177, 5
      %v1780 = vor.u32 %v1778, %v1779
      %v1781 = vsel %vm1774, %v1777, %v1780
      %v1782 = vrot.slane %v1183, 4
      %v1783 = vrot.slane %v1186, 5
      %v1784 = vor.u32 %v1782, %v1783
      %v1785 = vsel %vm1774, %v1780, %v1784
      %v1786 = vrot.slane %v1192, 4
      %v1787 = vrot.slane %v1195, 5
      %v1788 = vor.u32 %v1786, %v1787
      %v1789 = vsel %vm1774, %v1784, %v1788
      %v1790 = vrot.slane %v1201, 4
      %v1791 = vrot.slane %v1204, 5
      %v1792 = vor.u32 %v1790, %v1791
      %v1793 = vsel %vm1774, %v1788, %v1792
      %v1794 = vrot.slane %v1210, 4
      %v1795 = vrot.slane %v1213, 5
      %v1796 = vor.u32 %v1794, %v1795
      %v1797 = vsel %vm1774, %v1792, %v1796
      %v1798 = vrot.slane %v1219, 4
      %v1799 = vrot.slane %v1222, 5
      %v1800 = vor.u32 %v1798, %v1799
      %v1801 = vsel %vm1774, %v1796, %v1800
      %v1802 = vrot.slane %v1228, 4
      %v1803 = vrot.slane %v1231, 5
      %v1804 = vor.u32 %v1802, %v1803
      %v1805 = vsel %vm1774, %v1800, %v1804
      %v1806 = vrot.slane %v1237, 4
      %v1807 = vrot.slane %v1240, 5
      %v1808 = vor.u32 %v1806, %v1807
      %v1809 = vsel %vm1774, %v1804, %v1808
      %v1810 = vrot.slane %v1246, 4
      %v1811 = vrot.slane %v1249, 5
      %v1812 = vor.u32 %v1810, %v1811
      %v1813 = vsel %vm1774, %v1808, %v1812
      %v1814 = vrot.slane %v1255, 4
      %v1815 = vrot.slane %v1258, 5
      %v1816 = vor.u32 %v1814, %v1815
      %v1817 = vsel %vm1774, %v1812, %v1816
      %v1818 = vrot.slane %v1264, 4
      %v1819 = vrot.slane %v1267, 5
      %v1820 = vor.u32 %v1818, %v1819
      %v1821 = vsel %vm1774, %v1816, %v1820
      %v1822 = vrot.slane %v1273, 4
      %v1823 = vrot.slane %v1276, 5
      %v1824 = vor.u32 %v1822, %v1823
      %v1825 = vsel %vm1774, %v1820, %v1824
      %vm1827 = vmand %vm1337, %vm1774
      %v1828 = vsel %vm1827, %v1772, %v1777
      %s1829 = scalar_lea.vmem %s5, 128
      %v1830 = vld [vmem:[%s1829] sm:$0xf]
      %v1831 = vld [vmem:[%s1829 + $0x4] sm:$0xf]
      %v1832 = vld [vmem:[%s1829 + $0x8] sm:$0xf]
      %v1833 = vld [vmem:[%s1829 + $0xc] sm:$0xf]
      %v1834 = vld [vmem:[%s1829 + $0x10] sm:$0xf]
      %v1835 = vld [vmem:[%s1829 + $0x14] sm:$0xf]
      %v1836 = vld [vmem:[%s1829 + $0x18] sm:$0xf]
      %v1837 = vld [vmem:[%s1829 + $0x1c] sm:$0xf]
      %v1838 = vld [vmem:[%s1829 + $0x20] sm:$0xf]
      %v1839 = vld [vmem:[%s1829 + $0x24] sm:$0xf]
      %v1840 = vld [vmem:[%s1829 + $0x28] sm:$0xf]
      %v1841 = vld [vmem:[%s1829 + $0x2c] sm:$0xf]
      %v1842 = vld [vmem:[%s1829 + $0x30] sm:$0xf]
      %v1843 = vld [vmem:[%s1829 + $0x34] sm:$0xf]
      %v1844 = vld [vmem:[%s1829 + $0x38] sm:$0xf]
      %v1845 = vld [vmem:[%s1829 + $0x3c] sm:$0xf]
      %v1847 = vrot.slane %v1828, 4
      %v1848 = vrot.slane %v1781, 4
      %v1849 = vsel %vm1337, %v1847, %v1848
      %v1850 = vrot.slane %v1785, 4
      %v1851 = vsel %vm1337, %v1848, %v1850
      %v1852 = vrot.slane %v1789, 4
      %v1853 = vsel %vm1337, %v1850, %v1852
      %v1854 = vrot.slane %v1793, 4
      %v1855 = vsel %vm1337, %v1852, %v1854
      %v1856 = vrot.slane %v1797, 4
      %v1857 = vsel %vm1337, %v1854, %v1856
      %v1858 = vrot.slane %v1801, 4
      %v1859 = vsel %vm1337, %v1856, %v1858
      %v1860 = vrot.slane %v1805, 4
      %v1861 = vsel %vm1337, %v1858, %v1860
      %v1862 = vrot.slane %v1809, 4
      %v1863 = vsel %vm1337, %v1860, %v1862
      %v1864 = vrot.slane %v1813, 4
      %v1865 = vsel %vm1337, %v1862, %v1864
      %v1866 = vrot.slane %v1817, 4
      %v1867 = vsel %vm1337, %v1864, %v1866
      %v1868 = vrot.slane %v1821, 4
      %v1869 = vsel %vm1337, %v1866, %v1868
      %v1870 = vrot.slane %v1825, 4
      %v1871 = vsel %vm1337, %v1868, %v1870
      %v1900 = vunpack.c.l.b16 %v1830
      %v1901 = vunpack.c.l.b16 %v1831
      %v1902 = vunpack.c.l.b16 %v1832
      %v1903 = vunpack.c.l.b16 %v1833
      %v1904 = vunpack.c.l.b16 %v1834
      %v1905 = vunpack.c.l.b16 %v1835
      %v1906 = vunpack.c.l.b16 %v1836
      %v1907 = vunpack.c.l.b16 %v1837
      %v1908 = vunpack.c.l.b16 %v1838
      %v1909 = vunpack.c.l.b16 %v1839
      %v1910 = vunpack.c.l.b16 %v1840
      %v1911 = vunpack.c.l.b16 %v1841
      %v1912 = vunpack.c.l.b16 %v1842
      %v1913 = vunpack.c.l.b16 %v1843
      %v1914 = vunpack.c.l.b16 %v1844
      %v1915 = vunpack.c.l.b16 %v1845
      %v1916 = vpack.c.b16 %v1901, %v1900
      %v1917 = vpack.c.b16 %v1903, %v1902
      %v1918 = vpack.c.b16 %v1905, %v1904
      %v1919 = vpack.c.b16 %v1907, %v1906
      %v1920 = vpack.c.b16 %v1909, %v1908
      %v1921 = vpack.c.b16 %v1911, %v1910
      %v1922 = vpack.c.b16 %v1913, %v1912
      %v1923 = vpack.c.b16 %v1915, %v1914
      %1932 = vmatprep.subr.bf16.mxu0 0
      %1933 = vmatpush1.bf16.msra.mxu0 %v1923
      %1934 = vmatprep.subr.bf16.mxu0 0
      %1935 = vmatpush1.bf16.msra.mxu0 %v1922
      %1936 = vmatprep.subr.bf16.mxu0 0
      %1937 = vmatpush1.bf16.msra.mxu0 %v1921
      %1938 = vmatprep.subr.bf16.mxu0 0
      %1939 = vmatpush1.bf16.msra.mxu0 %v1920
      %1940 = vmatprep.subr.bf16.mxu0 0
      %1941 = vmatpush1.bf16.msra.mxu0 %v1919
      %1942 = vmatprep.subr.bf16.mxu0 0
      %1943 = vmatpush1.bf16.msra.mxu0 %v1918
      %1944 = vmatprep.subr.bf16.mxu0 0
      %1945 = vmatpush1.bf16.msra.mxu0 %v1917
      %1946 = vmatprep.subr.bf16.mxu0 0
      %1947 = vmatpush1.bf16.msra.mxu0 %v1916
      %1948 = vmatprep.subr.bf16.mxu0 0
      %1949 = vmatpush2.bf16.msra.mxu0 0
      %1950 = vmatprep.subr.bf16.mxu0 0
      %1951 = vmatpush2.bf16.msra.mxu0 0
      %1952 = vmatprep.subr.bf16.mxu0 0
      %1953 = vmatpush2.bf16.msra.mxu0 0
      %1954 = vmatprep.subr.bf16.mxu0 0
      %1955 = vmatpush2.bf16.msra.mxu0 0
      %1956 = vmatprep.subr.bf16.mxu0 0
      %1957 = vmatpush2.bf16.msra.mxu0 0
      %1958 = vmatprep.subr.bf16.mxu0 0
      %1959 = vmatpush2.bf16.msra.mxu0 0
      %1960 = vmatprep.subr.bf16.mxu0 0
      %1961 = vmatpush2.bf16.msra.mxu0 0
      %1962 = vmatprep.subr.bf16.mxu0 0
      %1963 = vmatpush2.bf16.msra.mxu0 0
      %1964 = vmatprep.mubr.bf16.mxu0 0
      %1965 = vmatmul.mubr.bf16.gmra.mxu0 %v1849
      %v1966 = vpop.f32.mrf.mxu0
      %v1967 = vadd.f32 0.0, %v1966
      %v1968 = vpop.f32.mrf.mxu0
      %v1969 = vpop.f32.mrf.mxu0
      %v1970 = vadd.f32 0.0, %v1969
      %v1971 = vpop.f32.mrf.mxu0
      %1972 = vmatprep.mubr.bf16.mxu0 0
      %1973 = vmatmul.mubr.bf16.gmra.mxu0 %v1851
      %v1974 = vpop.f32.mrf.mxu0
      %v1975 = vadd.f32 0.0, %v1974
      %v1976 = vpop.f32.mrf.mxu0
      %v1977 = vpop.f32.mrf.mxu0
      %v1978 = vadd.f32 0.0, %v1977
      %v1979 = vpop.f32.mrf.mxu0
      %1980 = vmatprep.mubr.bf16.mxu0 0
      %1981 = vmatmul.mubr.bf16.gmra.mxu0 %v1853
      %v1982 = vpop.f32.mrf.mxu0
      %v1983 = vadd.f32 0.0, %v1982
      %v1984 = vpop.f32.mrf.mxu0
      %v1985 = vpop.f32.mrf.mxu0
      %v1986 = vadd.f32 0.0, %v1985
      %v1987 = vpop.f32.mrf.mxu0
      %1988 = vmatprep.mubr.bf16.mxu0 0
      %1989 = vmatmul.mubr.bf16.gmra.mxu0 %v1855
      %v1990 = vpop.f32.mrf.mxu0
      %v1991 = vadd.f32 0.0, %v1990
      %v1992 = vpop.f32.mrf.mxu0
      %v1993 = vpop.f32.mrf.mxu0
      %v1994 = vadd.f32 0.0, %v1993
      %v1995 = vpop.f32.mrf.mxu0
      %1996 = vmatprep.mubr.bf16.mxu0 0
      %1997 = vmatmul.mubr.bf16.gmra.mxu0 %v1857
      %v1998 = vpop.f32.mrf.mxu0
      %v1999 = vadd.f32 0.0, %v1998
      %v2000 = vpop.f32.mrf.mxu0
      %v2001 = vpop.f32.mrf.mxu0
      %v2002 = vadd.f32 0.0, %v2001
      %v2003 = vpop.f32.mrf.mxu0
      %2004 = vmatprep.mubr.bf16.mxu0 0
      %2005 = vmatmul.mubr.bf16.gmra.mxu0 %v1859
      %v2006 = vpop.f32.mrf.mxu0
      %v2007 = vadd.f32 0.0, %v2006
      %v2008 = vpop.f32.mrf.mxu0
      %v2009 = vpop.f32.mrf.mxu0
      %v2010 = vadd.f32 0.0, %v2009
      %v2011 = vpop.f32.mrf.mxu0
      %2012 = vmatprep.mubr.bf16.mxu0 0
      %2013 = vmatmul.mubr.bf16.gmra.mxu0 %v1861
      %v2014 = vpop.f32.mrf.mxu0
      %v2015 = vadd.f32 0.0, %v2014
      %v2016 = vpop.f32.mrf.mxu0
      %v2017 = vpop.f32.mrf.mxu0
      %v2018 = vadd.f32 0.0, %v2017
      %v2019 = vpop.f32.mrf.mxu0
      %2020 = vmatprep.mubr.bf16.mxu0 0
      %2021 = vmatmul.mubr.bf16.gmra.mxu0 %v1863
      %v2022 = vpop.f32.mrf.mxu0
      %v2023 = vadd.f32 0.0, %v2022
      %v2024 = vpop.f32.mrf.mxu0
      %v2025 = vpop.f32.mrf.mxu0
      %v2026 = vadd.f32 0.0, %v2025
      %v2027 = vpop.f32.mrf.mxu0
      %2028 = vmatprep.mubr.bf16.mxu0 0
      %2029 = vmatmul.mubr.bf16.gmra.mxu0 %v1865
      %v2030 = vpop.f32.mrf.mxu0
      %v2031 = vadd.f32 0.0, %v2030
      %v2032 = vpop.f32.mrf.mxu0
      %v2033 = vpop.f32.mrf.mxu0
      %v2034 = vadd.f32 0.0, %v2033
      %v2035 = vpop.f32.mrf.mxu0
      %2036 = vmatprep.mubr.bf16.mxu0 0
      %2037 = vmatmul.mubr.bf16.gmra.mxu0 %v1867
      %v2038 = vpop.f32.mrf.mxu0
      %v2039 = vadd.f32 0.0, %v2038
      %v2040 = vpop.f32.mrf.mxu0
      %v2041 = vpop.f32.mrf.mxu0
      %v2042 = vadd.f32 0.0, %v2041
      %v2043 = vpop.f32.mrf.mxu0
      %2044 = vmatprep.mubr.bf16.mxu0 0
      %2045 = vmatmul.mubr.bf16.gmra.mxu0 %v1869
      %v2046 = vpop.f32.mrf.mxu0
      %v2047 = vadd.f32 0.0, %v2046
      %v2048 = vpop.f32.mrf.mxu0
      %v2049 = vpop.f32.mrf.mxu0
      %v2050 = vadd.f32 0.0, %v2049
      %v2051 = vpop.f32.mrf.mxu0
      %2052 = vmatprep.mubr.bf16.mxu0 0
      %2053 = vmatmul.mubr.bf16.gmra.mxu0 %v1871
      %v2054 = vpop.f32.mrf.mxu0
      %v2055 = vadd.f32 0.0, %v2054
      %v2056 = vpop.f32.mrf.mxu0
      %v2057 = vpop.f32.mrf.mxu0
      %v2058 = vadd.f32 0.0, %v2057
      %v2059 = vpop.f32.mrf.mxu0
      %2060 = vdwg.mxu0
      %v2061 = vadd.f32 %v1673, %v1967
      %v2062 = vadd.f32 %v1676, %v1970
      %v2063 = vadd.f32 %v1681, %v1975
      %v2064 = vadd.f32 %v1684, %v1978
      %v2065 = vadd.f32 %v1689, %v1983
      %v2066 = vadd.f32 %v1692, %v1986
      %v2067 = vadd.f32 %v1697, %v1991
      %v2068 = vadd.f32 %v1700, %v1994
      %v2069 = vadd.f32 %v1705, %v1999
      %v2070 = vadd.f32 %v1708, %v2002
      %v2071 = vadd.f32 %v1713, %v2007
      %v2072 = vadd.f32 %v1716, %v2010
      %v2073 = vadd.f32 %v1721, %v2015
      %v2074 = vadd.f32 %v1724, %v2018
      %v2075 = vadd.f32 %v1729, %v2023
      %v2076 = vadd.f32 %v1732, %v2026
      %v2077 = vadd.f32 %v1737, %v2031
      %v2078 = vadd.f32 %v1740, %v2034
      %v2079 = vadd.f32 %v1745, %v2039
      %v2080 = vadd.f32 %v1748, %v2042
      %v2081 = vadd.f32 %v1753, %v2047
      %v2082 = vadd.f32 %v1756, %v2050
      %v2083 = vadd.f32 %v1761, %v2055
      %v2084 = vadd.f32 %v1764, %v2058
      %v2085 = vpack.c.b16 %v1138, %v1137
      %vm2086 = vsmask.f32 256
      %v2087 = vrot.slane %v1166, 7
      %v2088 = vrot.slane %v1174, 7
      %v2089 = vor.u32 %v2088, %v1177
      %v2090 = vsel %vm2086, %v2087, %v2089
      %v2091 = vrot.slane %v1183, 7
      %v2092 = vor.u32 %v2091, %v1186
      %v2093 = vsel %vm2086, %v2088, %v2092
      %v2094 = vrot.slane %v1192, 7
      %v2095 = vor.u32 %v2094, %v1195
      %v2096 = vsel %vm2086, %v2091, %v2095
      %v2097 = vrot.slane %v1201, 7
      %v2098 = vor.u32 %v2097, %v1204
      %v2099 = vsel %vm2086, %v2094, %v2098
      %v2100 = vrot.slane %v1210, 7
      %v2101 = vor.u32 %v2100, %v1213
      %v2102 = vsel %vm2086, %v2097, %v2101
      %v2103 = vrot.slane %v1219, 7
      %v2104 = vor.u32 %v2103, %v1222
      %v2105 = vsel %vm2086, %v2100, %v2104
      %v2106 = vrot.slane %v1228, 7
      %v2107 = vor.u32 %v2106, %v1231
      %v2108 = vsel %vm2086, %v2103, %v2107
      %v2109 = vrot.slane %v1237, 7
      %v2110 = vor.u32 %v2109, %v1240
      %v2111 = vsel %vm2086, %v2106, %v2110
      %v2112 = vrot.slane %v1246, 7
      %v2113 = vor.u32 %v2112, %v1249
      %v2114 = vsel %vm2086, %v2109, %v2113
      %v2115 = vrot.slane %v1255, 7
      %v2116 = vor.u32 %v2115, %v1258
      %v2117 = vsel %vm2086, %v2112, %v2116
      %v2118 = vrot.slane %v1264, 7
      %v2119 = vor.u32 %v2118, %v1267
      %v2120 = vsel %vm2086, %v2115, %v2119
      %v2121 = vrot.slane %v1273, 7
      %v2122 = vor.u32 %v2121, %v1276
      %v2123 = vsel %vm2086, %v2118, %v2122
      %v2125 = vshrl.u32 %v2085, 16
      %v2127 = vrot.slane %v2125, 7
      %v2128 = vshll.u32 %v2085, 16
      %v2130 = vor.u32 %v2127, %v2128
      %v2131 = vsel %vm2086, %v2121, %v2130
      %s2132 = scalar_lea.vmem %s5, 192
      %v2133 = vld [vmem:[%s2132] sm:$0xf]
      %v2134 = vld [vmem:[%s2132 + $0x4] sm:$0xf]
      %v2135 = vld [vmem:[%s2132 + $0x8] sm:$0xf]
      %v2136 = vld [vmem:[%s2132 + $0xc] sm:$0xf]
      %v2137 = vld [vmem:[%s2132 + $0x10] sm:$0xf]
      %v2138 = vld [vmem:[%s2132 + $0x14] sm:$0xf]
      %v2139 = vld [vmem:[%s2132 + $0x18] sm:$0xf]
      %v2140 = vld [vmem:[%s2132 + $0x1c] sm:$0xf]
      %v2141 = vld [vmem:[%s2132 + $0x20] sm:$0xf]
      %v2142 = vld [vmem:[%s2132 + $0x24] sm:$0xf]
      %v2143 = vld [vmem:[%s2132 + $0x28] sm:$0xf]
      %v2144 = vld [vmem:[%s2132 + $0x2c] sm:$0xf]
      %v2145 = vld [vmem:[%s2132 + $0x30] sm:$0xf]
      %v2146 = vld [vmem:[%s2132 + $0x34] sm:$0xf]
      %v2147 = vld [vmem:[%s2132 + $0x38] sm:$0xf]
      %v2148 = vld [vmem:[%s2132 + $0x3c] sm:$0xf]
      %v2149 = vrot.slane %v2090, 4
      %v2150 = vrot.slane %v2093, 4
      %v2151 = vsel %vm1337, %v2149, %v2150
      %v2152 = vrot.slane %v2096, 4
      %v2153 = vsel %vm1337, %v2150, %v2152
      %v2154 = vrot.slane %v2099, 4
      %v2155 = vsel %vm1337, %v2152, %v2154
      %v2156 = vrot.slane %v2102, 4
      %v2157 = vsel %vm1337, %v2154, %v2156
      %v2158 = vrot.slane %v2105, 4
      %v2159 = vsel %vm1337, %v2156, %v2158
      %v2160 = vrot.slane %v2108, 4
      %v2161 = vsel %vm1337, %v2158, %v2160
      %v2162 = vrot.slane %v2111, 4
      %v2163 = vsel %vm1337, %v2160, %v2162
      %v2164 = vrot.slane %v2114, 4
      %v2165 = vsel %vm1337, %v2162, %v2164
      %v2166 = vrot.slane %v2117, 4
      %v2167 = vsel %vm1337, %v2164, %v2166
      %v2168 = vrot.slane %v2120, 4
      %v2169 = vsel %vm1337, %v2166, %v2168
      %v2170 = vrot.slane %v2123, 4
      %v2171 = vsel %vm1337, %v2168, %v2170
      %v2172 = vrot.slane %v2131, 4
      %v2173 = vsel %vm1337, %v2170, %v2172
      %v2202 = vunpack.c.l.b16 %v2133
      %v2203 = vunpack.c.l.b16 %v2134
      %v2204 = vunpack.c.l.b16 %v2135
      %v2205 = vunpack.c.l.b16 %v2136
      %v2206 = vunpack.c.l.b16 %v2137
      %v2207 = vunpack.c.l.b16 %v2138
      %v2208 = vunpack.c.l.b16 %v2139
      %v2209 = vunpack.c.l.b16 %v2140
      %v2210 = vunpack.c.l.b16 %v2141
      %v2211 = vunpack.c.l.b16 %v2142
      %v2212 = vunpack.c.l.b16 %v2143
      %v2213 = vunpack.c.l.b16 %v2144
      %v2214 = vunpack.c.l.b16 %v2145
      %v2215 = vunpack.c.l.b16 %v2146
      %v2216 = vunpack.c.l.b16 %v2147
      %v2217 = vunpack.c.l.b16 %v2148
      %v2218 = vpack.c.b16 %v2203, %v2202
      %v2219 = vpack.c.b16 %v2205, %v2204
      %v2220 = vpack.c.b16 %v2207, %v2206
      %v2221 = vpack.c.b16 %v2209, %v2208
      %v2222 = vpack.c.b16 %v2211, %v2210
      %v2223 = vpack.c.b16 %v2213, %v2212
      %v2224 = vpack.c.b16 %v2215, %v2214
      %v2225 = vpack.c.b16 %v2217, %v2216
      %2234 = vmatprep.subr.bf16.mxu0 0
      %2235 = vmatpush1.bf16.msra.mxu0 %v2225
      %2236 = vmatprep.subr.bf16.mxu0 0
      %2237 = vmatpush1.bf16.msra.mxu0 %v2224
      %2238 = vmatprep.subr.bf16.mxu0 0
      %2239 = vmatpush1.bf16.msra.mxu0 %v2223
      %2240 = vmatprep.subr.bf16.mxu0 0
      %2241 = vmatpush1.bf16.msra.mxu0 %v2222
      %2242 = vmatprep.subr.bf16.mxu0 0
      %2243 = vmatpush1.bf16.msra.mxu0 %v2221
      %2244 = vmatprep.subr.bf16.mxu0 0
      %2245 = vmatpush1.bf16.msra.mxu0 %v2220
      %2246 = vmatprep.subr.bf16.mxu0 0
      %2247 = vmatpush1.bf16.msra.mxu0 %v2219
      %2248 = vmatprep.subr.bf16.mxu0 0
      %2249 = vmatpush1.bf16.msra.mxu0 %v2218
      %2250 = vmatprep.subr.bf16.mxu0 0
      %2251 = vmatpush2.bf16.msra.mxu0 0
      %2252 = vmatprep.subr.bf16.mxu0 0
      %2253 = vmatpush2.bf16.msra.mxu0 0
      %2254 = vmatprep.subr.bf16.mxu0 0
      %2255 = vmatpush2.bf16.msra.mxu0 0
      %2256 = vmatprep.subr.bf16.mxu0 0
      %2257 = vmatpush2.bf16.msra.mxu0 0
      %2258 = vmatprep.subr.bf16.mxu0 0
      %2259 = vmatpush2.bf16.msra.mxu0 0
      %2260 = vmatprep.subr.bf16.mxu0 0
      %2261 = vmatpush2.bf16.msra.mxu0 0
      %2262 = vmatprep.subr.bf16.mxu0 0
      %2263 = vmatpush2.bf16.msra.mxu0 0
      %2264 = vmatprep.subr.bf16.mxu0 0
      %2265 = vmatpush2.bf16.msra.mxu0 0
      %2266 = vmatprep.mubr.bf16.mxu0 0
      %2267 = vmatmul.mubr.bf16.gmra.mxu0 %v2151
      %v2268 = vpop.f32.mrf.mxu0
      %v2269 = vadd.f32 0.0, %v2268
      %v2270 = vpop.f32.mrf.mxu0
      %v2271 = vpop.f32.mrf.mxu0
      %v2272 = vadd.f32 0.0, %v2271
      %v2273 = vpop.f32.mrf.mxu0
      %2274 = vmatprep.mubr.bf16.mxu0 0
      %2275 = vmatmul.mubr.bf16.gmra.mxu0 %v2153
      %v2276 = vpop.f32.mrf.mxu0
      %v2277 = vadd.f32 0.0, %v2276
      %v2278 = vpop.f32.mrf.mxu0
      %v2279 = vpop.f32.mrf.mxu0
      %v2280 = vadd.f32 0.0, %v2279
      %v2281 = vpop.f32.mrf.mxu0
      %2282 = vmatprep.mubr.bf16.mxu0 0
      %2283 = vmatmul.mubr.bf16.gmra.mxu0 %v2155
      %v2284 = vpop.f32.mrf.mxu0
      %v2285 = vadd.f32 0.0, %v2284
      %v2286 = vpop.f32.mrf.mxu0
      %v2287 = vpop.f32.mrf.mxu0
      %v2288 = vadd.f32 0.0, %v2287
      %v2289 = vpop.f32.mrf.mxu0
      %2290 = vmatprep.mubr.bf16.mxu0 0
      %2291 = vmatmul.mubr.bf16.gmra.mxu0 %v2157
      %v2292 = vpop.f32.mrf.mxu0
      %v2293 = vadd.f32 0.0, %v2292
      %v2294 = vpop.f32.mrf.mxu0
      %v2295 = vpop.f32.mrf.mxu0
      %v2296 = vadd.f32 0.0, %v2295
      %v2297 = vpop.f32.mrf.mxu0
      %2298 = vmatprep.mubr.bf16.mxu0 0
      %2299 = vmatmul.mubr.bf16.gmra.mxu0 %v2159
      %v2300 = vpop.f32.mrf.mxu0
      %v2301 = vadd.f32 0.0, %v2300
      %v2302 = vpop.f32.mrf.mxu0
      %v2303 = vpop.f32.mrf.mxu0
      %v2304 = vadd.f32 0.0, %v2303
      %v2305 = vpop.f32.mrf.mxu0
      %2306 = vmatprep.mubr.bf16.mxu0 0
      %2307 = vmatmul.mubr.bf16.gmra.mxu0 %v2161
      %v2308 = vpop.f32.mrf.mxu0
      %v2309 = vadd.f32 0.0, %v2308
      %v2310 = vpop.f32.mrf.mxu0
      %v2311 = vpop.f32.mrf.mxu0
      %v2312 = vadd.f32 0.0, %v2311
      %v2313 = vpop.f32.mrf.mxu0
      %2314 = vmatprep.mubr.bf16.mxu0 0
      %2315 = vmatmul.mubr.bf16.gmra.mxu0 %v2163
      %v2316 = vpop.f32.mrf.mxu0
      %v2317 = vadd.f32 0.0, %v2316
      %v2318 = vpop.f32.mrf.mxu0
      %v2319 = vpop.f32.mrf.mxu0
      %v2320 = vadd.f32 0.0, %v2319
      %v2321 = vpop.f32.mrf.mxu0
      %2322 = vmatprep.mubr.bf16.mxu0 0
      %2323 = vmatmul.mubr.bf16.gmra.mxu0 %v2165
      %v2324 = vpop.f32.mrf.mxu0
      %v2325 = vadd.f32 0.0, %v2324
      %v2326 = vpop.f32.mrf.mxu0
      %v2327 = vpop.f32.mrf.mxu0
      %v2328 = vadd.f32 0.0, %v2327
      %v2329 = vpop.f32.mrf.mxu0
      %2330 = vmatprep.mubr.bf16.mxu0 0
      %2331 = vmatmul.mubr.bf16.gmra.mxu0 %v2167
      %v2332 = vpop.f32.mrf.mxu0
      %v2333 = vadd.f32 0.0, %v2332
      %v2334 = vpop.f32.mrf.mxu0
      %v2335 = vpop.f32.mrf.mxu0
      %v2336 = vadd.f32 0.0, %v2335
      %v2337 = vpop.f32.mrf.mxu0
      %2338 = vmatprep.mubr.bf16.mxu0 0
      %2339 = vmatmul.mubr.bf16.gmra.mxu0 %v2169
      %v2340 = vpop.f32.mrf.mxu0
      %v2341 = vadd.f32 0.0, %v2340
      %v2342 = vpop.f32.mrf.mxu0
      %v2343 = vpop.f32.mrf.mxu0
      %v2344 = vadd.f32 0.0, %v2343
      %v2345 = vpop.f32.mrf.mxu0
      %2346 = vmatprep.mubr.bf16.mxu0 0
      %2347 = vmatmul.mubr.bf16.gmra.mxu0 %v2171
      %v2348 = vpop.f32.mrf.mxu0
      %v2349 = vadd.f32 0.0, %v2348
      %v2350 = vpop.f32.mrf.mxu0
      %v2351 = vpop.f32.mrf.mxu0
      %v2352 = vadd.f32 0.0, %v2351
      %v2353 = vpop.f32.mrf.mxu0
      %2354 = vmatprep.mubr.bf16.mxu0 0
      %2355 = vmatmul.mubr.bf16.gmra.mxu0 %v2173
      %v2356 = vpop.f32.mrf.mxu0
      %v2357 = vadd.f32 0.0, %v2356
      %v2358 = vpop.f32.mrf.mxu0
      %v2359 = vpop.f32.mrf.mxu0
      %v2360 = vadd.f32 0.0, %v2359
      %v2361 = vpop.f32.mrf.mxu0
      %2362 = vdwg.mxu0
      %v2363 = vadd.f32 %v2061, %v2269
      %v2364 = vadd.f32 %v2062, %v2272
      %v2365 = vadd.f32 %v2063, %v2277
      %v2366 = vadd.f32 %v2064, %v2280
      %v2367 = vadd.f32 %v2065, %v2285
      %v2368 = vadd.f32 %v2066, %v2288
      %v2369 = vadd.f32 %v2067, %v2293
      %v2370 = vadd.f32 %v2068, %v2296
      %v2371 = vadd.f32 %v2069, %v2301
      %v2372 = vadd.f32 %v2070, %v2304
      %v2373 = vadd.f32 %v2071, %v2309
      %v2374 = vadd.f32 %v2072, %v2312
      %v2375 = vadd.f32 %v2073, %v2317
      %v2376 = vadd.f32 %v2074, %v2320
      %v2377 = vadd.f32 %v2075, %v2325
      %v2378 = vadd.f32 %v2076, %v2328
      %v2379 = vadd.f32 %v2077, %v2333
      %v2380 = vadd.f32 %v2078, %v2336
      %v2381 = vadd.f32 %v2079, %v2341
      %v2382 = vadd.f32 %v2080, %v2344
      %v2383 = vadd.f32 %v2081, %v2349
      %v2384 = vadd.f32 %v2082, %v2352
      %v2385 = vadd.f32 %v2083, %v2357
      %v2386 = vadd.f32 %v2084, %v2360
      %s2387 = scalar_lea.vmem %s5, 256
      %v2388 = vld [vmem:[%s2387] sm:$0xf]
      %v2389 = vld [vmem:[%s2387 + $0x4] sm:$0xf]
      %v2390 = vld [vmem:[%s2387 + $0x8] sm:$0xf]
      %v2391 = vld [vmem:[%s2387 + $0xc] sm:$0xf]
      %v2392 = vld [vmem:[%s2387 + $0x10] sm:$0xf]
      %v2393 = vld [vmem:[%s2387 + $0x14] sm:$0xf]
      %v2394 = vld [vmem:[%s2387 + $0x18] sm:$0xf]
      %v2395 = vld [vmem:[%s2387 + $0x1c] sm:$0xf]
      %v2396 = vld [vmem:[%s2387 + $0x20] sm:$0xf]
      %v2397 = vld [vmem:[%s2387 + $0x24] sm:$0xf]
      %v2398 = vld [vmem:[%s2387 + $0x28] sm:$0xf]
      %v2399 = vld [vmem:[%s2387 + $0x2c] sm:$0xf]
      %v2400 = vld [vmem:[%s2387 + $0x30] sm:$0xf]
      %v2401 = vld [vmem:[%s2387 + $0x34] sm:$0xf]
      %v2402 = vld [vmem:[%s2387 + $0x38] sm:$0xf]
      %v2403 = vld [vmem:[%s2387 + $0x3c] sm:$0xf]
      %v2404 = vpack.c.b16 %v1137, %v1136
      %v2433 = vunpack.c.l.b16 %v2388
      %v2434 = vunpack.c.l.b16 %v2389
      %v2435 = vunpack.c.l.b16 %v2390
      %v2436 = vunpack.c.l.b16 %v2391
      %v2437 = vunpack.c.l.b16 %v2392
      %v2438 = vunpack.c.l.b16 %v2393
      %v2439 = vunpack.c.l.b16 %v2394
      %v2440 = vunpack.c.l.b16 %v2395
      %v2441 = vunpack.c.l.b16 %v2396
      %v2442 = vunpack.c.l.b16 %v2397
      %v2443 = vunpack.c.l.b16 %v2398
      %v2444 = vunpack.c.l.b16 %v2399
      %v2445 = vunpack.c.l.b16 %v2400
      %v2446 = vunpack.c.l.b16 %v2401
      %v2447 = vunpack.c.l.b16 %v2402
      %v2448 = vunpack.c.l.b16 %v2403
      %v2449 = vpack.c.b16 %v2434, %v2433
      %v2450 = vpack.c.b16 %v2436, %v2435
      %v2451 = vpack.c.b16 %v2438, %v2437
      %v2452 = vpack.c.b16 %v2440, %v2439
      %v2453 = vpack.c.b16 %v2442, %v2441
      %v2454 = vpack.c.b16 %v2444, %v2443
      %v2455 = vpack.c.b16 %v2446, %v2445
      %v2456 = vpack.c.b16 %v2448, %v2447
      %2465 = vmatprep.subr.bf16.mxu0 0
      %2466 = vmatpush1.bf16.msra.mxu0 %v2456
      %2467 = vmatprep.subr.bf16.mxu0 0
      %2468 = vmatpush1.bf16.msra.mxu0 %v2455
      %2469 = vmatprep.subr.bf16.mxu0 0
      %2470 = vmatpush1.bf16.msra.mxu0 %v2454
      %2471 = vmatprep.subr.bf16.mxu0 0
      %2472 = vmatpush1.bf16.msra.mxu0 %v2453
      %2473 = vmatprep.subr.bf16.mxu0 0
      %2474 = vmatpush1.bf16.msra.mxu0 %v2452
      %2475 = vmatprep.subr.bf16.mxu0 0
      %2476 = vmatpush1.bf16.msra.mxu0 %v2451
      %2477 = vmatprep.subr.bf16.mxu0 0
      %2478 = vmatpush1.bf16.msra.mxu0 %v2450
      %2479 = vmatprep.subr.bf16.mxu0 0
      %2480 = vmatpush1.bf16.msra.mxu0 %v2449
      %2481 = vmatprep.subr.bf16.mxu0 0
      %2482 = vmatpush2.bf16.msra.mxu0 0
      %2483 = vmatprep.subr.bf16.mxu0 0
      %2484 = vmatpush2.bf16.msra.mxu0 0
      %2485 = vmatprep.subr.bf16.mxu0 0
      %2486 = vmatpush2.bf16.msra.mxu0 0
      %2487 = vmatprep.subr.bf16.mxu0 0
      %2488 = vmatpush2.bf16.msra.mxu0 0
      %2489 = vmatprep.subr.bf16.mxu0 0
      %2490 = vmatpush2.bf16.msra.mxu0 0
      %2491 = vmatprep.subr.bf16.mxu0 0
      %2492 = vmatpush2.bf16.msra.mxu0 0
      %2493 = vmatprep.subr.bf16.mxu0 0
      %2494 = vmatpush2.bf16.msra.mxu0 0
      %2495 = vmatprep.subr.bf16.mxu0 0
      %2496 = vmatpush2.bf16.msra.mxu0 0
      %2497 = vmatprep.mubr.bf16.mxu0 0
      %2498 = vmatmul.mubr.bf16.gmra.mxu0 %v1304
      %v2499 = vpop.f32.mrf.mxu0
      %v2500 = vadd.f32 0.0, %v2499
      %v2501 = vpop.f32.mrf.mxu0
      %v2502 = vpop.f32.mrf.mxu0
      %v2503 = vadd.f32 0.0, %v2502
      %v2504 = vpop.f32.mrf.mxu0
      %2505 = vmatprep.mubr.bf16.mxu0 0
      %2506 = vmatmul.mubr.bf16.gmra.mxu0 %v1305
      %v2507 = vpop.f32.mrf.mxu0
      %v2508 = vadd.f32 0.0, %v2507
      %v2509 = vpop.f32.mrf.mxu0
      %v2510 = vpop.f32.mrf.mxu0
      %v2511 = vadd.f32 0.0, %v2510
      %v2512 = vpop.f32.mrf.mxu0
      %2513 = vmatprep.mubr.bf16.mxu0 0
      %2514 = vmatmul.mubr.bf16.gmra.mxu0 %v1306
      %v2515 = vpop.f32.mrf.mxu0
      %v2516 = vadd.f32 0.0, %v2515
      %v2517 = vpop.f32.mrf.mxu0
      %v2518 = vpop.f32.mrf.mxu0
      %v2519 = vadd.f32 0.0, %v2518
      %v2520 = vpop.f32.mrf.mxu0
      %2521 = vmatprep.mubr.bf16.mxu0 0
      %2522 = vmatmul.mubr.bf16.gmra.mxu0 %v1307
      %v2523 = vpop.f32.mrf.mxu0
      %v2524 = vadd.f32 0.0, %v2523
      %v2525 = vpop.f32.mrf.mxu0
      %v2526 = vpop.f32.mrf.mxu0
      %v2527 = vadd.f32 0.0, %v2526
      %v2528 = vpop.f32.mrf.mxu0
      %2529 = vmatprep.mubr.bf16.mxu0 0
      %2530 = vmatmul.mubr.bf16.gmra.mxu0 %v1308
      %v2531 = vpop.f32.mrf.mxu0
      %v2532 = vadd.f32 0.0, %v2531
      %v2533 = vpop.f32.mrf.mxu0
      %v2534 = vpop.f32.mrf.mxu0
      %v2535 = vadd.f32 0.0, %v2534
      %v2536 = vpop.f32.mrf.mxu0
      %2537 = vmatprep.mubr.bf16.mxu0 0
      %2538 = vmatmul.mubr.bf16.gmra.mxu0 %v1309
      %v2539 = vpop.f32.mrf.mxu0
      %v2540 = vadd.f32 0.0, %v2539
      %v2541 = vpop.f32.mrf.mxu0
      %v2542 = vpop.f32.mrf.mxu0
      %v2543 = vadd.f32 0.0, %v2542
      %v2544 = vpop.f32.mrf.mxu0
      %2545 = vmatprep.mubr.bf16.mxu0 0
      %2546 = vmatmul.mubr.bf16.gmra.mxu0 %v1310
      %v2547 = vpop.f32.mrf.mxu0
      %v2548 = vadd.f32 0.0, %v2547
      %v2549 = vpop.f32.mrf.mxu0
      %v2550 = vpop.f32.mrf.mxu0
      %v2551 = vadd.f32 0.0, %v2550
      %v2552 = vpop.f32.mrf.mxu0
      %2553 = vmatprep.mubr.bf16.mxu0 0
      %2554 = vmatmul.mubr.bf16.gmra.mxu0 %v1311
      %v2555 = vpop.f32.mrf.mxu0
      %v2556 = vadd.f32 0.0, %v2555
      %v2557 = vpop.f32.mrf.mxu0
      %v2558 = vpop.f32.mrf.mxu0
      %v2559 = vadd.f32 0.0, %v2558
      %v2560 = vpop.f32.mrf.mxu0
      %2561 = vmatprep.mubr.bf16.mxu0 0
      %2562 = vmatmul.mubr.bf16.gmra.mxu0 %v1312
      %v2563 = vpop.f32.mrf.mxu0
      %v2564 = vadd.f32 0.0, %v2563
      %v2565 = vpop.f32.mrf.mxu0
      %v2566 = vpop.f32.mrf.mxu0
      %v2567 = vadd.f32 0.0, %v2566
      %v2568 = vpop.f32.mrf.mxu0
      %2569 = vmatprep.mubr.bf16.mxu0 0
      %2570 = vmatmul.mubr.bf16.gmra.mxu0 %v1313
      %v2571 = vpop.f32.mrf.mxu0
      %v2572 = vadd.f32 0.0, %v2571
      %v2573 = vpop.f32.mrf.mxu0
      %v2574 = vpop.f32.mrf.mxu0
      %v2575 = vadd.f32 0.0, %v2574
      %v2576 = vpop.f32.mrf.mxu0
      %2577 = vmatprep.mubr.bf16.mxu0 0
      %2578 = vmatmul.mubr.bf16.gmra.mxu0 %v1314
      %v2579 = vpop.f32.mrf.mxu0
      %v2580 = vadd.f32 0.0, %v2579
      %v2581 = vpop.f32.mrf.mxu0
      %v2582 = vpop.f32.mrf.mxu0
      %v2583 = vadd.f32 0.0, %v2582
      %v2584 = vpop.f32.mrf.mxu0
      %2585 = vmatprep.mubr.bf16.mxu0 0
      %2586 = vmatmul.mubr.bf16.gmra.mxu0 %v2404
      %v2587 = vpop.f32.mrf.mxu0
      %v2588 = vadd.f32 0.0, %v2587
      %v2589 = vpop.f32.mrf.mxu0
      %v2590 = vpop.f32.mrf.mxu0
      %v2591 = vadd.f32 0.0, %v2590
      %v2592 = vpop.f32.mrf.mxu0
      %2593 = vdwg.mxu0
      %v2594 = vadd.f32 %v2363, %v2500
      %v2595 = vadd.f32 %v2364, %v2503
      %v2596 = vadd.f32 %v2365, %v2508
      %v2597 = vadd.f32 %v2366, %v2511
      %v2598 = vadd.f32 %v2367, %v2516
      %v2599 = vadd.f32 %v2368, %v2519
      %v2600 = vadd.f32 %v2369, %v2524
      %v2601 = vadd.f32 %v2370, %v2527
      %v2602 = vadd.f32 %v2371, %v2532
      %v2603 = vadd.f32 %v2372, %v2535
      %v2604 = vadd.f32 %v2373, %v2540
      %v2605 = vadd.f32 %v2374, %v2543
      %v2606 = vadd.f32 %v2375, %v2548
      %v2607 = vadd.f32 %v2376, %v2551
      %v2608 = vadd.f32 %v2377, %v2556
      %v2609 = vadd.f32 %v2378, %v2559
      %v2610 = vadd.f32 %v2379, %v2564
      %v2611 = vadd.f32 %v2380, %v2567
      %v2612 = vadd.f32 %v2381, %v2572
      %v2613 = vadd.f32 %v2382, %v2575
      %v2614 = vadd.f32 %v2383, %v2580
      %v2615 = vadd.f32 %v2384, %v2583
      %v2616 = vadd.f32 %v2385, %v2588
      %v2617 = vadd.f32 %v2386, %v2591
      %vm2618 = vsmask.f32 7424
      %v2619 = vrot.slane %v1177, 1
      %v2620 = vor.u32 %v1174, %v2619
      %v2621 = vrot.slane %v1186, 1
      %v2622 = vsel %vm2618, %v2620, %v2621
      %v2623 = vor.u32 %v1183, %v2621
      %v2624 = vrot.slane %v1195, 1
      %v2625 = vsel %vm2618, %v2623, %v2624
      %v2626 = vor.u32 %v1192, %v2624
      %v2627 = vrot.slane %v1204, 1
      %v2628 = vsel %vm2618, %v2626, %v2627
      %v2629 = vor.u32 %v1201, %v2627
      %v2630 = vrot.slane %v1213, 1
      %v2631 = vsel %vm2618, %v2629, %v2630
      %v2632 = vor.u32 %v1210, %v2630
      %v2633 = vrot.slane %v1222, 1
      %v2634 = vsel %vm2618, %v2632, %v2633
      %v2635 = vor.u32 %v1219, %v2633
      %v2636 = vrot.slane %v1231, 1
      %v2637 = vsel %vm2618, %v2635, %v2636
      %v2638 = vor.u32 %v1228, %v2636
      %v2639 = vrot.slane %v1240, 1
      %v2640 = vsel %vm2618, %v2638, %v2639
      %v2641 = vor.u32 %v1237, %v2639
      %v2642 = vrot.slane %v1249, 1
      %v2643 = vsel %vm2618, %v2641, %v2642
      %v2644 = vor.u32 %v1246, %v2642
      %v2645 = vrot.slane %v1258, 1
      %v2646 = vsel %vm2618, %v2644, %v2645
      %v2647 = vor.u32 %v1255, %v2645
      %v2648 = vrot.slane %v1267, 1
      %v2649 = vsel %vm2618, %v2647, %v2648
      %v2650 = vor.u32 %v1264, %v2648
      %v2651 = vrot.slane %v1276, 1
      %v2652 = vsel %vm2618, %v2650, %v2651
      %v2653 = vor.u32 %v1273, %v2651
      %v2654 = vrot.slane %v2128, 1
      %v2655 = vsel %vm2618, %v2653, %v2654
      %v2656 = vor.u32 %v2125, %v2654
      %v2657 = vrot.slane %v1146, 1
      %v2658 = vsel %vm2618, %v2656, %v2657
      %s2659 = scalar_lea.vmem %s5, 320
      %v2660 = vld [vmem:[%s2659] sm:$0xf]
      %v2661 = vld [vmem:[%s2659 + $0x4] sm:$0xf]
      %v2662 = vld [vmem:[%s2659 + $0x8] sm:$0xf]
      %v2663 = vld [vmem:[%s2659 + $0xc] sm:$0xf]
      %v2664 = vld [vmem:[%s2659 + $0x10] sm:$0xf]
      %v2665 = vld [vmem:[%s2659 + $0x14] sm:$0xf]
      %v2666 = vld [vmem:[%s2659 + $0x18] sm:$0xf]
      %v2667 = vld [vmem:[%s2659 + $0x1c] sm:$0xf]
      %v2668 = vld [vmem:[%s2659 + $0x20] sm:$0xf]
      %v2669 = vld [vmem:[%s2659 + $0x24] sm:$0xf]
      %v2670 = vld [vmem:[%s2659 + $0x28] sm:$0xf]
      %v2671 = vld [vmem:[%s2659 + $0x2c] sm:$0xf]
      %v2672 = vld [vmem:[%s2659 + $0x30] sm:$0xf]
      %v2673 = vld [vmem:[%s2659 + $0x34] sm:$0xf]
      %v2674 = vld [vmem:[%s2659 + $0x38] sm:$0xf]
      %v2675 = vld [vmem:[%s2659 + $0x3c] sm:$0xf]
      %v2676 = vrot.slane %v2622, 4
      %v2677 = vrot.slane %v2625, 4
      %v2678 = vsel %vm1337, %v2676, %v2677
      %v2679 = vrot.slane %v2628, 4
      %v2680 = vsel %vm1337, %v2677, %v2679
      %v2681 = vrot.slane %v2631, 4
      %v2682 = vsel %vm1337, %v2679, %v2681
      %v2683 = vrot.slane %v2634, 4
      %v2684 = vsel %vm1337, %v2681, %v2683
      %v2685 = vrot.slane %v2637, 4
      %v2686 = vsel %vm1337, %v2683, %v2685
      %v2687 = vrot.slane %v2640, 4
      %v2688 = vsel %vm1337, %v2685, %v2687
      %v2689 = vrot.slane %v2643, 4
      %v2690 = vsel %vm1337, %v2687, %v2689
      %v2691 = vrot.slane %v2646, 4
      %v2692 = vsel %vm1337, %v2689, %v2691
      %v2693 = vrot.slane %v2649, 4
      %v2694 = vsel %vm1337, %v2691, %v2693
      %v2695 = vrot.slane %v2652, 4
      %v2696 = vsel %vm1337, %v2693, %v2695
      %v2697 = vrot.slane %v2655, 4
      %v2698 = vsel %vm1337, %v2695, %v2697
      %v2699 = vrot.slane %v2658, 4
      %v2700 = vsel %vm1337, %v2697, %v2699
      %v2729 = vunpack.c.l.b16 %v2660
      %v2730 = vunpack.c.l.b16 %v2661
      %v2731 = vunpack.c.l.b16 %v2662
      %v2732 = vunpack.c.l.b16 %v2663
      %v2733 = vunpack.c.l.b16 %v2664
      %v2734 = vunpack.c.l.b16 %v2665
      %v2735 = vunpack.c.l.b16 %v2666
      %v2736 = vunpack.c.l.b16 %v2667
      %v2737 = vunpack.c.l.b16 %v2668
      %v2738 = vunpack.c.l.b16 %v2669
      %v2739 = vunpack.c.l.b16 %v2670
      %v2740 = vunpack.c.l.b16 %v2671
      %v2741 = vunpack.c.l.b16 %v2672
      %v2742 = vunpack.c.l.b16 %v2673
      %v2743 = vunpack.c.l.b16 %v2674
      %v2744 = vunpack.c.l.b16 %v2675
      %v2745 = vpack.c.b16 %v2730, %v2729
      %v2746 = vpack.c.b16 %v2732, %v2731
      %v2747 = vpack.c.b16 %v2734, %v2733
      %v2748 = vpack.c.b16 %v2736, %v2735
      %v2749 = vpack.c.b16 %v2738, %v2737
      %v2750 = vpack.c.b16 %v2740, %v2739
      %v2751 = vpack.c.b16 %v2742, %v2741
      %v2752 = vpack.c.b16 %v2744, %v2743
      %2761 = vmatprep.subr.bf16.mxu0 0
      %2762 = vmatpush1.bf16.msra.mxu0 %v2752
      %2763 = vmatprep.subr.bf16.mxu0 0
      %2764 = vmatpush1.bf16.msra.mxu0 %v2751
      %2765 = vmatprep.subr.bf16.mxu0 0
      %2766 = vmatpush1.bf16.msra.mxu0 %v2750
      %2767 = vmatprep.subr.bf16.mxu0 0
      %2768 = vmatpush1.bf16.msra.mxu0 %v2749
      %2769 = vmatprep.subr.bf16.mxu0 0
      %2770 = vmatpush1.bf16.msra.mxu0 %v2748
      %2771 = vmatprep.subr.bf16.mxu0 0
      %2772 = vmatpush1.bf16.msra.mxu0 %v2747
      %2773 = vmatprep.subr.bf16.mxu0 0
      %2774 = vmatpush1.bf16.msra.mxu0 %v2746
      %2775 = vmatprep.subr.bf16.mxu0 0
      %2776 = vmatpush1.bf16.msra.mxu0 %v2745
      %2777 = vmatprep.subr.bf16.mxu0 0
      %2778 = vmatpush2.bf16.msra.mxu0 0
      %2779 = vmatprep.subr.bf16.mxu0 0
      %2780 = vmatpush2.bf16.msra.mxu0 0
      %2781 = vmatprep.subr.bf16.mxu0 0
      %2782 = vmatpush2.bf16.msra.mxu0 0
      %2783 = vmatprep.subr.bf16.mxu0 0
      %2784 = vmatpush2.bf16.msra.mxu0 0
      %2785 = vmatprep.subr.bf16.mxu0 0
      %2786 = vmatpush2.bf16.msra.mxu0 0
      %2787 = vmatprep.subr.bf16.mxu0 0
      %2788 = vmatpush2.bf16.msra.mxu0 0
      %2789 = vmatprep.subr.bf16.mxu0 0
      %2790 = vmatpush2.bf16.msra.mxu0 0
      %2791 = vmatprep.subr.bf16.mxu0 0
      %2792 = vmatpush2.bf16.msra.mxu0 0
      %2793 = vmatprep.mubr.bf16.mxu0 0
      %2794 = vmatmul.mubr.bf16.gmra.mxu0 %v2678
      %v2795 = vpop.f32.mrf.mxu0
      %v2796 = vadd.f32 0.0, %v2795
      %v2797 = vpop.f32.mrf.mxu0
      %v2798 = vpop.f32.mrf.mxu0
      %v2799 = vadd.f32 0.0, %v2798
      %v2800 = vpop.f32.mrf.mxu0
      %2801 = vmatprep.mubr.bf16.mxu0 0
      %2802 = vmatmul.mubr.bf16.gmra.mxu0 %v2680
      %v2803 = vpop.f32.mrf.mxu0
      %v2804 = vadd.f32 0.0, %v2803
      %v2805 = vpop.f32.mrf.mxu0
      %v2806 = vpop.f32.mrf.mxu0
      %v2807 = vadd.f32 0.0, %v2806
      %v2808 = vpop.f32.mrf.mxu0
      %2809 = vmatprep.mubr.bf16.mxu0 0
      %2810 = vmatmul.mubr.bf16.gmra.mxu0 %v2682
      %v2811 = vpop.f32.mrf.mxu0
      %v2812 = vadd.f32 0.0, %v2811
      %v2813 = vpop.f32.mrf.mxu0
      %v2814 = vpop.f32.mrf.mxu0
      %v2815 = vadd.f32 0.0, %v2814
      %v2816 = vpop.f32.mrf.mxu0
      %2817 = vmatprep.mubr.bf16.mxu0 0
      %2818 = vmatmul.mubr.bf16.gmra.mxu0 %v2684
      %v2819 = vpop.f32.mrf.mxu0
      %v2820 = vadd.f32 0.0, %v2819
      %v2821 = vpop.f32.mrf.mxu0
      %v2822 = vpop.f32.mrf.mxu0
      %v2823 = vadd.f32 0.0, %v2822
      %v2824 = vpop.f32.mrf.mxu0
      %2825 = vmatprep.mubr.bf16.mxu0 0
      %2826 = vmatmul.mubr.bf16.gmra.mxu0 %v2686
      %v2827 = vpop.f32.mrf.mxu0
      %v2828 = vadd.f32 0.0, %v2827
      %v2829 = vpop.f32.mrf.mxu0
      %v2830 = vpop.f32.mrf.mxu0
      %v2831 = vadd.f32 0.0, %v2830
      %v2832 = vpop.f32.mrf.mxu0
      %2833 = vmatprep.mubr.bf16.mxu0 0
      %2834 = vmatmul.mubr.bf16.gmra.mxu0 %v2688
      %v2835 = vpop.f32.mrf.mxu0
      %v2836 = vadd.f32 0.0, %v2835
      %v2837 = vpop.f32.mrf.mxu0
      %v2838 = vpop.f32.mrf.mxu0
      %v2839 = vadd.f32 0.0, %v2838
      %v2840 = vpop.f32.mrf.mxu0
      %2841 = vmatprep.mubr.bf16.mxu0 0
      %2842 = vmatmul.mubr.bf16.gmra.mxu0 %v2690
      %v2843 = vpop.f32.mrf.mxu0
      %v2844 = vadd.f32 0.0, %v2843
      %v2845 = vpop.f32.mrf.mxu0
      %v2846 = vpop.f32.mrf.mxu0
      %v2847 = vadd.f32 0.0, %v2846
      %v2848 = vpop.f32.mrf.mxu0
      %2849 = vmatprep.mubr.bf16.mxu0 0
      %2850 = vmatmul.mubr.bf16.gmra.mxu0 %v2692
      %v2851 = vpop.f32.mrf.mxu0
      %v2852 = vadd.f32 0.0, %v2851
      %v2853 = vpop.f32.mrf.mxu0
      %v2854 = vpop.f32.mrf.mxu0
      %v2855 = vadd.f32 0.0, %v2854
      %v2856 = vpop.f32.mrf.mxu0
      %2857 = vmatprep.mubr.bf16.mxu0 0
      %2858 = vmatmul.mubr.bf16.gmra.mxu0 %v2694
      %v2859 = vpop.f32.mrf.mxu0
      %v2860 = vadd.f32 0.0, %v2859
      %v2861 = vpop.f32.mrf.mxu0
      %v2862 = vpop.f32.mrf.mxu0
      %v2863 = vadd.f32 0.0, %v2862
      %v2864 = vpop.f32.mrf.mxu0
      %2865 = vmatprep.mubr.bf16.mxu0 0
      %2866 = vmatmul.mubr.bf16.gmra.mxu0 %v2696
      %v2867 = vpop.f32.mrf.mxu0
      %v2868 = vadd.f32 0.0, %v2867
      %v2869 = vpop.f32.mrf.mxu0
      %v2870 = vpop.f32.mrf.mxu0
      %v2871 = vadd.f32 0.0, %v2870
      %v2872 = vpop.f32.mrf.mxu0
      %2873 = vmatprep.mubr.bf16.mxu0 0
      %2874 = vmatmul.mubr.bf16.gmra.mxu0 %v2698
      %v2875 = vpop.f32.mrf.mxu0
      %v2876 = vadd.f32 0.0, %v2875
      %v2877 = vpop.f32.mrf.mxu0
      %v2878 = vpop.f32.mrf.mxu0
      %v2879 = vadd.f32 0.0, %v2878
      %v2880 = vpop.f32.mrf.mxu0
      %2881 = vmatprep.mubr.bf16.mxu0 0
      %2882 = vmatmul.mubr.bf16.gmra.mxu0 %v2700
      %v2883 = vpop.f32.mrf.mxu0
      %v2884 = vadd.f32 0.0, %v2883
      %v2885 = vpop.f32.mrf.mxu0
      %v2886 = vpop.f32.mrf.mxu0
      %v2887 = vadd.f32 0.0, %v2886
      %v2888 = vpop.f32.mrf.mxu0
      %2889 = vdwg.mxu0
      %v2890 = vadd.f32 %v2594, %v2796
      %v2891 = vadd.f32 %v2595, %v2799
      %v2892 = vadd.f32 %v2596, %v2804
      %v2893 = vadd.f32 %v2597, %v2807
      %v2894 = vadd.f32 %v2598, %v2812
      %v2895 = vadd.f32 %v2599, %v2815
      %v2896 = vadd.f32 %v2600, %v2820
      %v2897 = vadd.f32 %v2601, %v2823
      %v2898 = vadd.f32 %v2602, %v2828
      %v2899 = vadd.f32 %v2603, %v2831
      %v2900 = vadd.f32 %v2604, %v2836
      %v2901 = vadd.f32 %v2605, %v2839
      %v2902 = vadd.f32 %v2606, %v2844
      %v2903 = vadd.f32 %v2607, %v2847
      %v2904 = vadd.f32 %v2608, %v2852
      %v2905 = vadd.f32 %v2609, %v2855
      %v2906 = vadd.f32 %v2610, %v2860
      %v2907 = vadd.f32 %v2611, %v2863
      %v2908 = vadd.f32 %v2612, %v2868
      %v2909 = vadd.f32 %v2613, %v2871
      %v2910 = vadd.f32 %v2614, %v2876
      %v2911 = vadd.f32 %v2615, %v2879
      %v2912 = vadd.f32 %v2616, %v2884
      %v2913 = vadd.f32 %v2617, %v2887
      %v2914 = vrot.slane %v2125, 3
      %v2915 = vrot.slane %v2128, 4
      %v2916 = vor.u32 %v2914, %v2915
      %v2917 = vsel %vm1164, %v1279, %v2916
      %v2918 = vsel %vm1164, %v2916, %v1149
      %s2919 = scalar_lea.vmem %s5, 384
      %v2920 = vld [vmem:[%s2919] sm:$0xf]
      %v2921 = vld [vmem:[%s2919 + $0x4] sm:$0xf]
      %v2922 = vld [vmem:[%s2919 + $0x8] sm:$0xf]
      %v2923 = vld [vmem:[%s2919 + $0xc] sm:$0xf]
      %v2924 = vld [vmem:[%s2919 + $0x10] sm:$0xf]
      %v2925 = vld [vmem:[%s2919 + $0x14] sm:$0xf]
      %v2926 = vld [vmem:[%s2919 + $0x18] sm:$0xf]
      %v2927 = vld [vmem:[%s2919 + $0x1c] sm:$0xf]
      %v2928 = vld [vmem:[%s2919 + $0x20] sm:$0xf]
      %v2929 = vld [vmem:[%s2919 + $0x24] sm:$0xf]
      %v2930 = vld [vmem:[%s2919 + $0x28] sm:$0xf]
      %v2931 = vld [vmem:[%s2919 + $0x2c] sm:$0xf]
      %v2932 = vld [vmem:[%s2919 + $0x30] sm:$0xf]
      %v2933 = vld [vmem:[%s2919 + $0x34] sm:$0xf]
      %v2934 = vld [vmem:[%s2919 + $0x38] sm:$0xf]
      %v2935 = vld [vmem:[%s2919 + $0x3c] sm:$0xf]
      %v2936 = vrot.slane %v2917, 4
      %v2937 = vsel %vm1337, %v1576, %v2936
      %v2938 = vrot.slane %v2918, 4
      %v2939 = vsel %vm1337, %v2936, %v2938
      %v2940 = vsel %vm1337, %v2938, %v1553
      %v2960 = vunpack.c.l.b16 %v2920
      %v2961 = vunpack.c.l.b16 %v2921
      %v2962 = vunpack.c.l.b16 %v2922
      %v2963 = vunpack.c.l.b16 %v2923
      %v2964 = vunpack.c.l.b16 %v2924
      %v2965 = vunpack.c.l.b16 %v2925
      %v2966 = vunpack.c.l.b16 %v2926
      %v2967 = vunpack.c.l.b16 %v2927
      %v2968 = vunpack.c.l.b16 %v2928
      %v2969 = vunpack.c.l.b16 %v2929
      %v2970 = vunpack.c.l.b16 %v2930
      %v2971 = vunpack.c.l.b16 %v2931
      %v2972 = vunpack.c.l.b16 %v2932
      %v2973 = vunpack.c.l.b16 %v2933
      %v2974 = vunpack.c.l.b16 %v2934
      %v2975 = vunpack.c.l.b16 %v2935
      %v2976 = vpack.c.b16 %v2961, %v2960
      %v2977 = vpack.c.b16 %v2963, %v2962
      %v2978 = vpack.c.b16 %v2965, %v2964
      %v2979 = vpack.c.b16 %v2967, %v2966
      %v2980 = vpack.c.b16 %v2969, %v2968
      %v2981 = vpack.c.b16 %v2971, %v2970
      %v2982 = vpack.c.b16 %v2973, %v2972
      %v2983 = vpack.c.b16 %v2975, %v2974
      %2992 = vmatprep.subr.bf16.mxu0 0
      %2993 = vmatpush1.bf16.msra.mxu0 %v2983
      %2994 = vmatprep.subr.bf16.mxu0 0
      %2995 = vmatpush1.bf16.msra.mxu0 %v2982
      %2996 = vmatprep.subr.bf16.mxu0 0
      %2997 = vmatpush1.bf16.msra.mxu0 %v2981
      %2998 = vmatprep.subr.bf16.mxu0 0
      %2999 = vmatpush1.bf16.msra.mxu0 %v2980
      %3000 = vmatprep.subr.bf16.mxu0 0
      %3001 = vmatpush1.bf16.msra.mxu0 %v2979
      %3002 = vmatprep.subr.bf16.mxu0 0
      %3003 = vmatpush1.bf16.msra.mxu0 %v2978
      %3004 = vmatprep.subr.bf16.mxu0 0
      %3005 = vmatpush1.bf16.msra.mxu0 %v2977
      %3006 = vmatprep.subr.bf16.mxu0 0
      %3007 = vmatpush1.bf16.msra.mxu0 %v2976
      %3008 = vmatprep.subr.bf16.mxu0 0
      %3009 = vmatpush2.bf16.msra.mxu0 0
      %3010 = vmatprep.subr.bf16.mxu0 0
      %3011 = vmatpush2.bf16.msra.mxu0 0
      %3012 = vmatprep.subr.bf16.mxu0 0
      %3013 = vmatpush2.bf16.msra.mxu0 0
      %3014 = vmatprep.subr.bf16.mxu0 0
      %3015 = vmatpush2.bf16.msra.mxu0 0
      %3016 = vmatprep.subr.bf16.mxu0 0
      %3017 = vmatpush2.bf16.msra.mxu0 0
      %3018 = vmatprep.subr.bf16.mxu0 0
      %3019 = vmatpush2.bf16.msra.mxu0 0
      %3020 = vmatprep.subr.bf16.mxu0 0
      %3021 = vmatpush2.bf16.msra.mxu0 0
      %3022 = vmatprep.subr.bf16.mxu0 0
      %3023 = vmatpush2.bf16.msra.mxu0 0
      %3024 = vmatprep.mubr.bf16.mxu0 0
      %3025 = vmatmul.mubr.bf16.gmra.mxu0 %v1561
      %v3026 = vpop.f32.mrf.mxu0
      %v3027 = vadd.f32 0.0, %v3026
      %v3028 = vpop.f32.mrf.mxu0
      %v3029 = vpop.f32.mrf.mxu0
      %v3030 = vadd.f32 0.0, %v3029
      %v3031 = vpop.f32.mrf.mxu0
      %3032 = vmatprep.mubr.bf16.mxu0 0
      %3033 = vmatmul.mubr.bf16.gmra.mxu0 %v1563
      %v3034 = vpop.f32.mrf.mxu0
      %v3035 = vadd.f32 0.0, %v3034
      %v3036 = vpop.f32.mrf.mxu0
      %v3037 = vpop.f32.mrf.mxu0
      %v3038 = vadd.f32 0.0, %v3037
      %v3039 = vpop.f32.mrf.mxu0
      %3040 = vmatprep.mubr.bf16.mxu0 0
      %3041 = vmatmul.mubr.bf16.gmra.mxu0 %v1565
      %v3042 = vpop.f32.mrf.mxu0
      %v3043 = vadd.f32 0.0, %v3042
      %v3044 = vpop.f32.mrf.mxu0
      %v3045 = vpop.f32.mrf.mxu0
      %v3046 = vadd.f32 0.0, %v3045
      %v3047 = vpop.f32.mrf.mxu0
      %3048 = vmatprep.mubr.bf16.mxu0 0
      %3049 = vmatmul.mubr.bf16.gmra.mxu0 %v1567
      %v3050 = vpop.f32.mrf.mxu0
      %v3051 = vadd.f32 0.0, %v3050
      %v3052 = vpop.f32.mrf.mxu0
      %v3053 = vpop.f32.mrf.mxu0
      %v3054 = vadd.f32 0.0, %v3053
      %v3055 = vpop.f32.mrf.mxu0
      %3056 = vmatprep.mubr.bf16.mxu0 0
      %3057 = vmatmul.mubr.bf16.gmra.mxu0 %v1569
      %v3058 = vpop.f32.mrf.mxu0
      %v3059 = vadd.f32 0.0, %v3058
      %v3060 = vpop.f32.mrf.mxu0
      %v3061 = vpop.f32.mrf.mxu0
      %v3062 = vadd.f32 0.0, %v3061
      %v3063 = vpop.f32.mrf.mxu0
      %3064 = vmatprep.mubr.bf16.mxu0 0
      %3065 = vmatmul.mubr.bf16.gmra.mxu0 %v1571
      %v3066 = vpop.f32.mrf.mxu0
      %v3067 = vadd.f32 0.0, %v3066
      %v3068 = vpop.f32.mrf.mxu0
      %v3069 = vpop.f32.mrf.mxu0
      %v3070 = vadd.f32 0.0, %v3069
      %v3071 = vpop.f32.mrf.mxu0
      %3072 = vmatprep.mubr.bf16.mxu0 0
      %3073 = vmatmul.mubr.bf16.gmra.mxu0 %v1573
      %v3074 = vpop.f32.mrf.mxu0
      %v3075 = vadd.f32 0.0, %v3074
      %v3076 = vpop.f32.mrf.mxu0
      %v3077 = vpop.f32.mrf.mxu0
      %v3078 = vadd.f32 0.0, %v3077
      %v3079 = vpop.f32.mrf.mxu0
      %3080 = vmatprep.mubr.bf16.mxu0 0
      %3081 = vmatmul.mubr.bf16.gmra.mxu0 %v1575
      %v3082 = vpop.f32.mrf.mxu0
      %v3083 = vadd.f32 0.0, %v3082
      %v3084 = vpop.f32.mrf.mxu0
      %v3085 = vpop.f32.mrf.mxu0
      %v3086 = vadd.f32 0.0, %v3085
      %v3087 = vpop.f32.mrf.mxu0
      %3088 = vmatprep.mubr.bf16.mxu0 0
      %3089 = vmatmul.mubr.bf16.gmra.mxu0 %v1577
      %v3090 = vpop.f32.mrf.mxu0
      %v3091 = vadd.f32 0.0, %v3090
      %v3092 = vpop.f32.mrf.mxu0
      %v3093 = vpop.f32.mrf.mxu0
      %v3094 = vadd.f32 0.0, %v3093
      %v3095 = vpop.f32.mrf.mxu0
      %3096 = vmatprep.mubr.bf16.mxu0 0
      %3097 = vmatmul.mubr.bf16.gmra.mxu0 %v2937
      %v3098 = vpop.f32.mrf.mxu0
      %v3099 = vadd.f32 0.0, %v3098
      %v3100 = vpop.f32.mrf.mxu0
      %v3101 = vpop.f32.mrf.mxu0
      %v3102 = vadd.f32 0.0, %v3101
      %v3103 = vpop.f32.mrf.mxu0
      %3104 = vmatprep.mubr.bf16.mxu0 0
      %3105 = vmatmul.mubr.bf16.gmra.mxu0 %v2939
      %v3106 = vpop.f32.mrf.mxu0
      %v3107 = vadd.f32 0.0, %v3106
      %v3108 = vpop.f32.mrf.mxu0
      %v3109 = vpop.f32.mrf.mxu0
      %v3110 = vadd.f32 0.0, %v3109
      %v3111 = vpop.f32.mrf.mxu0
      %3112 = vmatprep.mubr.bf16.mxu0 0
      %3113 = vmatmul.mubr.bf16.gmra.mxu0 %v2940
      %v3114 = vpop.f32.mrf.mxu0
      %v3115 = vadd.f32 0.0, %v3114
      %v3116 = vpop.f32.mrf.mxu0
      %v3117 = vpop.f32.mrf.mxu0
      %v3118 = vadd.f32 0.0, %v3117
      %v3119 = vpop.f32.mrf.mxu0
      %3120 = vdwg.mxu0
      %v3121 = vadd.f32 %v2890, %v3027
      %v3122 = vadd.f32 %v2891, %v3030
      %v3123 = vadd.f32 %v2892, %v3035
      %v3124 = vadd.f32 %v2893, %v3038
      %v3125 = vadd.f32 %v2894, %v3043
      %v3126 = vadd.f32 %v2895, %v3046
      %v3127 = vadd.f32 %v2896, %v3051
      %v3128 = vadd.f32 %v2897, %v3054
      %v3129 = vadd.f32 %v2898, %v3059
      %v3130 = vadd.f32 %v2899, %v3062
      %v3131 = vadd.f32 %v2900, %v3067
      %v3132 = vadd.f32 %v2901, %v3070
      %v3133 = vadd.f32 %v2902, %v3075
      %v3134 = vadd.f32 %v2903, %v3078
      %v3135 = vadd.f32 %v2904, %v3083
      %v3136 = vadd.f32 %v2905, %v3086
      %v3137 = vadd.f32 %v2906, %v3091
      %v3138 = vadd.f32 %v2907, %v3094
      %v3139 = vadd.f32 %v2908, %v3099
      %v3140 = vadd.f32 %v2909, %v3102
      %v3141 = vadd.f32 %v2910, %v3107
      %v3142 = vadd.f32 %v2911, %v3110
      %v3143 = vadd.f32 %v2912, %v3115
      %v3144 = vadd.f32 %v2913, %v3118
      %v3145 = vpack.c.b16 %v1139, %v1138
      %s3146 = scalar_lea.vmem %s5, 448
      %v3147 = vld [vmem:[%s3146] sm:$0xf]
      %v3148 = vld [vmem:[%s3146 + $0x4] sm:$0xf]
      %v3149 = vld [vmem:[%s3146 + $0x8] sm:$0xf]
      %v3150 = vld [vmem:[%s3146 + $0xc] sm:$0xf]
      %v3151 = vld [vmem:[%s3146 + $0x10] sm:$0xf]
      %v3152 = vld [vmem:[%s3146 + $0x14] sm:$0xf]
      %v3153 = vld [vmem:[%s3146 + $0x18] sm:$0xf]
      %v3154 = vld [vmem:[%s3146 + $0x1c] sm:$0xf]
      %v3155 = vld [vmem:[%s3146 + $0x20] sm:$0xf]
      %v3156 = vld [vmem:[%s3146 + $0x24] sm:$0xf]
      %v3157 = vld [vmem:[%s3146 + $0x28] sm:$0xf]
      %v3158 = vld [vmem:[%s3146 + $0x2c] sm:$0xf]
      %v3159 = vld [vmem:[%s3146 + $0x30] sm:$0xf]
      %v3160 = vld [vmem:[%s3146 + $0x34] sm:$0xf]
      %v3161 = vld [vmem:[%s3146 + $0x38] sm:$0xf]
      %v3162 = vld [vmem:[%s3146 + $0x3c] sm:$0xf]
      %v3163 = vrot.slane %v2404, 4
      %v3164 = vsel %vm1337, %v1361, %v3163
      %v3165 = vrot.slane %v3145, 4
      %v3166 = vsel %vm1337, %v3163, %v3165
      %v3167 = vsel %vm1337, %v3165, %v1338
      %v3187 = vunpack.c.l.b16 %v3147
      %v3188 = vunpack.c.l.b16 %v3148
      %v3189 = vunpack.c.l.b16 %v3149
      %v3190 = vunpack.c.l.b16 %v3150
      %v3191 = vunpack.c.l.b16 %v3151
      %v3192 = vunpack.c.l.b16 %v3152
      %v3193 = vunpack.c.l.b16 %v3153
      %v3194 = vunpack.c.l.b16 %v3154
      %v3195 = vunpack.c.l.b16 %v3155
      %v3196 = vunpack.c.l.b16 %v3156
      %v3197 = vunpack.c.l.b16 %v3157
      %v3198 = vunpack.c.l.b16 %v3158
      %v3199 = vunpack.c.l.b16 %v3159
      %v3200 = vunpack.c.l.b16 %v3160
      %v3201 = vunpack.c.l.b16 %v3161
      %v3202 = vunpack.c.l.b16 %v3162
      %v3203 = vpack.c.b16 %v3188, %v3187
      %v3204 = vpack.c.b16 %v3190, %v3189
      %v3205 = vpack.c.b16 %v3192, %v3191
      %v3206 = vpack.c.b16 %v3194, %v3193
      %v3207 = vpack.c.b16 %v3196, %v3195
      %v3208 = vpack.c.b16 %v3198, %v3197
      %v3209 = vpack.c.b16 %v3200, %v3199
      %v3210 = vpack.c.b16 %v3202, %v3201
      %3219 = vmatprep.subr.bf16.mxu0 0
      %3220 = vmatpush1.bf16.msra.mxu0 %v3210
      %3221 = vmatprep.subr.bf16.mxu0 0
      %3222 = vmatpush1.bf16.msra.mxu0 %v3209
      %3223 = vmatprep.subr.bf16.mxu0 0
      %3224 = vmatpush1.bf16.msra.mxu0 %v3208
      %3225 = vmatprep.subr.bf16.mxu0 0
      %3226 = vmatpush1.bf16.msra.mxu0 %v3207
      %3227 = vmatprep.subr.bf16.mxu0 0
      %3228 = vmatpush1.bf16.msra.mxu0 %v3206
      %3229 = vmatprep.subr.bf16.mxu0 0
      %3230 = vmatpush1.bf16.msra.mxu0 %v3205
      %3231 = vmatprep.subr.bf16.mxu0 0
      %3232 = vmatpush1.bf16.msra.mxu0 %v3204
      %3233 = vmatprep.subr.bf16.mxu0 0
      %3234 = vmatpush1.bf16.msra.mxu0 %v3203
      %3235 = vmatprep.subr.bf16.mxu0 0
      %3236 = vmatpush2.bf16.msra.mxu0 0
      %3237 = vmatprep.subr.bf16.mxu0 0
      %3238 = vmatpush2.bf16.msra.mxu0 0
      %3239 = vmatprep.subr.bf16.mxu0 0
      %3240 = vmatpush2.bf16.msra.mxu0 0
      %3241 = vmatprep.subr.bf16.mxu0 0
      %3242 = vmatpush2.bf16.msra.mxu0 0
      %3243 = vmatprep.subr.bf16.mxu0 0
      %3244 = vmatpush2.bf16.msra.mxu0 0
      %3245 = vmatprep.subr.bf16.mxu0 0
      %3246 = vmatpush2.bf16.msra.mxu0 0
      %3247 = vmatprep.subr.bf16.mxu0 0
      %3248 = vmatpush2.bf16.msra.mxu0 0
      %3249 = vmatprep.subr.bf16.mxu0 0
      %3250 = vmatpush2.bf16.msra.mxu0 0
      %3251 = vmatprep.mubr.bf16.mxu0 0
      %3252 = vmatmul.mubr.bf16.gmra.mxu0 %v1346
      %v3253 = vpop.f32.mrf.mxu0
      %v3254 = vadd.f32 0.0, %v3253
      %v3255 = vpop.f32.mrf.mxu0
      %v3256 = vpop.f32.mrf.mxu0
      %v3257 = vadd.f32 0.0, %v3256
      %v3258 = vpop.f32.mrf.mxu0
      %3259 = vmatprep.mubr.bf16.mxu0 0
      %3260 = vmatmul.mubr.bf16.gmra.mxu0 %v1348
      %v3261 = vpop.f32.mrf.mxu0
      %v3262 = vadd.f32 0.0, %v3261
      %v3263 = vpop.f32.mrf.mxu0
      %v3264 = vpop.f32.mrf.mxu0
      %v3265 = vadd.f32 0.0, %v3264
      %v3266 = vpop.f32.mrf.mxu0
      %3267 = vmatprep.mubr.bf16.mxu0 0
      %3268 = vmatmul.mubr.bf16.gmra.mxu0 %v1350
      %v3269 = vpop.f32.mrf.mxu0
      %v3270 = vadd.f32 0.0, %v3269
      %v3271 = vpop.f32.mrf.mxu0
      %v3272 = vpop.f32.mrf.mxu0
      %v3273 = vadd.f32 0.0, %v3272
      %v3274 = vpop.f32.mrf.mxu0
      %3275 = vmatprep.mubr.bf16.mxu0 0
      %3276 = vmatmul.mubr.bf16.gmra.mxu0 %v1352
      %v3277 = vpop.f32.mrf.mxu0
      %v3278 = vadd.f32 0.0, %v3277
      %v3279 = vpop.f32.mrf.mxu0
      %v3280 = vpop.f32.mrf.mxu0
      %v3281 = vadd.f32 0.0, %v3280
      %v3282 = vpop.f32.mrf.mxu0
      %3283 = vmatprep.mubr.bf16.mxu0 0
      %3284 = vmatmul.mubr.bf16.gmra.mxu0 %v1354
      %v3285 = vpop.f32.mrf.mxu0
      %v3286 = vadd.f32 0.0, %v3285
      %v3287 = vpop.f32.mrf.mxu0
      %v3288 = vpop.f32.mrf.mxu0
      %v3289 = vadd.f32 0.0, %v3288
      %v3290 = vpop.f32.mrf.mxu0
      %3291 = vmatprep.mubr.bf16.mxu0 0
      %3292 = vmatmul.mubr.bf16.gmra.mxu0 %v1356
      %v3293 = vpop.f32.mrf.mxu0
      %v3294 = vadd.f32 0.0, %v3293
      %v3295 = vpop.f32.mrf.mxu0
      %v3296 = vpop.f32.mrf.mxu0
      %v3297 = vadd.f32 0.0, %v3296
      %v3298 = vpop.f32.mrf.mxu0
      %3299 = vmatprep.mubr.bf16.mxu0 0
      %3300 = vmatmul.mubr.bf16.gmra.mxu0 %v1358
      %v3301 = vpop.f32.mrf.mxu0
      %v3302 = vadd.f32 0.0, %v3301
      %v3303 = vpop.f32.mrf.mxu0
      %v3304 = vpop.f32.mrf.mxu0
      %v3305 = vadd.f32 0.0, %v3304
      %v3306 = vpop.f32.mrf.mxu0
      %3307 = vmatprep.mubr.bf16.mxu0 0
      %3308 = vmatmul.mubr.bf16.gmra.mxu0 %v1360
      %v3309 = vpop.f32.mrf.mxu0
      %v3310 = vadd.f32 0.0, %v3309
      %v3311 = vpop.f32.mrf.mxu0
      %v3312 = vpop.f32.mrf.mxu0
      %v3313 = vadd.f32 0.0, %v3312
      %v3314 = vpop.f32.mrf.mxu0
      %3315 = vmatprep.mubr.bf16.mxu0 0
      %3316 = vmatmul.mubr.bf16.gmra.mxu0 %v1362
      %v3317 = vpop.f32.mrf.mxu0
      %v3318 = vadd.f32 0.0, %v3317
      %v3319 = vpop.f32.mrf.mxu0
      %v3320 = vpop.f32.mrf.mxu0
      %v3321 = vadd.f32 0.0, %v3320
      %v3322 = vpop.f32.mrf.mxu0
      %3323 = vmatprep.mubr.bf16.mxu0 0
      %3324 = vmatmul.mubr.bf16.gmra.mxu0 %v3164
      %v3325 = vpop.f32.mrf.mxu0
      %v3326 = vadd.f32 0.0, %v3325
      %v3327 = vpop.f32.mrf.mxu0
      %v3328 = vpop.f32.mrf.mxu0
      %v3329 = vadd.f32 0.0, %v3328
      %v3330 = vpop.f32.mrf.mxu0
      %3331 = vmatprep.mubr.bf16.mxu0 0
      %3332 = vmatmul.mubr.bf16.gmra.mxu0 %v3166
      %v3333 = vpop.f32.mrf.mxu0
      %v3334 = vadd.f32 0.0, %v3333
      %v3335 = vpop.f32.mrf.mxu0
      %v3336 = vpop.f32.mrf.mxu0
      %v3337 = vadd.f32 0.0, %v3336
      %v3338 = vpop.f32.mrf.mxu0
      %3339 = vmatprep.mubr.bf16.mxu0 0
      %3340 = vmatmul.mubr.bf16.gmra.mxu0 %v3167
      %v3341 = vpop.f32.mrf.mxu0
      %v3342 = vadd.f32 0.0, %v3341
      %v3343 = vpop.f32.mrf.mxu0
      %v3344 = vpop.f32.mrf.mxu0
      %v3345 = vadd.f32 0.0, %v3344
      %v3346 = vpop.f32.mrf.mxu0
      %3347 = vdwg.mxu0
      %v3348 = vadd.f32 %v3121, %v3254
      %v3349 = vadd.f32 %v3122, %v3257
      %v3350 = vadd.f32 %v3123, %v3262
      %v3351 = vadd.f32 %v3124, %v3265
      %v3352 = vadd.f32 %v3125, %v3270
      %v3353 = vadd.f32 %v3126, %v3273
      %v3354 = vadd.f32 %v3127, %v3278
      %v3355 = vadd.f32 %v3128, %v3281
      %v3356 = vadd.f32 %v3129, %v3286
      %v3357 = vadd.f32 %v3130, %v3289
      %v3358 = vadd.f32 %v3131, %v3294
      %v3359 = vadd.f32 %v3132, %v3297
      %v3360 = vadd.f32 %v3133, %v3302
      %v3361 = vadd.f32 %v3134, %v3305
      %v3362 = vadd.f32 %v3135, %v3310
      %v3363 = vadd.f32 %v3136, %v3313
      %v3364 = vadd.f32 %v3137, %v3318
      %v3365 = vadd.f32 %v3138, %v3321
      %v3366 = vadd.f32 %v3139, %v3326
      %v3367 = vadd.f32 %v3140, %v3329
      %v3368 = vadd.f32 %v3141, %v3334
      %v3369 = vadd.f32 %v3142, %v3337
      %v3370 = vadd.f32 %v3143, %v3342
      %v3371 = vadd.f32 %v3144, %v3345
      %v3373 = vshrl.u32 %v1305, 16
      %v3375 = vshll.u32 %v1305, 16
      %v3377 = vrot.slane %v3375, 1
      %v3378 = vor.u32 %v3373, %v3377
      %v3380 = vshll.u32 %v1306, 16
      %v3382 = vrot.slane %v3380, 1
      %v3383 = vsel %vm2618, %v3378, %v3382
      %v3384 = vshrl.u32 %v1306, 16
      %v3386 = vor.u32 %v3384, %v3382
      %v3388 = vshll.u32 %v1307, 16
      %v3390 = vrot.slane %v3388, 1
      %v3391 = vsel %vm2618, %v3386, %v3390
      %v3392 = vshrl.u32 %v1307, 16
      %v3394 = vor.u32 %v3392, %v3390
      %v3396 = vshll.u32 %v1308, 16
      %v3398 = vrot.slane %v3396, 1
      %v3399 = vsel %vm2618, %v3394, %v3398
      %v3400 = vshrl.u32 %v1308, 16
      %v3402 = vor.u32 %v3400, %v3398
      %v3404 = vshll.u32 %v1309, 16
      %v3406 = vrot.slane %v3404, 1
      %v3407 = vsel %vm2618, %v3402, %v3406
      %v3408 = vshrl.u32 %v1309, 16
      %v3410 = vor.u32 %v3408, %v3406
      %v3412 = vshll.u32 %v1310, 16
      %v3414 = vrot.slane %v3412, 1
      %v3415 = vsel %vm2618, %v3410, %v3414
      %v3416 = vshrl.u32 %v1310, 16
      %v3418 = vor.u32 %v3416, %v3414
      %v3420 = vshll.u32 %v1311, 16
      %v3422 = vrot.slane %v3420, 1
      %v3423 = vsel %vm2618, %v3418, %v3422
      %v3424 = vshrl.u32 %v1311, 16
      %v3426 = vor.u32 %v3424, %v3422
      %v3428 = vshll.u32 %v1312, 16
      %v3430 = vrot.slane %v3428, 1
      %v3431 = vsel %vm2618, %v3426, %v3430
      %v3432 = vshrl.u32 %v1312, 16
      %v3434 = vor.u32 %v3432, %v3430
      %v3436 = vshll.u32 %v1313, 16
      %v3438 = vrot.slane %v3436, 1
      %v3439 = vsel %vm2618, %v3434, %v3438
      %v3440 = vshrl.u32 %v1313, 16
      %v3442 = vor.u32 %v3440, %v3438
      %v3444 = vshll.u32 %v1314, 16
      %v3446 = vrot.slane %v3444, 1
      %v3447 = vsel %vm2618, %v3442, %v3446
      %v3448 = vshrl.u32 %v1314, 16
      %v3450 = vor.u32 %v3448, %v3446
      %v3452 = vshll.u32 %v2404, 16
      %v3454 = vrot.slane %v3452, 1
      %v3455 = vsel %vm2618, %v3450, %v3454
      %v3456 = vshrl.u32 %v2404, 16
      %v3458 = vor.u32 %v3456, %v3454
      %v3460 = vshll.u32 %v3145, 16
      %v3462 = vrot.slane %v3460, 1
      %v3463 = vsel %vm2618, %v3458, %v3462
      %v3464 = vshrl.u32 %v3145, 16
      %v3466 = vor.u32 %v3464, %v3462
      %v3467 = vsel %vm2618, %v3466, %v1771
      %s3468 = scalar_lea.vmem %s5, 512
      %v3469 = vld [vmem:[%s3468] sm:$0xf]
      %v3470 = vld [vmem:[%s3468 + $0x4] sm:$0xf]
      %v3471 = vld [vmem:[%s3468 + $0x8] sm:$0xf]
      %v3472 = vld [vmem:[%s3468 + $0xc] sm:$0xf]
      %v3473 = vld [vmem:[%s3468 + $0x10] sm:$0xf]
      %v3474 = vld [vmem:[%s3468 + $0x14] sm:$0xf]
      %v3475 = vld [vmem:[%s3468 + $0x18] sm:$0xf]
      %v3476 = vld [vmem:[%s3468 + $0x1c] sm:$0xf]
      %v3477 = vld [vmem:[%s3468 + $0x20] sm:$0xf]
      %v3478 = vld [vmem:[%s3468 + $0x24] sm:$0xf]
      %v3479 = vld [vmem:[%s3468 + $0x28] sm:$0xf]
      %v3480 = vld [vmem:[%s3468 + $0x2c] sm:$0xf]
      %v3481 = vld [vmem:[%s3468 + $0x30] sm:$0xf]
      %v3482 = vld [vmem:[%s3468 + $0x34] sm:$0xf]
      %v3483 = vld [vmem:[%s3468 + $0x38] sm:$0xf]
      %v3484 = vld [vmem:[%s3468 + $0x3c] sm:$0xf]
      %v3485 = vrot.slane %v3383, 4
      %v3486 = vrot.slane %v3391, 4
      %v3487 = vsel %vm1337, %v3485, %v3486
      %v3488 = vrot.slane %v3399, 4
      %v3489 = vsel %vm1337, %v3486, %v3488
      %v3490 = vrot.slane %v3407, 4
      %v3491 = vsel %vm1337, %v3488, %v3490
      %v3492 = vrot.slane %v3415, 4
      %v3493 = vsel %vm1337, %v3490, %v3492
      %v3494 = vrot.slane %v3423, 4
      %v3495 = vsel %vm1337, %v3492, %v3494
      %v3496 = vrot.slane %v3431, 4
      %v3497 = vsel %vm1337, %v3494, %v3496
      %v3498 = vrot.slane %v3439, 4
      %v3499 = vsel %vm1337, %v3496, %v3498
      %v3500 = vrot.slane %v3447, 4
      %v3501 = vsel %vm1337, %v3498, %v3500
      %v3502 = vrot.slane %v3455, 4
      %v3503 = vsel %vm1337, %v3500, %v3502
      %v3504 = vrot.slane %v3463, 4
      %v3505 = vsel %vm1337, %v3502, %v3504
      %v3506 = vrot.slane %v3467, 4
      %v3507 = vsel %vm1337, %v3504, %v3506
      %v3508 = vsel %vm1337, %v3506, %v1847
      %v3537 = vunpack.c.l.b16 %v3469
      %v3538 = vunpack.c.l.b16 %v3470
      %v3539 = vunpack.c.l.b16 %v3471
      %v3540 = vunpack.c.l.b16 %v3472
      %v3541 = vunpack.c.l.b16 %v3473
      %v3542 = vunpack.c.l.b16 %v3474
      %v3543 = vunpack.c.l.b16 %v3475
      %v3544 = vunpack.c.l.b16 %v3476
      %v3545 = vunpack.c.l.b16 %v3477
      %v3546 = vunpack.c.l.b16 %v3478
      %v3547 = vunpack.c.l.b16 %v3479
      %v3548 = vunpack.c.l.b16 %v3480
      %v3549 = vunpack.c.l.b16 %v3481
      %v3550 = vunpack.c.l.b16 %v3482
      %v3551 = vunpack.c.l.b16 %v3483
      %v3552 = vunpack.c.l.b16 %v3484
      %v3553 = vpack.c.b16 %v3538, %v3537
      %v3554 = vpack.c.b16 %v3540, %v3539
      %v3555 = vpack.c.b16 %v3542, %v3541
      %v3556 = vpack.c.b16 %v3544, %v3543
      %v3557 = vpack.c.b16 %v3546, %v3545
      %v3558 = vpack.c.b16 %v3548, %v3547
      %v3559 = vpack.c.b16 %v3550, %v3549
      %v3560 = vpack.c.b16 %v3552, %v3551
      %3569 = vmatprep.subr.bf16.mxu0 0
      %3570 = vmatpush1.bf16.msra.mxu0 %v3560
      %3571 = vmatprep.subr.bf16.mxu0 0
      %3572 = vmatpush1.bf16.msra.mxu0 %v3559
      %3573 = vmatprep.subr.bf16.mxu0 0
      %3574 = vmatpush1.bf16.msra.mxu0 %v3558
      %3575 = vmatprep.subr.bf16.mxu0 0
      %3576 = vmatpush1.bf16.msra.mxu0 %v3557
      %3577 = vmatprep.subr.bf16.mxu0 0
      %3578 = vmatpush1.bf16.msra.mxu0 %v3556
      %3579 = vmatprep.subr.bf16.mxu0 0
      %3580 = vmatpush1.bf16.msra.mxu0 %v3555
      %3581 = vmatprep.subr.bf16.mxu0 0
      %3582 = vmatpush1.bf16.msra.mxu0 %v3554
      %3583 = vmatprep.subr.bf16.mxu0 0
      %3584 = vmatpush1.bf16.msra.mxu0 %v3553
      %3585 = vmatprep.subr.bf16.mxu0 0
      %3586 = vmatpush2.bf16.msra.mxu0 0
      %3587 = vmatprep.subr.bf16.mxu0 0
      %3588 = vmatpush2.bf16.msra.mxu0 0
      %3589 = vmatprep.subr.bf16.mxu0 0
      %3590 = vmatpush2.bf16.msra.mxu0 0
      %3591 = vmatprep.subr.bf16.mxu0 0
      %3592 = vmatpush2.bf16.msra.mxu0 0
      %3593 = vmatprep.subr.bf16.mxu0 0
      %3594 = vmatpush2.bf16.msra.mxu0 0
      %3595 = vmatprep.subr.bf16.mxu0 0
      %3596 = vmatpush2.bf16.msra.mxu0 0
      %3597 = vmatprep.subr.bf16.mxu0 0
      %3598 = vmatpush2.bf16.msra.mxu0 0
      %3599 = vmatprep.subr.bf16.mxu0 0
      %3600 = vmatpush2.bf16.msra.mxu0 0
      %3601 = vmatprep.mubr.bf16.mxu0 0
      %3602 = vmatmul.mubr.bf16.gmra.mxu0 %v3487
      %v3603 = vpop.f32.mrf.mxu0
      %v3604 = vadd.f32 0.0, %v3603
      %v3605 = vpop.f32.mrf.mxu0
      %v3606 = vpop.f32.mrf.mxu0
      %v3607 = vadd.f32 0.0, %v3606
      %v3608 = vpop.f32.mrf.mxu0
      %3609 = vmatprep.mubr.bf16.mxu0 0
      %3610 = vmatmul.mubr.bf16.gmra.mxu0 %v3489
      %v3611 = vpop.f32.mrf.mxu0
      %v3612 = vadd.f32 0.0, %v3611
      %v3613 = vpop.f32.mrf.mxu0
      %v3614 = vpop.f32.mrf.mxu0
      %v3615 = vadd.f32 0.0, %v3614
      %v3616 = vpop.f32.mrf.mxu0
      %3617 = vmatprep.mubr.bf16.mxu0 0
      %3618 = vmatmul.mubr.bf16.gmra.mxu0 %v3491
      %v3619 = vpop.f32.mrf.mxu0
      %v3620 = vadd.f32 0.0, %v3619
      %v3621 = vpop.f32.mrf.mxu0
      %v3622 = vpop.f32.mrf.mxu0
      %v3623 = vadd.f32 0.0, %v3622
      %v3624 = vpop.f32.mrf.mxu0
      %3625 = vmatprep.mubr.bf16.mxu0 0
      %3626 = vmatmul.mubr.bf16.gmra.mxu0 %v3493
      %v3627 = vpop.f32.mrf.mxu0
      %v3628 = vadd.f32 0.0, %v3627
      %v3629 = vpop.f32.mrf.mxu0
      %v3630 = vpop.f32.mrf.mxu0
      %v3631 = vadd.f32 0.0, %v3630
      %v3632 = vpop.f32.mrf.mxu0
      %3633 = vmatprep.mubr.bf16.mxu0 0
      %3634 = vmatmul.mubr.bf16.gmra.mxu0 %v3495
      %v3635 = vpop.f32.mrf.mxu0
      %v3636 = vadd.f32 0.0, %v3635
      %v3637 = vpop.f32.mrf.mxu0
      %v3638 = vpop.f32.mrf.mxu0
      %v3639 = vadd.f32 0.0, %v3638
      %v3640 = vpop.f32.mrf.mxu0
      %3641 = vmatprep.mubr.bf16.mxu0 0
      %3642 = vmatmul.mubr.bf16.gmra.mxu0 %v3497
      %v3643 = vpop.f32.mrf.mxu0
      %v3644 = vadd.f32 0.0, %v3643
      %v3645 = vpop.f32.mrf.mxu0
      %v3646 = vpop.f32.mrf.mxu0
      %v3647 = vadd.f32 0.0, %v3646
      %v3648 = vpop.f32.mrf.mxu0
      %3649 = vmatprep.mubr.bf16.mxu0 0
      %3650 = vmatmul.mubr.bf16.gmra.mxu0 %v3499
      %v3651 = vpop.f32.mrf.mxu0
      %v3652 = vadd.f32 0.0, %v3651
      %v3653 = vpop.f32.mrf.mxu0
      %v3654 = vpop.f32.mrf.mxu0
      %v3655 = vadd.f32 0.0, %v3654
      %v3656 = vpop.f32.mrf.mxu0
      %3657 = vmatprep.mubr.bf16.mxu0 0
      %3658 = vmatmul.mubr.bf16.gmra.mxu0 %v3501
      %v3659 = vpop.f32.mrf.mxu0
      %v3660 = vadd.f32 0.0, %v3659
      %v3661 = vpop.f32.mrf.mxu0
      %v3662 = vpop.f32.mrf.mxu0
      %v3663 = vadd.f32 0.0, %v3662
      %v3664 = vpop.f32.mrf.mxu0
      %3665 = vmatprep.mubr.bf16.mxu0 0
      %3666 = vmatmul.mubr.bf16.gmra.mxu0 %v3503
      %v3667 = vpop.f32.mrf.mxu0
      %v3668 = vadd.f32 0.0, %v3667
      %v3669 = vpop.f32.mrf.mxu0
      %v3670 = vpop.f32.mrf.mxu0
      %v3671 = vadd.f32 0.0, %v3670
      %v3672 = vpop.f32.mrf.mxu0
      %3673 = vmatprep.mubr.bf16.mxu0 0
      %3674 = vmatmul.mubr.bf16.gmra.mxu0 %v3505
      %v3675 = vpop.f32.mrf.mxu0
      %v3676 = vadd.f32 0.0, %v3675
      %v3677 = vpop.f32.mrf.mxu0
      %v3678 = vpop.f32.mrf.mxu0
      %v3679 = vadd.f32 0.0, %v3678
      %v3680 = vpop.f32.mrf.mxu0
      %3681 = vmatprep.mubr.bf16.mxu0 0
      %3682 = vmatmul.mubr.bf16.gmra.mxu0 %v3507
      %v3683 = vpop.f32.mrf.mxu0
      %v3684 = vadd.f32 0.0, %v3683
      %v3685 = vpop.f32.mrf.mxu0
      %v3686 = vpop.f32.mrf.mxu0
      %v3687 = vadd.f32 0.0, %v3686
      %v3688 = vpop.f32.mrf.mxu0
      %3689 = vmatprep.mubr.bf16.mxu0 0
      %3690 = vmatmul.mubr.bf16.gmra.mxu0 %v3508
      %v3691 = vpop.f32.mrf.mxu0
      %v3692 = vadd.f32 0.0, %v3691
      %v3693 = vpop.f32.mrf.mxu0
      %v3694 = vpop.f32.mrf.mxu0
      %v3695 = vadd.f32 0.0, %v3694
      %v3696 = vpop.f32.mrf.mxu0
      %3697 = vdwg.mxu0
      %v3698 = vadd.f32 %v3348, %v3604
      %v3699 = vadd.f32 %v3349, %v3607
      %v3700 = vadd.f32 %v3350, %v3612
      %v3701 = vadd.f32 %v3351, %v3615
      %v3702 = vadd.f32 %v3352, %v3620
      %v3703 = vadd.f32 %v3353, %v3623
      %v3704 = vadd.f32 %v3354, %v3628
      %v3705 = vadd.f32 %v3355, %v3631
      %v3706 = vadd.f32 %v3356, %v3636
      %v3707 = vadd.f32 %v3357, %v3639
      %v3708 = vadd.f32 %v3358, %v3644
      %v3709 = vadd.f32 %v3359, %v3647
      %v3710 = vadd.f32 %v3360, %v3652
      %v3711 = vadd.f32 %v3361, %v3655
      %v3712 = vadd.f32 %v3362, %v3660
      %v3713 = vadd.f32 %v3363, %v3663
      %v3714 = vadd.f32 %v3364, %v3668
      %v3715 = vadd.f32 %v3365, %v3671
      %v3716 = vadd.f32 %v3366, %v3676
      %v3717 = vadd.f32 %v3367, %v3679
      %v3718 = vadd.f32 %v3368, %v3684
      %v3719 = vadd.f32 %v3369, %v3687
      %v3720 = vadd.f32 %v3370, %v3692
      %v3721 = vadd.f32 %v3371, %v3695
      %v3722 = vld [vmem:[%s6] sm:$0x1]
      %v3724 = vlaneseq
      %v3725 = vshrl.u32 %v3724, 7
      %v3726 = vsub.s32 0, %v3725
      %v3727 = vrot.slane %v3722, %v3726
      %v3729 = vadd.f32 %v3698, %v3727
      %v3730 = vadd.f32 %v3699, %v3727
      %v3731 = vadd.f32 %v3700, %v3727
      %v3732 = vadd.f32 %v3701, %v3727
      %v3733 = vadd.f32 %v3702, %v3727
      %v3734 = vadd.f32 %v3703, %v3727
      %v3735 = vadd.f32 %v3704, %v3727
      %v3736 = vadd.f32 %v3705, %v3727
      %v3737 = vadd.f32 %v3706, %v3727
      %v3738 = vadd.f32 %v3707, %v3727
      %v3739 = vadd.f32 %v3708, %v3727
      %v3740 = vadd.f32 %v3709, %v3727
      %v3741 = vadd.f32 %v3710, %v3727
      %v3742 = vadd.f32 %v3711, %v3727
      %v3743 = vadd.f32 %v3712, %v3727
      %v3744 = vadd.f32 %v3713, %v3727
      %v3745 = vadd.f32 %v3714, %v3727
      %v3746 = vadd.f32 %v3715, %v3727
      %v3747 = vadd.f32 %v3716, %v3727
      %v3748 = vadd.f32 %v3717, %v3727
      %v3749 = vadd.f32 %v3718, %v3727
      %v3750 = vadd.f32 %v3719, %v3727
      %v3751 = vadd.f32 %v3720, %v3727
      %v3752 = vadd.f32 %v3721, %v3727
      %v3753 = vmul.f32 %v3729, 0.1
      %v3754 = vmul.f32 %v3730, 0.1
      %v3755 = vmul.f32 %v3731, 0.1
      %v3756 = vmul.f32 %v3732, 0.1
      %v3757 = vmul.f32 %v3733, 0.1
      %v3758 = vmul.f32 %v3734, 0.1
      %v3759 = vmul.f32 %v3735, 0.1
      %v3760 = vmul.f32 %v3736, 0.1
      %v3761 = vmul.f32 %v3737, 0.1
      %v3762 = vmul.f32 %v3738, 0.1
      %v3763 = vmul.f32 %v3739, 0.1
      %v3764 = vmul.f32 %v3740, 0.1
      %v3765 = vmul.f32 %v3741, 0.1
      %v3766 = vmul.f32 %v3742, 0.1
      %v3767 = vmul.f32 %v3743, 0.1
      %v3768 = vmul.f32 %v3744, 0.1
      %v3769 = vmul.f32 %v3745, 0.1
      %v3770 = vmul.f32 %v3746, 0.1
      %v3771 = vmul.f32 %v3747, 0.1
      %v3772 = vmul.f32 %v3748, 0.1
      %v3773 = vmul.f32 %v3749, 0.1
      %v3774 = vmul.f32 %v3750, 0.1
      %v3775 = vmul.f32 %v3751, 0.1
      %v3776 = vmul.f32 %v3752, 0.1
      %v3777 = vmax.f32 %v3729, %v3753
      %v3778 = vmax.f32 %v3730, %v3754
      %v3779 = vmax.f32 %v3731, %v3755
      %v3780 = vmax.f32 %v3732, %v3756
      %v3781 = vmax.f32 %v3733, %v3757
      %v3782 = vmax.f32 %v3734, %v3758
      %v3783 = vmax.f32 %v3735, %v3759
      %v3784 = vmax.f32 %v3736, %v3760
      %v3785 = vmax.f32 %v3737, %v3761
      %v3786 = vmax.f32 %v3738, %v3762
      %v3787 = vmax.f32 %v3739, %v3763
      %v3788 = vmax.f32 %v3740, %v3764
      %v3789 = vmax.f32 %v3741, %v3765
      %v3790 = vmax.f32 %v3742, %v3766
      %v3791 = vmax.f32 %v3743, %v3767
      %v3792 = vmax.f32 %v3744, %v3768
      %v3793 = vmax.f32 %v3745, %v3769
      %v3794 = vmax.f32 %v3746, %v3770
      %v3795 = vmax.f32 %v3747, %v3771
      %v3796 = vmax.f32 %v3748, %v3772
      %v3797 = vmax.f32 %v3749, %v3773
      %v3798 = vmax.f32 %v3750, %v3774
      %v3799 = vmax.f32 %v3751, %v3775
      %v3800 = vmax.f32 %v3752, %v3776
      %v3801 = vadd.f32 %v3777, %v453
      %v3802 = vadd.f32 %v3778, %v454
      %v3803 = vadd.f32 %v3779, %v455
      %v3804 = vadd.f32 %v3780, %v456
      %v3805 = vadd.f32 %v3781, %v457
      %v3806 = vadd.f32 %v3782, %v458
      %v3807 = vadd.f32 %v3783, %v459
      %v3808 = vadd.f32 %v3784, %v460
      %v3809 = vadd.f32 %v3785, %v461
      %v3810 = vadd.f32 %v3786, %v462
      %v3811 = vadd.f32 %v3787, %v463
      %v3812 = vadd.f32 %v3788, %v464
      %v3813 = vadd.f32 %v3789, %v465
      %v3814 = vadd.f32 %v3790, %v466
      %v3815 = vadd.f32 %v3791, %v467
      %v3816 = vadd.f32 %v3792, %v468
      %v3817 = vadd.f32 %v3793, %v469
      %v3818 = vadd.f32 %v3794, %v470
      %v3819 = vadd.f32 %v3795, %v471
      %v3820 = vadd.f32 %v3796, %v472
      %v3821 = vadd.f32 %v3797, %v473
      %v3822 = vadd.f32 %v3798, %v474
      %v3823 = vadd.f32 %v3799, %v475
      %v3824 = vadd.f32 %v3800, %v476
      %3825 = vst [vmem:[%s445] sm:$0xff] %v3801
      %3826 = vst [vmem:[%s445 + $0x8] sm:$0xff] %v3802
      %3827 = vst [vmem:[%s445 + $0x10] sm:$0xff] %v3803
      %3828 = vst [vmem:[%s445 + $0x18] sm:$0xff] %v3804
      %3829 = vst [vmem:[%s445 + $0x20] sm:$0xff] %v3805
      %3830 = vst [vmem:[%s445 + $0x28] sm:$0xff] %v3806
      %3831 = vst [vmem:[%s445 + $0x30] sm:$0xff] %v3807
      %3832 = vst [vmem:[%s445 + $0x38] sm:$0xff] %v3808
      %3833 = vst [vmem:[%s445 + $0x40] sm:$0xff] %v3809
      %3834 = vst [vmem:[%s445 + $0x48] sm:$0xff] %v3810
      %3835 = vst [vmem:[%s445 + $0x50] sm:$0xff] %v3811
      %3836 = vst [vmem:[%s445 + $0x58] sm:$0xff] %v3812
      %3837 = vst [vmem:[%s445 + $0x60] sm:$0xff] %v3813
      %3838 = vst [vmem:[%s445 + $0x68] sm:$0xff] %v3814
      %3839 = vst [vmem:[%s445 + $0x70] sm:$0xff] %v3815
      %3840 = vst [vmem:[%s445 + $0x78] sm:$0xff] %v3816
      %3841 = vst [vmem:[%s445 + $0x80] sm:$0xff] %v3817
      %3842 = vst [vmem:[%s445 + $0x88] sm:$0xff] %v3818
      %3843 = vst [vmem:[%s445 + $0x90] sm:$0xff] %v3819
      %3844 = vst [vmem:[%s445 + $0x98] sm:$0xff] %v3820
      %3845 = vst [vmem:[%s445 + $0xa0] sm:$0xff] %v3821
      %3846 = vst [vmem:[%s445 + $0xa8] sm:$0xff] %v3822
      %3847 = vst [vmem:[%s445 + $0xb0] sm:$0xff] %v3823
      %3848 = vst [vmem:[%s445 + $0xb8] sm:$0xff] %v3824
      %s3849 = smul.u32 8, %s23
      %p3850 = scmp.lt.s32.totalorder %s22, 1
      %s3851 = scalar_select %p3850, %s22, 1
      %p3852 = scmp.lt.s32.totalorder %s3849, 15
      %s3853 = scalar_select %p3852, %s3849, 15
      %s3854 = smul.addr %s3853, 3
      %s3855 = smul.addr %s3851, 48
      %s3856 = sadd.s32 %s3854, %s3855
      %s3857 = smul.addr %s3856, 8
      %s3858 = scalar_lea.vmem %s7, %s3857
      // Predicated region
      $region49: #{darkblock.1} parent=47 // pred_check
        %p3859 = pneg %p234
      $region50: #{darkblock.1} parent=47 // pred_check_branch
        %3861 = sbr.rel (%p3859) target = $region52
      $region51: #{darkblock.1} parent=47 // pred_region
        %s3862 = smul.u32 8, %s23
      $region52: #{darkblock.1} parent=47 // pred_fallthru
        _
    $region48: #{darkblock.1} parent=5 // pred_fallthru
      _
    %p3863 = scmp.le.s32.totalorder 2, %s13
    // Predicated region
    $region53: #{darkblock.1} parent=5 // pred_check
      %p3864 = pneg %p3863
    $region54: #{darkblock.1} parent=5 // pred_check_branch
      %3866 = sbr.rel (%p3864) target = $region56
    $region55: #{darkblock.1} parent=5 // pred_region
      %s3867 = ssub.s32 %s13, 2
      // Predicated region
      $region57: #{darkblock.1} parent=55 // pred_check
        %p3868 = pneg %p240
      $region58: #{darkblock.1} parent=55 // pred_check_branch
        %3870 = sbr.rel (%p3868) target = $region60
      $region59: #{darkblock.1} parent=55 // pred_region
        %s3871 = smul.u32 8, %s25
        %p3872 = scmp.lt.s32.totalorder %s24, 1
        %s3873 = scalar_select %p3872, %s24, 1
        %p3874 = scmp.lt.s32.totalorder %s3871, 15
        %s3875 = scalar_select %p3874, %s3871, 15
        %s3876 = smul.addr %s3875, 3
        %s3877 = smul.addr %s3873, 48
        %s3878 = sadd.s32 %s3876, %s3877
        %s3879 = smul.addr %s3878, 8
        %s3880 = scalar_lea.vmem %s7, %s3879
      $region60: #{darkblock.1} parent=55 // pred_fallthru
        _
    $region56: #{darkblock.1} parent=5 // pred_fallthru
      _
  $region6: #{darkblock.1} parent=0 // loop_footer
    %s17 = sadd.s32 1, %s13
  $region7: #{darkblock.1} parent=0 // loop_footer_branch
    %12 = sbr.rel target = $region3
  $region8: #{darkblock.1} parent=0 // loop_exit
    _

</llo_original>
